<compile_context>
chip_gen: v5e
topology: v5e:2x2
jax: 0.10.0
libtpu: 0.0.40
codegen_flags: <defaults>
</compile_context>

<pallas_src>
import functools
from math import sqrt

import jax
import jax.numpy as jnp
from jax import lax
from jax.experimental import pallas as pl
from jax.experimental.pallas import tpu as pltpu


# ---------------------------------------------------------------------------
# In-kernel helpers (traced inside the Pallas kernel body).
# ---------------------------------------------------------------------------
def _layer_norm(x, gamma, beta, eps=1e-5):
    # x: (S, D); gamma/beta: (1, D). Matches torch.nn.LayerNorm (biased var, eps=1e-5).
    mean = jnp.mean(x, axis=-1, keepdims=True)
    var = jnp.mean((x - mean) ** 2, axis=-1, keepdims=True)
    return (x - mean) * lax.rsqrt(var + eps) * gamma + beta


def _multi_head_attention(q_src, kv_src, wq, wk, wv, c, n_heads, d_k, mxu_dtype):
    """q_src: (Sq, D) f32; kv_src: (Skv, D) f32.
    wq/wk/wv: fused (D, H*d_k); c: (H*d_k, D) -- already in mxu_dtype.
    One wide matmul per projection; per-head attention on static lane-slices."""
    q = jnp.dot(q_src.astype(mxu_dtype), wq, preferred_element_type=jnp.float32)
    k = jnp.dot(kv_src.astype(mxu_dtype), wk, preferred_element_type=jnp.float32)
    v = jnp.dot(kv_src.astype(mxu_dtype), wv, preferred_element_type=jnp.float32)

    scale = 1.0 / sqrt(d_k)
    heads = []
    for h in range(n_heads):
        lo, hi = h * d_k, (h + 1) * d_k
        qh = q[:, lo:hi].astype(mxu_dtype)
        kh = k[:, lo:hi].astype(mxu_dtype)
        vh = v[:, lo:hi].astype(mxu_dtype)
        # Contract on the d_k axes -- folds the transpose into the MXU operand read.
        s = lax.dot_general(qh, kh, (((1,), (1,)), ((), ())),
                            preferred_element_type=jnp.float32) * scale
        s = s - jnp.max(s, axis=-1, keepdims=True)          # stable softmax (f32)
        p = jnp.exp(s)
        denom = jnp.sum(p, axis=-1, keepdims=True)
        attn = p * pl.reciprocal(denom, approx=True)        # EUP vrcp
        heads.append(jnp.dot(attn.astype(mxu_dtype), vh,
                             preferred_element_type=jnp.float32))
    av = heads[0] if n_heads == 1 else jnp.concatenate(heads, axis=-1)
    return jnp.dot(av.astype(mxu_dtype), c, preferred_element_type=jnp.float32)


# ---------------------------------------------------------------------------
# The Pallas kernel: one (batch, q-tile) of the decoder sequence per grid step.
# ---------------------------------------------------------------------------
def decoder_kernel(n_heads_sa, n_heads_ed, d_k_sa, d_k_ed, mxu_dtype,
                   xq_ref, xfull_ref, enc_ref,
                   wq_sa_ref, wk_sa_ref, wv_sa_ref, c_sa_ref,
                   wq_ed_ref, wk_ed_ref, wv_ed_ref, c_ed_ref,
                   g1_ref, b1_ref, g2_ref, b2_ref, g3_ref, b3_ref,
                   w1_ref, bias1_ref, w2_ref, bias2_ref,
                   out_ref):
    xq = xq_ref[0]        # (tq, D)    q-tile of the decoder sequence
    xfull = xfull_ref[0]  # (S_dec, D) full decoder sequence (self-attn K/V source)
    enc = enc_ref[0]      # (S_enc, D) full encoder sequence (enc-dec K/V source)

    # --- self attention + residual + LayerNorm1 ---
    # TODO(synk): mask_self_attn / mask_enc_dec_attn (boolean -1e9 fill) not implemented;
    # the module defaults both masks to None, which is what we reproduce.
    sa = _multi_head_attention(xq, xfull,
                               wq_sa_ref[...], wk_sa_ref[...], wv_sa_ref[...],
                               c_sa_ref[...], n_heads_sa, d_k_sa, mxu_dtype)
    h1 = _layer_norm(sa + xq, g1_ref[...], b1_ref[...])

    # --- encoder-decoder attention + residual + LayerNorm2 ---
    ed = _multi_head_attention(h1, enc,
                               wq_ed_ref[...], wk_ed_ref[...], wv_ed_ref[...],
                               c_ed_ref[...], n_heads_ed, d_k_ed, mxu_dtype)
    h2 = _layer_norm(ed + h1, g2_ref[...], b2_ref[...])

    # --- feed-forward (Linear -> ReLU -> Linear) + residual + LayerNorm3 ---
    ff1 = jnp.maximum(
        jnp.dot(h2.astype(mxu_dtype), w1_ref[...],
                preferred_element_type=jnp.float32) + bias1_ref[...], 0.0)
    ff = jnp.dot(ff1.astype(mxu_dtype), w2_ref[...],
                 preferred_element_type=jnp.float32) + bias2_ref[...]
    h3 = _layer_norm(ff + h2, g3_ref[...], b3_ref[...])

    out_ref[0] = h3


# ---------------------------------------------------------------------------
# Wrapper: builds BlockSpecs / grid and calls pallas_call.
# ---------------------------------------------------------------------------
# Positions (in the params tuple) of weights that feed the MXU.
_MXU_PARAM_IDX = frozenset((0, 1, 2, 3, 4, 5, 6, 7, 14, 16))


def _param_index_map(ndim):
    return lambda b, s, _n=ndim: (0,) * _n


def transformer_sequence_decoder(decoded_repr, encoded_repr, params,
                                 n_heads_self_attn=1, n_heads_enc_dec_attn=1,
                                 q_tile=None, mxu_dtype=jnp.float32):
    decoded_repr = decoded_repr.astype(jnp.float32)
    encoded_repr = encoded_repr.astype(jnp.float32)
    B, S_dec, D = decoded_repr.shape
    _, S_enc, _ = encoded_repr.shape
    assert D % n_heads_self_attn == 0 and D % n_heads_enc_dec_attn == 0
    d_k_sa = D // n_heads_self_attn
    d_k_ed = D // n_heads_enc_dec_attn

    if q_tile is None:
        q_tile = S_dec if S_dec <= 128 else 128
    assert S_dec % q_tile == 0, "q_tile must divide the decoder sequence length"

    # MXU weights in mxu_dtype (bf16 halves their VMEM footprint and doubles MXU
    # throughput on v6e/v7x); LayerNorm params and FFN biases stay f32 (VPU math f32).
    params = tuple(p.astype(mxu_dtype) if i in _MXU_PARAM_IDX else p.astype(jnp.float32)
                   for i, p in enumerate(params))

    kernel = functools.partial(decoder_kernel, n_heads_self_attn,
                               n_heads_enc_dec_attn, d_k_sa, d_k_ed, mxu_dtype)

    grid = (B, S_dec // q_tile)

    seq_specs = [
        pl.BlockSpec((1, q_tile, D), lambda b, s: (b, s, 0)),   # decoder q-tile
        pl.BlockSpec((1, S_dec, D), lambda b, s: (b, 0, 0)),    # full decoder (K/V)
        pl.BlockSpec((1, S_enc, D), lambda b, s: (b, 0, 0)),    # full encoder (K/V)
    ]
    out_spec = pl.BlockSpec((1, q_tile, D), lambda b, s: (b, s, 0))

    # Advisory cost estimate so XLA schedules surrounding ops sensibly.
    d_ff = params[14].shape[1]
    flops = B * (8 * S_dec * D * D                      # SA: Q/K/V proj + pooling
                 + 4 * S_dec * S_dec * D                # SA: scores + attn@V
                 + 4 * S_dec * D * D + 4 * S_enc * D * D  # ED: proj + pooling
                 + 4 * S_dec * S_enc * D                # ED: scores + attn@V
                 + 4 * S_dec * D * d_ff)                # FFN
    transcendentals = B * (n_heads_self_attn * S_dec * S_dec
                           + n_heads_enc_dec_attn * S_dec * S_enc + 3 * S_dec)
    param_bytes = sum(int(p.size) * p.dtype.itemsize for p in params)
    bytes_accessed = 4 * B * D * (2 * S_dec + S_enc) + 4 * B * S_dec * D + param_bytes
    cost = pl.CostEstimate(flops=int(flops), transcendentals=int(transcendentals),
                           bytes_accessed=int(bytes_accessed))

    def build(single_buffer_params):
        pipeline_mode = None
        if single_buffer_params:
            buffered_cls = getattr(pl, "Buffered", None)
            if buffered_cls is None:
                return None
            pipeline_mode = buffered_cls(1)   # grid-invariant weights: no double buffer
        param_specs = []
        for p in params:
            if pipeline_mode is not None:
                param_specs.append(pl.BlockSpec(p.shape, _param_index_map(p.ndim),
                                                pipeline_mode=pipeline_mode))
            else:
                param_specs.append(pl.BlockSpec(p.shape, _param_index_map(p.ndim)))
        return pl.pallas_call(
            kernel,
            out_shape=jax.ShapeDtypeStruct((B, S_dec, D), jnp.float32),
            grid=grid,
            in_specs=seq_specs + param_specs,
            out_specs=out_spec,
            compiler_params=pltpu.CompilerParams(
                dimension_semantics=("parallel", "parallel"),
                vmem_limit_bytes=64 * 1024 * 1024),
            cost_estimate=cost,
        )

    args = (decoded_repr, decoded_repr, encoded_repr) + params
    try:
        fn = build(True)
        if fn is None:
            raise RuntimeError("pl.Buffered unavailable")
        return fn(*args)
    except Exception:
        # Fall back to default (double-buffered) parameter pipelining.
        return build(False)(*args)


# ---------------------------------------------------------------------------
# Deterministic parameter construction (fused-head layout, mirrors module shapes:
# per-head (d_model, d_k) weights concatenated along the output dim -> (D, H*d_k)=(D, D)).
# ---------------------------------------------------------------------------
def make_params(key, d_model, d_ff):
    ks = jax.random.split(key, 12)
    u = lambda k, shape: jax.random.uniform(k, shape, jnp.float32) - 0.5
    wq_sa = u(ks[0], (d_model, d_model))
    wk_sa = u(ks[1], (d_model, d_model))
    wv_sa = u(ks[2], (d_model, d_model))
    c_sa = u(ks[3], (d_model, d_model))         # (H*d_v, d_model)
    wq_ed = u(ks[4], (d_model, d_model))
    wk_ed = u(ks[5], (d_model, d_model))
    wv_ed = u(ks[6], (d_model, d_model))
    c_ed = u(ks[7], (d_model, d_model))
    g1 = jnp.ones((1, d_model), jnp.float32); b1 = jnp.zeros((1, d_model), jnp.float32)
    g2 = jnp.ones((1, d_model), jnp.float32); b2 = jnp.zeros((1, d_model), jnp.float32)
    g3 = jnp.ones((1, d_model), jnp.float32); b3 = jnp.zeros((1, d_model), jnp.float32)
    w1 = u(ks[8], (d_model, d_ff)) * (2.0 / sqrt(d_model))
    bias1 = u(ks[9], (1, d_ff)) * (2.0 / sqrt(d_model))
    w2 = u(ks[10], (d_ff, d_model)) * (2.0 / sqrt(d_ff))
    bias2 = u(ks[11], (1, d_model)) * (2.0 / sqrt(d_ff))
    return (wq_sa, wk_sa, wv_sa, c_sa, wq_ed, wk_ed, wv_ed, c_ed,
            g1, b1, g2, b2, g3, b3, w1, bias1, w2, bias2)


# ---------------------------------------------------------------------------
# Pure-JAX reference (mirrors the PyTorch forward) for correctness checks.
# ---------------------------------------------------------------------------
def reference_decoder(dec, enc, params, n_heads_sa, n_heads_ed):
    (wq_sa, wk_sa, wv_sa, c_sa, wq_ed, wk_ed, wv_ed, c_ed,
     g1, b1, g2, b2, g3, b3, w1, bias1, w2, bias2) = params
    D = dec.shape[-1]

    def ln(x, g, b, eps=1e-5):
        m = jnp.mean(x, axis=-1, keepdims=True)
        v = jnp.mean((x - m) ** 2, axis=-1, keepdims=True)
        return (x - m) / jnp.sqrt(v + eps) * g + b

    def mha(q_src, kv_src, wq, wk, wv, c, n_heads):
        d_k = D // n_heads
        q = q_src @ wq; k = kv_src @ wk; v = kv_src @ wv   # (B, S, H*d_k)
        reps = []
        for h in range(n_heads):
            lo, hi = h * d_k, (h + 1) * d_k
            aw = q[..., lo:hi] @ jnp.swapaxes(k[..., lo:hi], 1, 2)
            attn = jax.nn.softmax(aw / sqrt(d_k), axis=2)
            reps.append(attn @ v[..., lo:hi])
        return jnp.concatenate(reps, axis=2) @ c

    sa = mha(dec, dec, wq_sa, wk_sa, wv_sa, c_sa, n_heads_sa)
    h1 = ln(sa + dec, g1, b1)
    ed = mha(h1, enc, wq_ed, wk_ed, wv_ed, c_ed, n_heads_ed)
    h2 = ln(ed + h1, g2, b2)
    ff = jnp.maximum(h2 @ w1 + bias1, 0.0) @ w2 + bias2
    return ln(ff + h2, g3, b3)


if __name__ == "__main__":
    B, S_dec, S_enc, D, d_ff = 2, 16, 24, 128, 128   # D=128 keeps blocks lane-dense

    key = jax.random.PRNGKey(0)
    k_dec, k_enc, k_p1, k_p2 = jax.random.split(key, 4)
    decoded_repr = 0.5 * jax.random.normal(k_dec, (B, S_dec, D), jnp.float32)
    encoded_repr = 0.5 * jax.random.normal(k_enc, (B, S_enc, D), jnp.float32)

    # Config 1: module defaults (1 head each), f32 MXU operands, approx softmax recip.
    params1 = make_params(k_p1, D, d_ff)
    out1 = transformer_sequence_decoder(decoded_repr, encoded_repr, params1,
                                        n_heads_self_attn=1, n_heads_enc_dec_attn=1,
                                        q_tile=8, mxu_dtype=jnp.float32)
    out1 = jax.block_until_ready(out1)
    ref1 = reference_decoder(decoded_repr, encoded_repr, params1, 1, 1)
    assert out1.shape == (B, S_dec, D)
    err1 = float(jnp.max(jnp.abs(out1 - ref1)))
    assert jnp.allclose(out1, ref1, atol=2e-2, rtol=2e-2), f"f32 mismatch: {err1}"

    # Config 2: multi-head, bf16 MXU operands (v6e/v7x fast path), looser tolerance.
    params2 = make_params(k_p2, D, d_ff)
    out2 = transformer_sequence_decoder(decoded_repr, encoded_repr, params2,
                                        n_heads_self_attn=2, n_heads_enc_dec_attn=2,
                                        q_tile=8, mxu_dtype=jnp.bfloat16)
    out2 = jax.block_until_ready(out2)
    ref2 = reference_decoder(decoded_repr, encoded_repr, params2, 2, 2)
    assert out2.shape == (B, S_dec, D)
    err2 = float(jnp.max(jnp.abs(out2 - ref2)))
    assert jnp.allclose(out2, ref2, atol=1e-1, rtol=1e-1), f"bf16 mismatch: {err2}"

    print("KERNEL_OK")
</pallas_src>

<mosaic_0001>
module attributes {stable_mosaic.version = 11 : i64} {
  func.func @decoder_kernel(%arg0: i32, %arg1: i32, %arg2: memref<1x8x128xf32, #tpu.memory_space<vmem>>, %arg3: memref<1x16x128xf32, #tpu.memory_space<vmem>>, %arg4: memref<1x24x128xf32, #tpu.memory_space<vmem>>, %arg5: memref<128x128xf32, #tpu.memory_space<vmem>>, %arg6: memref<128x128xf32, #tpu.memory_space<vmem>>, %arg7: memref<128x128xf32, #tpu.memory_space<vmem>>, %arg8: memref<128x128xf32, #tpu.memory_space<vmem>>, %arg9: memref<128x128xf32, #tpu.memory_space<vmem>>, %arg10: memref<128x128xf32, #tpu.memory_space<vmem>>, %arg11: memref<128x128xf32, #tpu.memory_space<vmem>>, %arg12: memref<128x128xf32, #tpu.memory_space<vmem>>, %arg13: memref<1x128xf32, #tpu.memory_space<vmem>>, %arg14: memref<1x128xf32, #tpu.memory_space<vmem>>, %arg15: memref<1x128xf32, #tpu.memory_space<vmem>>, %arg16: memref<1x128xf32, #tpu.memory_space<vmem>>, %arg17: memref<1x128xf32, #tpu.memory_space<vmem>>, %arg18: memref<1x128xf32, #tpu.memory_space<vmem>>, %arg19: memref<128x128xf32, #tpu.memory_space<vmem>>, %arg20: memref<1x128xf32, #tpu.memory_space<vmem>>, %arg21: memref<128x128xf32, #tpu.memory_space<vmem>>, %arg22: memref<1x128xf32, #tpu.memory_space<vmem>>, %arg23: memref<1x8x128xf32, #tpu.memory_space<vmem>>) attributes {dimension_semantics = [#tpu.dimension_semantics<parallel>, #tpu.dimension_semantics<parallel>], iteration_bounds = array<i64: 2, 2>, scalar_prefetch = 0 : i64, scratch_operands = 0 : i64, tpu.core_type = #tpu.core_type<tc>, window_params = [{transform_indices = @transform_0, window_bounds = array<i64: 1, 8, 128>}, {transform_indices = @transform_1, window_bounds = array<i64: 1, 16, 128>}, {transform_indices = @transform_2, window_bounds = array<i64: 1, 24, 128>}, {pipeline_mode = #tpu.pipeline_mode<synchronous>, transform_indices = @transform_3, window_bounds = array<i64: 128, 128>}, {pipeline_mode = #tpu.pipeline_mode<synchronous>, transform_indices = @transform_4, window_bounds = array<i64: 128, 128>}, {pipeline_mode = #tpu.pipeline_mode<synchronous>, transform_indices = @transform_5, window_bounds = array<i64: 128, 128>}, {pipeline_mode = #tpu.pipeline_mode<synchronous>, transform_indices = @transform_6, window_bounds = array<i64: 128, 128>}, {pipeline_mode = #tpu.pipeline_mode<synchronous>, transform_indices = @transform_7, window_bounds = array<i64: 128, 128>}, {pipeline_mode = #tpu.pipeline_mode<synchronous>, transform_indices = @transform_8, window_bounds = array<i64: 128, 128>}, {pipeline_mode = #tpu.pipeline_mode<synchronous>, transform_indices = @transform_9, window_bounds = array<i64: 128, 128>}, {pipeline_mode = #tpu.pipeline_mode<synchronous>, transform_indices = @transform_10, window_bounds = array<i64: 128, 128>}, {pipeline_mode = #tpu.pipeline_mode<synchronous>, transform_indices = @transform_11, window_bounds = array<i64: 1, 128>}, {pipeline_mode = #tpu.pipeline_mode<synchronous>, transform_indices = @transform_12, window_bounds = array<i64: 1, 128>}, {pipeline_mode = #tpu.pipeline_mode<synchronous>, transform_indices = @transform_13, window_bounds = array<i64: 1, 128>}, {pipeline_mode = #tpu.pipeline_mode<synchronous>, transform_indices = @transform_14, window_bounds = array<i64: 1, 128>}, {pipeline_mode = #tpu.pipeline_mode<synchronous>, transform_indices = @transform_15, window_bounds = array<i64: 1, 128>}, {pipeline_mode = #tpu.pipeline_mode<synchronous>, transform_indices = @transform_16, window_bounds = array<i64: 1, 128>}, {pipeline_mode = #tpu.pipeline_mode<synchronous>, transform_indices = @transform_17, window_bounds = array<i64: 128, 128>}, {pipeline_mode = #tpu.pipeline_mode<synchronous>, transform_indices = @transform_18, window_bounds = array<i64: 1, 128>}, {pipeline_mode = #tpu.pipeline_mode<synchronous>, transform_indices = @transform_19, window_bounds = array<i64: 128, 128>}, {pipeline_mode = #tpu.pipeline_mode<synchronous>, transform_indices = @transform_20, window_bounds = array<i64: 1, 128>}, {transform_indices = @transform_21, window_bounds = array<i64: 1, 8, 128>}]} {
    %c0 = arith.constant 0 : index
    %c0_0 = arith.constant 0 : index
    %c0_1 = arith.constant 0 : index
    %0 = vector.load %arg2[%c0, %c0_0, %c0_1] : memref<1x8x128xf32, #tpu.memory_space<vmem>>, vector<1x8x128xf32>
    %1 = vector.shape_cast %0 : vector<1x8x128xf32> to vector<8x128xf32>
    %c0_2 = arith.constant 0 : index
    %c0_3 = arith.constant 0 : index
    %c0_4 = arith.constant 0 : index
    %2 = vector.load %arg3[%c0_2, %c0_3, %c0_4] : memref<1x16x128xf32, #tpu.memory_space<vmem>>, vector<1x16x128xf32>
    %3 = vector.shape_cast %2 : vector<1x16x128xf32> to vector<16x128xf32>
    %c0_5 = arith.constant 0 : index
    %c0_6 = arith.constant 0 : index
    %c0_7 = arith.constant 0 : index
    %4 = vector.load %arg4[%c0_5, %c0_6, %c0_7] : memref<1x24x128xf32, #tpu.memory_space<vmem>>, vector<1x24x128xf32>
    %5 = vector.shape_cast %4 : vector<1x24x128xf32> to vector<24x128xf32>
    %c0_8 = arith.constant 0 : index
    %c0_9 = arith.constant 0 : index
    %6 = vector.load %arg5[%c0_8, %c0_9] : memref<128x128xf32, #tpu.memory_space<vmem>>, vector<128x128xf32>
    %c0_10 = arith.constant 0 : index
    %c0_11 = arith.constant 0 : index
    %7 = vector.load %arg6[%c0_10, %c0_11] : memref<128x128xf32, #tpu.memory_space<vmem>>, vector<128x128xf32>
    %c0_12 = arith.constant 0 : index
    %c0_13 = arith.constant 0 : index
    %8 = vector.load %arg7[%c0_12, %c0_13] : memref<128x128xf32, #tpu.memory_space<vmem>>, vector<128x128xf32>
    %c0_14 = arith.constant 0 : index
    %c0_15 = arith.constant 0 : index
    %9 = vector.load %arg8[%c0_14, %c0_15] : memref<128x128xf32, #tpu.memory_space<vmem>>, vector<128x128xf32>
    %cst = arith.constant dense<0.000000e+00> : vector<8x128xf32>
    %10 = tpu.matmul %1, %6, %cst {dimension_numbers = #tpu.dot_dimension_numbers<[1], [0], [0], [1], [0, 0, 1, 1], [], []>} : vector<8x128xf32>, vector<128x128xf32>, vector<8x128xf32> -> vector<8x128xf32>
    %cst_16 = arith.constant dense<0.000000e+00> : vector<16x128xf32>
    %11 = tpu.matmul %3, %7, %cst_16 {dimension_numbers = #tpu.dot_dimension_numbers<[1], [0], [0], [1], [0, 0, 1, 1], [], []>} : vector<16x128xf32>, vector<128x128xf32>, vector<16x128xf32> -> vector<16x128xf32>
    %cst_17 = arith.constant dense<0.000000e+00> : vector<16x128xf32>
    %12 = tpu.matmul %3, %8, %cst_17 {dimension_numbers = #tpu.dot_dimension_numbers<[1], [0], [0], [1], [0, 0, 1, 1], [], []>} : vector<16x128xf32>, vector<128x128xf32>, vector<16x128xf32> -> vector<16x128xf32>
    %cst_18 = arith.constant dense<0.000000e+00> : vector<8x16xf32>
    %13 = tpu.matmul %10, %11, %cst_18 {dimension_numbers = #tpu.dot_dimension_numbers<[1], [1], [0], [0], [0, 0, 1, 0], [], []>} : vector<8x128xf32>, vector<16x128xf32>, vector<8x16xf32> -> vector<8x16xf32>
    %cst_19 = arith.constant 0.0883883461 : f32
    %14 = vector.broadcast %cst_19 : f32 to vector<8x16xf32>
    %15 = arith.mulf %13, %14 : vector<8x16xf32>
    %cst_20 = arith.constant dense<0xFF800000> : vector<8xf32>
    %16 = vector.multi_reduction <maximumf>, %15, %cst_20 [1] : vector<8x16xf32> to vector<8xf32>
    %17 = vector.shape_cast %16 : vector<8xf32> to vector<8x1xf32>
    %18 = vector.broadcast %17 : vector<8x1xf32> to vector<8x16xf32>
    %19 = arith.subf %15, %18 : vector<8x16xf32>
    %20 = math.exp %19 : vector<8x16xf32>
    %cst_21 = arith.constant dense<0.000000e+00> : vector<8xf32>
    %21 = vector.multi_reduction <add>, %20, %cst_21 [1] : vector<8x16xf32> to vector<8xf32>
    %22 = vector.shape_cast %21 : vector<8xf32> to vector<8x1xf32>
    %23 = tpu.reciprocal %22 {approx = true} : vector<8x1xf32> -> vector<8x1xf32>
    %24 = vector.broadcast %23 : vector<8x1xf32> to vector<8x16xf32>
    %25 = arith.mulf %20, %24 : vector<8x16xf32>
    %cst_22 = arith.constant dense<0.000000e+00> : vector<8x128xf32>
    %26 = tpu.matmul %25, %12, %cst_22 {dimension_numbers = #tpu.dot_dimension_numbers<[1], [0], [0], [1], [0, 0, 1, 1], [], []>} : vector<8x16xf32>, vector<16x128xf32>, vector<8x128xf32> -> vector<8x128xf32>
    %cst_23 = arith.constant dense<0.000000e+00> : vector<8x128xf32>
    %27 = tpu.matmul %26, %9, %cst_23 {dimension_numbers = #tpu.dot_dimension_numbers<[1], [0], [0], [1], [0, 0, 1, 1], [], []>} : vector<8x128xf32>, vector<128x128xf32>, vector<8x128xf32> -> vector<8x128xf32>
    %28 = arith.addf %27, %1 : vector<8x128xf32>
    %c0_24 = arith.constant 0 : index
    %c0_25 = arith.constant 0 : index
    %29 = vector.load %arg13[%c0_24, %c0_25] : memref<1x128xf32, #tpu.memory_space<vmem>>, vector<1x128xf32>
    %c0_26 = arith.constant 0 : index
    %c0_27 = arith.constant 0 : index
    %30 = vector.load %arg14[%c0_26, %c0_27] : memref<1x128xf32, #tpu.memory_space<vmem>>, vector<1x128xf32>
    %cst_28 = arith.constant dense<0.000000e+00> : vector<8xf32>
    %31 = vector.multi_reduction <add>, %28, %cst_28 [1] : vector<8x128xf32> to vector<8xf32>
    %32 = vector.shape_cast %31 : vector<8xf32> to vector<8x1xf32>
    %cst_29 = arith.constant 1.280000e+02 : f32
    %33 = vector.broadcast %cst_29 : f32 to vector<8x1xf32>
    %34 = arith.divf %32, %33 : vector<8x1xf32>
    %35 = vector.broadcast %34 : vector<8x1xf32> to vector<8x128xf32>
    %36 = arith.subf %28, %35 : vector<8x128xf32>
    %37 = arith.mulf %36, %36 : vector<8x128xf32>
    %cst_30 = arith.constant dense<0.000000e+00> : vector<8xf32>
    %38 = vector.multi_reduction <add>, %37, %cst_30 [1] : vector<8x128xf32> to vector<8xf32>
    %39 = vector.shape_cast %38 : vector<8xf32> to vector<8x1xf32>
    %cst_31 = arith.constant 1.280000e+02 : f32
    %40 = vector.broadcast %cst_31 : f32 to vector<8x1xf32>
    %41 = arith.divf %39, %40 : vector<8x1xf32>
    %42 = vector.broadcast %34 : vector<8x1xf32> to vector<8x128xf32>
    %43 = arith.subf %28, %42 : vector<8x128xf32>
    %cst_32 = arith.constant 9.99999974E-6 : f32
    %44 = vector.broadcast %cst_32 : f32 to vector<8x1xf32>
    %45 = arith.addf %41, %44 : vector<8x1xf32>
    %46 = math.rsqrt %45 : vector<8x1xf32>
    %47 = vector.broadcast %46 : vector<8x1xf32> to vector<8x128xf32>
    %48 = arith.mulf %43, %47 : vector<8x128xf32>
    %49 = vector.broadcast %29 : vector<1x128xf32> to vector<8x128xf32>
    %50 = arith.mulf %48, %49 : vector<8x128xf32>
    %51 = vector.broadcast %30 : vector<1x128xf32> to vector<8x128xf32>
    %52 = arith.addf %50, %51 : vector<8x128xf32>
    %c0_33 = arith.constant 0 : index
    %c0_34 = arith.constant 0 : index
    %53 = vector.load %arg9[%c0_33, %c0_34] : memref<128x128xf32, #tpu.memory_space<vmem>>, vector<128x128xf32>
    %c0_35 = arith.constant 0 : index
    %c0_36 = arith.constant 0 : index
    %54 = vector.load %arg10[%c0_35, %c0_36] : memref<128x128xf32, #tpu.memory_space<vmem>>, vector<128x128xf32>
    %c0_37 = arith.constant 0 : index
    %c0_38 = arith.constant 0 : index
    %55 = vector.load %arg11[%c0_37, %c0_38] : memref<128x128xf32, #tpu.memory_space<vmem>>, vector<128x128xf32>
    %c0_39 = arith.constant 0 : index
    %c0_40 = arith.constant 0 : index
    %56 = vector.load %arg12[%c0_39, %c0_40] : memref<128x128xf32, #tpu.memory_space<vmem>>, vector<128x128xf32>
    %cst_41 = arith.constant dense<0.000000e+00> : vector<8x128xf32>
    %57 = tpu.matmul %52, %53, %cst_41 {dimension_numbers = #tpu.dot_dimension_numbers<[1], [0], [0], [1], [0, 0, 1, 1], [], []>} : vector<8x128xf32>, vector<128x128xf32>, vector<8x128xf32> -> vector<8x128xf32>
    %cst_42 = arith.constant dense<0.000000e+00> : vector<24x128xf32>
    %58 = tpu.matmul %5, %54, %cst_42 {dimension_numbers = #tpu.dot_dimension_numbers<[1], [0], [0], [1], [0, 0, 1, 1], [], []>} : vector<24x128xf32>, vector<128x128xf32>, vector<24x128xf32> -> vector<24x128xf32>
    %cst_43 = arith.constant dense<0.000000e+00> : vector<24x128xf32>
    %59 = tpu.matmul %5, %55, %cst_43 {dimension_numbers = #tpu.dot_dimension_numbers<[1], [0], [0], [1], [0, 0, 1, 1], [], []>} : vector<24x128xf32>, vector<128x128xf32>, vector<24x128xf32> -> vector<24x128xf32>
    %cst_44 = arith.constant dense<0.000000e+00> : vector<8x24xf32>
    %60 = tpu.matmul %57, %58, %cst_44 {dimension_numbers = #tpu.dot_dimension_numbers<[1], [1], [0], [0], [0, 0, 1, 0], [], []>} : vector<8x128xf32>, vector<24x128xf32>, vector<8x24xf32> -> vector<8x24xf32>
    %cst_45 = arith.constant 0.0883883461 : f32
    %61 = vector.broadcast %cst_45 : f32 to vector<8x24xf32>
    %62 = arith.mulf %60, %61 : vector<8x24xf32>
    %cst_46 = arith.constant dense<0xFF800000> : vector<8xf32>
    %63 = vector.multi_reduction <maximumf>, %62, %cst_46 [1] : vector<8x24xf32> to vector<8xf32>
    %64 = vector.shape_cast %63 : vector<8xf32> to vector<8x1xf32>
    %65 = vector.broadcast %64 : vector<8x1xf32> to vector<8x24xf32>
    %66 = arith.subf %62, %65 : vector<8x24xf32>
    %67 = math.exp %66 : vector<8x24xf32>
    %cst_47 = arith.constant dense<0.000000e+00> : vector<8xf32>
    %68 = vector.multi_reduction <add>, %67, %cst_47 [1] : vector<8x24xf32> to vector<8xf32>
    %69 = vector.shape_cast %68 : vector<8xf32> to vector<8x1xf32>
    %70 = tpu.reciprocal %69 {approx = true} : vector<8x1xf32> -> vector<8x1xf32>
    %71 = vector.broadcast %70 : vector<8x1xf32> to vector<8x24xf32>
    %72 = arith.mulf %67, %71 : vector<8x24xf32>
    %cst_48 = arith.constant dense<0.000000e+00> : vector<8x128xf32>
    %73 = tpu.matmul %72, %59, %cst_48 {dimension_numbers = #tpu.dot_dimension_numbers<[1], [0], [0], [1], [0, 0, 1, 1], [], []>} : vector<8x24xf32>, vector<24x128xf32>, vector<8x128xf32> -> vector<8x128xf32>
    %cst_49 = arith.constant dense<0.000000e+00> : vector<8x128xf32>
    %74 = tpu.matmul %73, %56, %cst_49 {dimension_numbers = #tpu.dot_dimension_numbers<[1], [0], [0], [1], [0, 0, 1, 1], [], []>} : vector<8x128xf32>, vector<128x128xf32>, vector<8x128xf32> -> vector<8x128xf32>
    %75 = arith.addf %74, %52 : vector<8x128xf32>
    %c0_50 = arith.constant 0 : index
    %c0_51 = arith.constant 0 : index
    %76 = vector.load %arg15[%c0_50, %c0_51] : memref<1x128xf32, #tpu.memory_space<vmem>>, vector<1x128xf32>
    %c0_52 = arith.constant 0 : index
    %c0_53 = arith.constant 0 : index
    %77 = vector.load %arg16[%c0_52, %c0_53] : memref<1x128xf32, #tpu.memory_space<vmem>>, vector<1x128xf32>
    %cst_54 = arith.constant dense<0.000000e+00> : vector<8xf32>
    %78 = vector.multi_reduction <add>, %75, %cst_54 [1] : vector<8x128xf32> to vector<8xf32>
    %79 = vector.shape_cast %78 : vector<8xf32> to vector<8x1xf32>
    %cst_55 = arith.constant 1.280000e+02 : f32
    %80 = vector.broadcast %cst_55 : f32 to vector<8x1xf32>
    %81 = arith.divf %79, %80 : vector<8x1xf32>
    %82 = vector.broadcast %81 : vector<8x1xf32> to vector<8x128xf32>
    %83 = arith.subf %75, %82 : vector<8x128xf32>
    %84 = arith.mulf %83, %83 : vector<8x128xf32>
    %cst_56 = arith.constant dense<0.000000e+00> : vector<8xf32>
    %85 = vector.multi_reduction <add>, %84, %cst_56 [1] : vector<8x128xf32> to vector<8xf32>
    %86 = vector.shape_cast %85 : vector<8xf32> to vector<8x1xf32>
    %cst_57 = arith.constant 1.280000e+02 : f32
    %87 = vector.broadcast %cst_57 : f32 to vector<8x1xf32>
    %88 = arith.divf %86, %87 : vector<8x1xf32>
    %89 = vector.broadcast %81 : vector<8x1xf32> to vector<8x128xf32>
    %90 = arith.subf %75, %89 : vector<8x128xf32>
    %cst_58 = arith.constant 9.99999974E-6 : f32
    %91 = vector.broadcast %cst_58 : f32 to vector<8x1xf32>
    %92 = arith.addf %88, %91 : vector<8x1xf32>
    %93 = math.rsqrt %92 : vector<8x1xf32>
    %94 = vector.broadcast %93 : vector<8x1xf32> to vector<8x128xf32>
    %95 = arith.mulf %90, %94 : vector<8x128xf32>
    %96 = vector.broadcast %76 : vector<1x128xf32> to vector<8x128xf32>
    %97 = arith.mulf %95, %96 : vector<8x128xf32>
    %98 = vector.broadcast %77 : vector<1x128xf32> to vector<8x128xf32>
    %99 = arith.addf %97, %98 : vector<8x128xf32>
    %c0_59 = arith.constant 0 : index
    %c0_60 = arith.constant 0 : index
    %100 = vector.load %arg19[%c0_59, %c0_60] : memref<128x128xf32, #tpu.memory_space<vmem>>, vector<128x128xf32>
    %cst_61 = arith.constant dense<0.000000e+00> : vector<8x128xf32>
    %101 = tpu.matmul %99, %100, %cst_61 {dimension_numbers = #tpu.dot_dimension_numbers<[1], [0], [0], [1], [0, 0, 1, 1], [], []>} : vector<8x128xf32>, vector<128x128xf32>, vector<8x128xf32> -> vector<8x128xf32>
    %c0_62 = arith.constant 0 : index
    %c0_63 = arith.constant 0 : index
    %102 = vector.load %arg20[%c0_62, %c0_63] : memref<1x128xf32, #tpu.memory_space<vmem>>, vector<1x128xf32>
    %103 = vector.broadcast %102 : vector<1x128xf32> to vector<8x128xf32>
    %104 = arith.addf %101, %103 : vector<8x128xf32>
    %cst_64 = arith.constant 0.000000e+00 : f32
    %105 = vector.broadcast %cst_64 : f32 to vector<8x128xf32>
    %106 = arith.maximumf %104, %105 : vector<8x128xf32>
    %c0_65 = arith.constant 0 : index
    %c0_66 = arith.constant 0 : index
    %107 = vector.load %arg21[%c0_65, %c0_66] : memref<128x128xf32, #tpu.memory_space<vmem>>, vector<128x128xf32>
    %cst_67 = arith.constant dense<0.000000e+00> : vector<8x128xf32>
    %108 = tpu.matmul %106, %107, %cst_67 {dimension_numbers = #tpu.dot_dimension_numbers<[1], [0], [0], [1], [0, 0, 1, 1], [], []>} : vector<8x128xf32>, vector<128x128xf32>, vector<8x128xf32> -> vector<8x128xf32>
    %c0_68 = arith.constant 0 : index
    %c0_69 = arith.constant 0 : index
    %109 = vector.load %arg22[%c0_68, %c0_69] : memref<1x128xf32, #tpu.memory_space<vmem>>, vector<1x128xf32>
    %110 = vector.broadcast %109 : vector<1x128xf32> to vector<8x128xf32>
    %111 = arith.addf %108, %110 : vector<8x128xf32>
    %112 = arith.addf %111, %99 : vector<8x128xf32>
    %c0_70 = arith.constant 0 : index
    %c0_71 = arith.constant 0 : index
    %113 = vector.load %arg17[%c0_70, %c0_71] : memref<1x128xf32, #tpu.memory_space<vmem>>, vector<1x128xf32>
    %c0_72 = arith.constant 0 : index
    %c0_73 = arith.constant 0 : index
    %114 = vector.load %arg18[%c0_72, %c0_73] : memref<1x128xf32, #tpu.memory_space<vmem>>, vector<1x128xf32>
    %cst_74 = arith.constant dense<0.000000e+00> : vector<8xf32>
    %115 = vector.multi_reduction <add>, %112, %cst_74 [1] : vector<8x128xf32> to vector<8xf32>
    %116 = vector.shape_cast %115 : vector<8xf32> to vector<8x1xf32>
    %cst_75 = arith.constant 1.280000e+02 : f32
    %117 = vector.broadcast %cst_75 : f32 to vector<8x1xf32>
    %118 = arith.divf %116, %117 : vector<8x1xf32>
    %119 = vector.broadcast %118 : vector<8x1xf32> to vector<8x128xf32>
    %120 = arith.subf %112, %119 : vector<8x128xf32>
    %121 = arith.mulf %120, %120 : vector<8x128xf32>
    %cst_76 = arith.constant dense<0.000000e+00> : vector<8xf32>
    %122 = vector.multi_reduction <add>, %121, %cst_76 [1] : vector<8x128xf32> to vector<8xf32>
    %123 = vector.shape_cast %122 : vector<8xf32> to vector<8x1xf32>
    %cst_77 = arith.constant 1.280000e+02 : f32
    %124 = vector.broadcast %cst_77 : f32 to vector<8x1xf32>
    %125 = arith.divf %123, %124 : vector<8x1xf32>
    %126 = vector.broadcast %118 : vector<8x1xf32> to vector<8x128xf32>
    %127 = arith.subf %112, %126 : vector<8x128xf32>
    %cst_78 = arith.constant 9.99999974E-6 : f32
    %128 = vector.broadcast %cst_78 : f32 to vector<8x1xf32>
    %129 = arith.addf %125, %128 : vector<8x1xf32>
    %130 = math.rsqrt %129 : vector<8x1xf32>
    %131 = vector.broadcast %130 : vector<8x1xf32> to vector<8x128xf32>
    %132 = arith.mulf %127, %131 : vector<8x128xf32>
    %133 = vector.broadcast %113 : vector<1x128xf32> to vector<8x128xf32>
    %134 = arith.mulf %132, %133 : vector<8x128xf32>
    %135 = vector.broadcast %114 : vector<1x128xf32> to vector<8x128xf32>
    %136 = arith.addf %134, %135 : vector<8x128xf32>
    %c0_79 = arith.constant 0 : index
    %c0_80 = arith.constant 0 : index
    %c0_81 = arith.constant 0 : index
    %137 = vector.load %arg23[%c0_79, %c0_80, %c0_81] : memref<1x8x128xf32, #tpu.memory_space<vmem>>, vector<1x8x128xf32>
    %138 = vector.shape_cast %137 : vector<1x8x128xf32> to vector<8x128xf32>
    %139 = vector.shape_cast %136 : vector<8x128xf32> to vector<1x8x128xf32>
    tpu.vector_store %arg23[%c0_79, %c0_80, %c0_81], %139 {strides = array<i32>} : memref<1x8x128xf32, #tpu.memory_space<vmem>>, vector<1x8x128xf32>,
    return
  }
  func.func @transform_0(%arg0: i32, %arg1: i32) -> (i32, i32, i32) {
    %c0_i32 = arith.constant 0 : i32
    %c0_i32_0 = arith.constant 0 : i32
    return %arg0, %arg1, %c0_i32 : i32, i32, i32
  }
  func.func @transform_1(%arg0: i32, %arg1: i32) -> (i32, i32, i32) {
    %c0_i32 = arith.constant 0 : i32
    %c0_i32_0 = arith.constant 0 : i32
    %c0_i32_1 = arith.constant 0 : i32
    return %arg0, %c0_i32, %c0_i32_0 : i32, i32, i32
  }
  func.func @transform_2(%arg0: i32, %arg1: i32) -> (i32, i32, i32) {
    %c0_i32 = arith.constant 0 : i32
    %c0_i32_0 = arith.constant 0 : i32
    %c0_i32_1 = arith.constant 0 : i32
    return %arg0, %c0_i32, %c0_i32_0 : i32, i32, i32
  }
  func.func @transform_3(%arg0: i32, %arg1: i32) -> (i32, i32) {
    %c0_i32 = arith.constant 0 : i32
    %c0_i32_0 = arith.constant 0 : i32
    %c0_i32_1 = arith.constant 0 : i32
    return %c0_i32, %c0_i32_0 : i32, i32
  }
  func.func @transform_4(%arg0: i32, %arg1: i32) -> (i32, i32) {
    %c0_i32 = arith.constant 0 : i32
    %c0_i32_0 = arith.constant 0 : i32
    %c0_i32_1 = arith.constant 0 : i32
    return %c0_i32, %c0_i32_0 : i32, i32
  }
  func.func @transform_5(%arg0: i32, %arg1: i32) -> (i32, i32) {
    %c0_i32 = arith.constant 0 : i32
    %c0_i32_0 = arith.constant 0 : i32
    %c0_i32_1 = arith.constant 0 : i32
    return %c0_i32, %c0_i32_0 : i32, i32
  }
  func.func @transform_6(%arg0: i32, %arg1: i32) -> (i32, i32) {
    %c0_i32 = arith.constant 0 : i32
    %c0_i32_0 = arith.constant 0 : i32
    %c0_i32_1 = arith.constant 0 : i32
    return %c0_i32, %c0_i32_0 : i32, i32
  }
  func.func @transform_7(%arg0: i32, %arg1: i32) -> (i32, i32) {
    %c0_i32 = arith.constant 0 : i32
    %c0_i32_0 = arith.constant 0 : i32
    %c0_i32_1 = arith.constant 0 : i32
    return %c0_i32, %c0_i32_0 : i32, i32
  }
  func.func @transform_8(%arg0: i32, %arg1: i32) -> (i32, i32) {
    %c0_i32 = arith.constant 0 : i32
    %c0_i32_0 = arith.constant 0 : i32
    %c0_i32_1 = arith.constant 0 : i32
    return %c0_i32, %c0_i32_0 : i32, i32
  }
  func.func @transform_9(%arg0: i32, %arg1: i32) -> (i32, i32) {
    %c0_i32 = arith.constant 0 : i32
    %c0_i32_0 = arith.constant 0 : i32
    %c0_i32_1 = arith.constant 0 : i32
    return %c0_i32, %c0_i32_0 : i32, i32
  }
  func.func @transform_10(%arg0: i32, %arg1: i32) -> (i32, i32) {
    %c0_i32 = arith.constant 0 : i32
    %c0_i32_0 = arith.constant 0 : i32
    %c0_i32_1 = arith.constant 0 : i32
    return %c0_i32, %c0_i32_0 : i32, i32
  }
  func.func @transform_11(%arg0: i32, %arg1: i32) -> (i32, i32) {
    %c0_i32 = arith.constant 0 : i32
    %c0_i32_0 = arith.constant 0 : i32
    %c0_i32_1 = arith.constant 0 : i32
    return %c0_i32, %c0_i32_0 : i32, i32
  }
  func.func @transform_12(%arg0: i32, %arg1: i32) -> (i32, i32) {
    %c0_i32 = arith.constant 0 : i32
    %c0_i32_0 = arith.constant 0 : i32
    %c0_i32_1 = arith.constant 0 : i32
    return %c0_i32, %c0_i32_0 : i32, i32
  }
  func.func @transform_13(%arg0: i32, %arg1: i32) -> (i32, i32) {
    %c0_i32 = arith.constant 0 : i32
    %c0_i32_0 = arith.constant 0 : i32
    %c0_i32_1 = arith.constant 0 : i32
    return %c0_i32, %c0_i32_0 : i32, i32
  }
  func.func @transform_14(%arg0: i32, %arg1: i32) -> (i32, i32) {
    %c0_i32 = arith.constant 0 : i32
    %c0_i32_0 = arith.constant 0 : i32
    %c0_i32_1 = arith.constant 0 : i32
    return %c0_i32, %c0_i32_0 : i32, i32
  }
  func.func @transform_15(%arg0: i32, %arg1: i32) -> (i32, i32) {
    %c0_i32 = arith.constant 0 : i32
    %c0_i32_0 = arith.constant 0 : i32
    %c0_i32_1 = arith.constant 0 : i32
    return %c0_i32, %c0_i32_0 : i32, i32
  }
  func.func @transform_16(%arg0: i32, %arg1: i32) -> (i32, i32) {
    %c0_i32 = arith.constant 0 : i32
    %c0_i32_0 = arith.constant 0 : i32
    %c0_i32_1 = arith.constant 0 : i32
    return %c0_i32, %c0_i32_0 : i32, i32
  }
  func.func @transform_17(%arg0: i32, %arg1: i32) -> (i32, i32) {
    %c0_i32 = arith.constant 0 : i32
    %c0_i32_0 = arith.constant 0 : i32
    %c0_i32_1 = arith.constant 0 : i32
    return %c0_i32, %c0_i32_0 : i32, i32
  }
  func.func @transform_18(%arg0: i32, %arg1: i32) -> (i32, i32) {
    %c0_i32 = arith.constant 0 : i32
    %c0_i32_0 = arith.constant 0 : i32
    %c0_i32_1 = arith.constant 0 : i32
    return %c0_i32, %c0_i32_0 : i32, i32
  }
  func.func @transform_19(%arg0: i32, %arg1: i32) -> (i32, i32) {
    %c0_i32 = arith.constant 0 : i32
    %c0_i32_0 = arith.constant 0 : i32
    %c0_i32_1 = arith.constant 0 : i32
    return %c0_i32, %c0_i32_0 : i32, i32
  }
  func.func @transform_20(%arg0: i32, %arg1: i32) -> (i32, i32) {
    %c0_i32 = arith.constant 0 : i32
    %c0_i32_0 = arith.constant 0 : i32
    %c0_i32_1 = arith.constant 0 : i32
    return %c0_i32, %c0_i32_0 : i32, i32
  }
  func.func @transform_21(%arg0: i32, %arg1: i32) -> (i32, i32, i32) {
    %c0_i32 = arith.constant 0 : i32
    %c0_i32_0 = arith.constant 0 : i32
    return %arg0, %arg1, %c0_i32 : i32, i32, i32
  }
}

module attributes {stable_mosaic.version = 11 : i64} {
  func.func @decoder_kernel(%arg0: i32, %arg1: i32, %arg2: memref<1x8x128xf32, #tpu.memory_space<vmem>>, %arg3: memref<1x16x128xf32, #tpu.memory_space<vmem>>, %arg4: memref<1x24x128xf32, #tpu.memory_space<vmem>>, %arg5: memref<128x128xf32, #tpu.memory_space<vmem>>, %arg6: memref<128x128xf32, #tpu.memory_space<vmem>>, %arg7: memref<128x128xf32, #tpu.memory_space<vmem>>, %arg8: memref<128x128xf32, #tpu.memory_space<vmem>>, %arg9: memref<128x128xf32, #tpu.memory_space<vmem>>, %arg10: memref<128x128xf32, #tpu.memory_space<vmem>>, %arg11: memref<128x128xf32, #tpu.memory_space<vmem>>, %arg12: memref<128x128xf32, #tpu.memory_space<vmem>>, %arg13: memref<1x128xf32, #tpu.memory_space<vmem>>, %arg14: memref<1x128xf32, #tpu.memory_space<vmem>>, %arg15: memref<1x128xf32, #tpu.memory_space<vmem>>, %arg16: memref<1x128xf32, #tpu.memory_space<vmem>>, %arg17: memref<1x128xf32, #tpu.memory_space<vmem>>, %arg18: memref<1x128xf32, #tpu.memory_space<vmem>>, %arg19: memref<128x128xf32, #tpu.memory_space<vmem>>, %arg20: memref<1x128xf32, #tpu.memory_space<vmem>>, %arg21: memref<128x128xf32, #tpu.memory_space<vmem>>, %arg22: memref<1x128xf32, #tpu.memory_space<vmem>>, %arg23: memref<1x8x128xf32, #tpu.memory_space<vmem>>) attributes {dimension_semantics = [#tpu.dimension_semantics<parallel>, #tpu.dimension_semantics<parallel>], iteration_bounds = array<i64: 2, 2>, scalar_prefetch = 0 : i64, scratch_operands = 0 : i64, tpu.core_type = #tpu.core_type<tc>, window_params = [{transform_indices = @transform_0, window_bounds = array<i64: 1, 8, 128>}, {transform_indices = @transform_1, window_bounds = array<i64: 1, 16, 128>}, {transform_indices = @transform_2, window_bounds = array<i64: 1, 24, 128>}, {pipeline_mode = #tpu.pipeline_mode<synchronous>, transform_indices = @transform_3, window_bounds = array<i64: 128, 128>}, {pipeline_mode = #tpu.pipeline_mode<synchronous>, transform_indices = @transform_4, window_bounds = array<i64: 128, 128>}, {pipeline_mode = #tpu.pipeline_mode<synchronous>, transform_indices = @transform_5, window_bounds = array<i64: 128, 128>}, {pipeline_mode = #tpu.pipeline_mode<synchronous>, transform_indices = @transform_6, window_bounds = array<i64: 128, 128>}, {pipeline_mode = #tpu.pipeline_mode<synchronous>, transform_indices = @transform_7, window_bounds = array<i64: 128, 128>}, {pipeline_mode = #tpu.pipeline_mode<synchronous>, transform_indices = @transform_8, window_bounds = array<i64: 128, 128>}, {pipeline_mode = #tpu.pipeline_mode<synchronous>, transform_indices = @transform_9, window_bounds = array<i64: 128, 128>}, {pipeline_mode = #tpu.pipeline_mode<synchronous>, transform_indices = @transform_10, window_bounds = array<i64: 128, 128>}, {pipeline_mode = #tpu.pipeline_mode<synchronous>, transform_indices = @transform_11, window_bounds = array<i64: 1, 128>}, {pipeline_mode = #tpu.pipeline_mode<synchronous>, transform_indices = @transform_12, window_bounds = array<i64: 1, 128>}, {pipeline_mode = #tpu.pipeline_mode<synchronous>, transform_indices = @transform_13, window_bounds = array<i64: 1, 128>}, {pipeline_mode = #tpu.pipeline_mode<synchronous>, transform_indices = @transform_14, window_bounds = array<i64: 1, 128>}, {pipeline_mode = #tpu.pipeline_mode<synchronous>, transform_indices = @transform_15, window_bounds = array<i64: 1, 128>}, {pipeline_mode = #tpu.pipeline_mode<synchronous>, transform_indices = @transform_16, window_bounds = array<i64: 1, 128>}, {pipeline_mode = #tpu.pipeline_mode<synchronous>, transform_indices = @transform_17, window_bounds = array<i64: 128, 128>}, {pipeline_mode = #tpu.pipeline_mode<synchronous>, transform_indices = @transform_18, window_bounds = array<i64: 1, 128>}, {pipeline_mode = #tpu.pipeline_mode<synchronous>, transform_indices = @transform_19, window_bounds = array<i64: 128, 128>}, {pipeline_mode = #tpu.pipeline_mode<synchronous>, transform_indices = @transform_20, window_bounds = array<i64: 1, 128>}, {transform_indices = @transform_21, window_bounds = array<i64: 1, 8, 128>}]} {
    %c0 = arith.constant 0 : index
    %c0_0 = arith.constant 0 : index
    %c0_1 = arith.constant 0 : index
    %0 = vector.load %arg2[%c0, %c0_0, %c0_1] : memref<1x8x128xf32, #tpu.memory_space<vmem>>, vector<1x8x128xf32>
    %1 = vector.shape_cast %0 : vector<1x8x128xf32> to vector<8x128xf32>
    %c0_2 = arith.constant 0 : index
    %c0_3 = arith.constant 0 : index
    %c0_4 = arith.constant 0 : index
    %2 = vector.load %arg3[%c0_2, %c0_3, %c0_4] : memref<1x16x128xf32, #tpu.memory_space<vmem>>, vector<1x16x128xf32>
    %3 = vector.shape_cast %2 : vector<1x16x128xf32> to vector<16x128xf32>
    %c0_5 = arith.constant 0 : index
    %c0_6 = arith.constant 0 : index
    %c0_7 = arith.constant 0 : index
    %4 = vector.load %arg4[%c0_5, %c0_6, %c0_7] : memref<1x24x128xf32, #tpu.memory_space<vmem>>, vector<1x24x128xf32>
    %5 = vector.shape_cast %4 : vector<1x24x128xf32> to vector<24x128xf32>
    %c0_8 = arith.constant 0 : index
    %c0_9 = arith.constant 0 : index
    %6 = vector.load %arg5[%c0_8, %c0_9] : memref<128x128xf32, #tpu.memory_space<vmem>>, vector<128x128xf32>
    %c0_10 = arith.constant 0 : index
    %c0_11 = arith.constant 0 : index
    %7 = vector.load %arg6[%c0_10, %c0_11] : memref<128x128xf32, #tpu.memory_space<vmem>>, vector<128x128xf32>
    %c0_12 = arith.constant 0 : index
    %c0_13 = arith.constant 0 : index
    %8 = vector.load %arg7[%c0_12, %c0_13] : memref<128x128xf32, #tpu.memory_space<vmem>>, vector<128x128xf32>
    %c0_14 = arith.constant 0 : index
    %c0_15 = arith.constant 0 : index
    %9 = vector.load %arg8[%c0_14, %c0_15] : memref<128x128xf32, #tpu.memory_space<vmem>>, vector<128x128xf32>
    %cst = arith.constant dense<0.000000e+00> : vector<8x128xf32>
    %10 = tpu.matmul %1, %6, %cst {dimension_numbers = #tpu.dot_dimension_numbers<[1], [0], [0], [1], [0, 0, 1, 1], [], []>} : vector<8x128xf32>, vector<128x128xf32>, vector<8x128xf32> -> vector<8x128xf32>
    %cst_16 = arith.constant dense<0.000000e+00> : vector<16x128xf32>
    %11 = tpu.matmul %3, %7, %cst_16 {dimension_numbers = #tpu.dot_dimension_numbers<[1], [0], [0], [1], [0, 0, 1, 1], [], []>} : vector<16x128xf32>, vector<128x128xf32>, vector<16x128xf32> -> vector<16x128xf32>
    %cst_17 = arith.constant dense<0.000000e+00> : vector<16x128xf32>
    %12 = tpu.matmul %3, %8, %cst_17 {dimension_numbers = #tpu.dot_dimension_numbers<[1], [0], [0], [1], [0, 0, 1, 1], [], []>} : vector<16x128xf32>, vector<128x128xf32>, vector<16x128xf32> -> vector<16x128xf32>
    %cst_18 = arith.constant dense<0.000000e+00> : vector<8x16xf32>
    %13 = tpu.matmul %10, %11, %cst_18 {dimension_numbers = #tpu.dot_dimension_numbers<[1], [1], [0], [0], [0, 0, 1, 0], [], []>} : vector<8x128xf32>, vector<16x128xf32>, vector<8x16xf32> -> vector<8x16xf32>
    %cst_19 = arith.constant 0.0883883461 : f32
    %14 = vector.broadcast %cst_19 : f32 to vector<8x16xf32>
    %15 = arith.mulf %13, %14 : vector<8x16xf32>
    %cst_20 = arith.constant dense<0xFF800000> : vector<8xf32>
    %16 = vector.multi_reduction <maximumf>, %15, %cst_20 [1] : vector<8x16xf32> to vector<8xf32>
    %17 = vector.shape_cast %16 : vector<8xf32> to vector<8x1xf32>
    %18 = vector.broadcast %17 : vector<8x1xf32> to vector<8x16xf32>
    %19 = arith.subf %15, %18 : vector<8x16xf32>
    %20 = math.exp %19 : vector<8x16xf32>
    %cst_21 = arith.constant dense<0.000000e+00> : vector<8xf32>
    %21 = vector.multi_reduction <add>, %20, %cst_21 [1] : vector<8x16xf32> to vector<8xf32>
    %22 = vector.shape_cast %21 : vector<8xf32> to vector<8x1xf32>
    %23 = tpu.reciprocal %22 {approx = true} : vector<8x1xf32> -> vector<8x1xf32>
    %24 = vector.broadcast %23 : vector<8x1xf32> to vector<8x16xf32>
    %25 = arith.mulf %20, %24 : vector<8x16xf32>
    %cst_22 = arith.constant dense<0.000000e+00> : vector<8x128xf32>
    %26 = tpu.matmul %25, %12, %cst_22 {dimension_numbers = #tpu.dot_dimension_numbers<[1], [0], [0], [1], [0, 0, 1, 1], [], []>} : vector<8x16xf32>, vector<16x128xf32>, vector<8x128xf32> -> vector<8x128xf32>
    %cst_23 = arith.constant dense<0.000000e+00> : vector<8x128xf32>
    %27 = tpu.matmul %26, %9, %cst_23 {dimension_numbers = #tpu.dot_dimension_numbers<[1], [0], [0], [1], [0, 0, 1, 1], [], []>} : vector<8x128xf32>, vector<128x128xf32>, vector<8x128xf32> -> vector<8x128xf32>
    %28 = arith.addf %27, %1 : vector<8x128xf32>
    %c0_24 = arith.constant 0 : index
    %c0_25 = arith.constant 0 : index
    %29 = vector.load %arg13[%c0_24, %c0_25] : memref<1x128xf32, #tpu.memory_space<vmem>>, vector<1x128xf32>
    %c0_26 = arith.constant 0 : index
    %c0_27 = arith.constant 0 : index
    %30 = vector.load %arg14[%c0_26, %c0_27] : memref<1x128xf32, #tpu.memory_space<vmem>>, vector<1x128xf32>
    %cst_28 = arith.constant dense<0.000000e+00> : vector<8xf32>
    %31 = vector.multi_reduction <add>, %28, %cst_28 [1] : vector<8x128xf32> to vector<8xf32>
    %32 = vector.shape_cast %31 : vector<8xf32> to vector<8x1xf32>
    %cst_29 = arith.constant 1.280000e+02 : f32
    %33 = vector.broadcast %cst_29 : f32 to vector<8x1xf32>
    %34 = arith.divf %32, %33 : vector<8x1xf32>
    %35 = vector.broadcast %34 : vector<8x1xf32> to vector<8x128xf32>
    %36 = arith.subf %28, %35 : vector<8x128xf32>
    %37 = arith.mulf %36, %36 : vector<8x128xf32>
    %cst_30 = arith.constant dense<0.000000e+00> : vector<8xf32>
    %38 = vector.multi_reduction <add>, %37, %cst_30 [1] : vector<8x128xf32> to vector<8xf32>
    %39 = vector.shape_cast %38 : vector<8xf32> to vector<8x1xf32>
    %cst_31 = arith.constant 1.280000e+02 : f32
    %40 = vector.broadcast %cst_31 : f32 to vector<8x1xf32>
    %41 = arith.divf %39, %40 : vector<8x1xf32>
    %42 = vector.broadcast %34 : vector<8x1xf32> to vector<8x128xf32>
    %43 = arith.subf %28, %42 : vector<8x128xf32>
    %cst_32 = arith.constant 9.99999974E-6 : f32
    %44 = vector.broadcast %cst_32 : f32 to vector<8x1xf32>
    %45 = arith.addf %41, %44 : vector<8x1xf32>
    %46 = math.rsqrt %45 : vector<8x1xf32>
    %47 = vector.broadcast %46 : vector<8x1xf32> to vector<8x128xf32>
    %48 = arith.mulf %43, %47 : vector<8x128xf32>
    %49 = vector.broadcast %29 : vector<1x128xf32> to vector<8x128xf32>
    %50 = arith.mulf %48, %49 : vector<8x128xf32>
    %51 = vector.broadcast %30 : vector<1x128xf32> to vector<8x128xf32>
    %52 = arith.addf %50, %51 : vector<8x128xf32>
    %c0_33 = arith.constant 0 : index
    %c0_34 = arith.constant 0 : index
    %53 = vector.load %arg9[%c0_33, %c0_34] : memref<128x128xf32, #tpu.memory_space<vmem>>, vector<128x128xf32>
    %c0_35 = arith.constant 0 : index
    %c0_36 = arith.constant 0 : index
    %54 = vector.load %arg10[%c0_35, %c0_36] : memref<128x128xf32, #tpu.memory_space<vmem>>, vector<128x128xf32>
    %c0_37 = arith.constant 0 : index
    %c0_38 = arith.constant 0 : index
    %55 = vector.load %arg11[%c0_37, %c0_38] : memref<128x128xf32, #tpu.memory_space<vmem>>, vector<128x128xf32>
    %c0_39 = arith.constant 0 : index
    %c0_40 = arith.constant 0 : index
    %56 = vector.load %arg12[%c0_39, %c0_40] : memref<128x128xf32, #tpu.memory_space<vmem>>, vector<128x128xf32>
    %cst_41 = arith.constant dense<0.000000e+00> : vector<8x128xf32>
    %57 = tpu.matmul %52, %53, %cst_41 {dimension_numbers = #tpu.dot_dimension_numbers<[1], [0], [0], [1], [0, 0, 1, 1], [], []>} : vector<8x128xf32>, vector<128x128xf32>, vector<8x128xf32> -> vector<8x128xf32>
    %cst_42 = arith.constant dense<0.000000e+00> : vector<24x128xf32>
    %58 = tpu.matmul %5, %54, %cst_42 {dimension_numbers = #tpu.dot_dimension_numbers<[1], [0], [0], [1], [0, 0, 1, 1], [], []>} : vector<24x128xf32>, vector<128x128xf32>, vector<24x128xf32> -> vector<24x128xf32>
    %cst_43 = arith.constant dense<0.000000e+00> : vector<24x128xf32>
    %59 = tpu.matmul %5, %55, %cst_43 {dimension_numbers = #tpu.dot_dimension_numbers<[1], [0], [0], [1], [0, 0, 1, 1], [], []>} : vector<24x128xf32>, vector<128x128xf32>, vector<24x128xf32> -> vector<24x128xf32>
    %cst_44 = arith.constant dense<0.000000e+00> : vector<8x24xf32>
    %60 = tpu.matmul %57, %58, %cst_44 {dimension_numbers = #tpu.dot_dimension_numbers<[1], [1], [0], [0], [0, 0, 1, 0], [], []>} : vector<8x128xf32>, vector<24x128xf32>, vector<8x24xf32> -> vector<8x24xf32>
    %cst_45 = arith.constant 0.0883883461 : f32
    %61 = vector.broadcast %cst_45 : f32 to vector<8x24xf32>
    %62 = arith.mulf %60, %61 : vector<8x24xf32>
    %cst_46 = arith.constant dense<0xFF800000> : vector<8xf32>
    %63 = vector.multi_reduction <maximumf>, %62, %cst_46 [1] : vector<8x24xf32> to vector<8xf32>
    %64 = vector.shape_cast %63 : vector<8xf32> to vector<8x1xf32>
    %65 = vector.broadcast %64 : vector<8x1xf32> to vector<8x24xf32>
    %66 = arith.subf %62, %65 : vector<8x24xf32>
    %67 = math.exp %66 : vector<8x24xf32>
    %cst_47 = arith.constant dense<0.000000e+00> : vector<8xf32>
    %68 = vector.multi_reduction <add>, %67, %cst_47 [1] : vector<8x24xf32> to vector<8xf32>
    %69 = vector.shape_cast %68 : vector<8xf32> to vector<8x1xf32>
    %70 = tpu.reciprocal %69 {approx = true} : vector<8x1xf32> -> vector<8x1xf32>
    %71 = vector.broadcast %70 : vector<8x1xf32> to vector<8x24xf32>
    %72 = arith.mulf %67, %71 : vector<8x24xf32>
    %cst_48 = arith.constant dense<0.000000e+00> : vector<8x128xf32>
    %73 = tpu.matmul %72, %59, %cst_48 {dimension_numbers = #tpu.dot_dimension_numbers<[1], [0], [0], [1], [0, 0, 1, 1], [], []>} : vector<8x24xf32>, vector<24x128xf32>, vector<8x128xf32> -> vector<8x128xf32>
    %cst_49 = arith.constant dense<0.000000e+00> : vector<8x128xf32>
    %74 = tpu.matmul %73, %56, %cst_49 {dimension_numbers = #tpu.dot_dimension_numbers<[1], [0], [0], [1], [0, 0, 1, 1], [], []>} : vector<8x128xf32>, vector<128x128xf32>, vector<8x128xf32> -> vector<8x128xf32>
    %75 = arith.addf %74, %52 : vector<8x128xf32>
    %c0_50 = arith.constant 0 : index
    %c0_51 = arith.constant 0 : index
    %76 = vector.load %arg15[%c0_50, %c0_51] : memref<1x128xf32, #tpu.memory_space<vmem>>, vector<1x128xf32>
    %c0_52 = arith.constant 0 : index
    %c0_53 = arith.constant 0 : index
    %77 = vector.load %arg16[%c0_52, %c0_53] : memref<1x128xf32, #tpu.memory_space<vmem>>, vector<1x128xf32>
    %cst_54 = arith.constant dense<0.000000e+00> : vector<8xf32>
    %78 = vector.multi_reduction <add>, %75, %cst_54 [1] : vector<8x128xf32> to vector<8xf32>
    %79 = vector.shape_cast %78 : vector<8xf32> to vector<8x1xf32>
    %cst_55 = arith.constant 1.280000e+02 : f32
    %80 = vector.broadcast %cst_55 : f32 to vector<8x1xf32>
    %81 = arith.divf %79, %80 : vector<8x1xf32>
    %82 = vector.broadcast %81 : vector<8x1xf32> to vector<8x128xf32>
    %83 = arith.subf %75, %82 : vector<8x128xf32>
    %84 = arith.mulf %83, %83 : vector<8x128xf32>
    %cst_56 = arith.constant dense<0.000000e+00> : vector<8xf32>
    %85 = vector.multi_reduction <add>, %84, %cst_56 [1] : vector<8x128xf32> to vector<8xf32>
    %86 = vector.shape_cast %85 : vector<8xf32> to vector<8x1xf32>
    %cst_57 = arith.constant 1.280000e+02 : f32
    %87 = vector.broadcast %cst_57 : f32 to vector<8x1xf32>
    %88 = arith.divf %86, %87 : vector<8x1xf32>
    %89 = vector.broadcast %81 : vector<8x1xf32> to vector<8x128xf32>
    %90 = arith.subf %75, %89 : vector<8x128xf32>
    %cst_58 = arith.constant 9.99999974E-6 : f32
    %91 = vector.broadcast %cst_58 : f32 to vector<8x1xf32>
    %92 = arith.addf %88, %91 : vector<8x1xf32>
    %93 = math.rsqrt %92 : vector<8x1xf32>
    %94 = vector.broadcast %93 : vector<8x1xf32> to vector<8x128xf32>
    %95 = arith.mulf %90, %94 : vector<8x128xf32>
    %96 = vector.broadcast %76 : vector<1x128xf32> to vector<8x128xf32>
    %97 = arith.mulf %95, %96 : vector<8x128xf32>
    %98 = vector.broadcast %77 : vector<1x128xf32> to vector<8x128xf32>
    %99 = arith.addf %97, %98 : vector<8x128xf32>
    %c0_59 = arith.constant 0 : index
    %c0_60 = arith.constant 0 : index
    %100 = vector.load %arg19[%c0_59, %c0_60] : memref<128x128xf32, #tpu.memory_space<vmem>>, vector<128x128xf32>
    %cst_61 = arith.constant dense<0.000000e+00> : vector<8x128xf32>
    %101 = tpu.matmul %99, %100, %cst_61 {dimension_numbers = #tpu.dot_dimension_numbers<[1], [0], [0], [1], [0, 0, 1, 1], [], []>} : vector<8x128xf32>, vector<128x128xf32>, vector<8x128xf32> -> vector<8x128xf32>
    %c0_62 = arith.constant 0 : index
    %c0_63 = arith.constant 0 : index
    %102 = vector.load %arg20[%c0_62, %c0_63] : memref<1x128xf32, #tpu.memory_space<vmem>>, vector<1x128xf32>
    %103 = vector.broadcast %102 : vector<1x128xf32> to vector<8x128xf32>
    %104 = arith.addf %101, %103 : vector<8x128xf32>
    %cst_64 = arith.constant 0.000000e+00 : f32
    %105 = vector.broadcast %cst_64 : f32 to vector<8x128xf32>
    %106 = arith.maximumf %104, %105 : vector<8x128xf32>
    %c0_65 = arith.constant 0 : index
    %c0_66 = arith.constant 0 : index
    %107 = vector.load %arg21[%c0_65, %c0_66] : memref<128x128xf32, #tpu.memory_space<vmem>>, vector<128x128xf32>
    %cst_67 = arith.constant dense<0.000000e+00> : vector<8x128xf32>
    %108 = tpu.matmul %106, %107, %cst_67 {dimension_numbers = #tpu.dot_dimension_numbers<[1], [0], [0], [1], [0, 0, 1, 1], [], []>} : vector<8x128xf32>, vector<128x128xf32>, vector<8x128xf32> -> vector<8x128xf32>
    %c0_68 = arith.constant 0 : index
    %c0_69 = arith.constant 0 : index
    %109 = vector.load %arg22[%c0_68, %c0_69] : memref<1x128xf32, #tpu.memory_space<vmem>>, vector<1x128xf32>
    %110 = vector.broadcast %109 : vector<1x128xf32> to vector<8x128xf32>
    %111 = arith.addf %108, %110 : vector<8x128xf32>
    %112 = arith.addf %111, %99 : vector<8x128xf32>
    %c0_70 = arith.constant 0 : index
    %c0_71 = arith.constant 0 : index
    %113 = vector.load %arg17[%c0_70, %c0_71] : memref<1x128xf32, #tpu.memory_space<vmem>>, vector<1x128xf32>
    %c0_72 = arith.constant 0 : index
    %c0_73 = arith.constant 0 : index
    %114 = vector.load %arg18[%c0_72, %c0_73] : memref<1x128xf32, #tpu.memory_space<vmem>>, vector<1x128xf32>
    %cst_74 = arith.constant dense<0.000000e+00> : vector<8xf32>
    %115 = vector.multi_reduction <add>, %112, %cst_74 [1] : vector<8x128xf32> to vector<8xf32>
    %116 = vector.shape_cast %115 : vector<8xf32> to vector<8x1xf32>
    %cst_75 = arith.constant 1.280000e+02 : f32
    %117 = vector.broadcast %cst_75 : f32 to vector<8x1xf32>
    %118 = arith.divf %116, %117 : vector<8x1xf32>
    %119 = vector.broadcast %118 : vector<8x1xf32> to vector<8x128xf32>
    %120 = arith.subf %112, %119 : vector<8x128xf32>
    %121 = arith.mulf %120, %120 : vector<8x128xf32>
    %cst_76 = arith.constant dense<0.000000e+00> : vector<8xf32>
    %122 = vector.multi_reduction <add>, %121, %cst_76 [1] : vector<8x128xf32> to vector<8xf32>
    %123 = vector.shape_cast %122 : vector<8xf32> to vector<8x1xf32>
    %cst_77 = arith.constant 1.280000e+02 : f32
    %124 = vector.broadcast %cst_77 : f32 to vector<8x1xf32>
    %125 = arith.divf %123, %124 : vector<8x1xf32>
    %126 = vector.broadcast %118 : vector<8x1xf32> to vector<8x128xf32>
    %127 = arith.subf %112, %126 : vector<8x128xf32>
    %cst_78 = arith.constant 9.99999974E-6 : f32
    %128 = vector.broadcast %cst_78 : f32 to vector<8x1xf32>
    %129 = arith.addf %125, %128 : vector<8x1xf32>
    %130 = math.rsqrt %129 : vector<8x1xf32>
    %131 = vector.broadcast %130 : vector<8x1xf32> to vector<8x128xf32>
    %132 = arith.mulf %127, %131 : vector<8x128xf32>
    %133 = vector.broadcast %113 : vector<1x128xf32> to vector<8x128xf32>
    %134 = arith.mulf %132, %133 : vector<8x128xf32>
    %135 = vector.broadcast %114 : vector<1x128xf32> to vector<8x128xf32>
    %136 = arith.addf %134, %135 : vector<8x128xf32>
    %c0_79 = arith.constant 0 : index
    %c0_80 = arith.constant 0 : index
    %c0_81 = arith.constant 0 : index
    %137 = vector.load %arg23[%c0_79, %c0_80, %c0_81] : memref<1x8x128xf32, #tpu.memory_space<vmem>>, vector<1x8x128xf32>
    %138 = vector.shape_cast %137 : vector<1x8x128xf32> to vector<8x128xf32>
    %139 = vector.shape_cast %136 : vector<8x128xf32> to vector<1x8x128xf32>
    tpu.vector_store %arg23[%c0_79, %c0_80, %c0_81], %139 {strides = array<i32>} : memref<1x8x128xf32, #tpu.memory_space<vmem>>, vector<1x8x128xf32>,
    return
  }
  func.func @transform_0(%arg0: i32, %arg1: i32) -> (i32, i32, i32) {
    %c0_i32 = arith.constant 0 : i32
    %c0_i32_0 = arith.constant 0 : i32
    return %arg0, %arg1, %c0_i32 : i32, i32, i32
  }
  func.func @transform_1(%arg0: i32, %arg1: i32) -> (i32, i32, i32) {
    %c0_i32 = arith.constant 0 : i32
    %c0_i32_0 = arith.constant 0 : i32
    %c0_i32_1 = arith.constant 0 : i32
    return %arg0, %c0_i32, %c0_i32_0 : i32, i32, i32
  }
  func.func @transform_2(%arg0: i32, %arg1: i32) -> (i32, i32, i32) {
    %c0_i32 = arith.constant 0 : i32
    %c0_i32_0 = arith.constant 0 : i32
    %c0_i32_1 = arith.constant 0 : i32
    return %arg0, %c0_i32, %c0_i32_0 : i32, i32, i32
  }
  func.func @transform_3(%arg0: i32, %arg1: i32) -> (i32, i32) {
    %c0_i32 = arith.constant 0 : i32
    %c0_i32_0 = arith.constant 0 : i32
    %c0_i32_1 = arith.constant 0 : i32
    return %c0_i32, %c0_i32_0 : i32, i32
  }
  func.func @transform_4(%arg0: i32, %arg1: i32) -> (i32, i32) {
    %c0_i32 = arith.constant 0 : i32
    %c0_i32_0 = arith.constant 0 : i32
    %c0_i32_1 = arith.constant 0 : i32
    return %c0_i32, %c0_i32_0 : i32, i32
  }
  func.func @transform_5(%arg0: i32, %arg1: i32) -> (i32, i32) {
    %c0_i32 = arith.constant 0 : i32
    %c0_i32_0 = arith.constant 0 : i32
    %c0_i32_1 = arith.constant 0 : i32
    return %c0_i32, %c0_i32_0 : i32, i32
  }
  func.func @transform_6(%arg0: i32, %arg1: i32) -> (i32, i32) {
    %c0_i32 = arith.constant 0 : i32
    %c0_i32_0 = arith.constant 0 : i32
    %c0_i32_1 = arith.constant 0 : i32
    return %c0_i32, %c0_i32_0 : i32, i32
  }
  func.func @transform_7(%arg0: i32, %arg1: i32) -> (i32, i32) {
    %c0_i32 = arith.constant 0 : i32
    %c0_i32_0 = arith.constant 0 : i32
    %c0_i32_1 = arith.constant 0 : i32
    return %c0_i32, %c0_i32_0 : i32, i32
  }
  func.func @transform_8(%arg0: i32, %arg1: i32) -> (i32, i32) {
    %c0_i32 = arith.constant 0 : i32
    %c0_i32_0 = arith.constant 0 : i32
    %c0_i32_1 = arith.constant 0 : i32
    return %c0_i32, %c0_i32_0 : i32, i32
  }
  func.func @transform_9(%arg0: i32, %arg1: i32) -> (i32, i32) {
    %c0_i32 = arith.constant 0 : i32
    %c0_i32_0 = arith.constant 0 : i32
    %c0_i32_1 = arith.constant 0 : i32
    return %c0_i32, %c0_i32_0 : i32, i32
  }
  func.func @transform_10(%arg0: i32, %arg1: i32) -> (i32, i32) {
    %c0_i32 = arith.constant 0 : i32
    %c0_i32_0 = arith.constant 0 : i32
    %c0_i32_1 = arith.constant 0 : i32
    return %c0_i32, %c0_i32_0 : i32, i32
  }
  func.func @transform_11(%arg0: i32, %arg1: i32) -> (i32, i32) {
    %c0_i32 = arith.constant 0 : i32
    %c0_i32_0 = arith.constant 0 : i32
    %c0_i32_1 = arith.constant 0 : i32
    return %c0_i32, %c0_i32_0 : i32, i32
  }
  func.func @transform_12(%arg0: i32, %arg1: i32) -> (i32, i32) {
    %c0_i32 = arith.constant 0 : i32
    %c0_i32_0 = arith.constant 0 : i32
    %c0_i32_1 = arith.constant 0 : i32
    return %c0_i32, %c0_i32_0 : i32, i32
  }
  func.func @transform_13(%arg0: i32, %arg1: i32) -> (i32, i32) {
    %c0_i32 = arith.constant 0 : i32
    %c0_i32_0 = arith.constant 0 : i32
    %c0_i32_1 = arith.constant 0 : i32
    return %c0_i32, %c0_i32_0 : i32, i32
  }
  func.func @transform_14(%arg0: i32, %arg1: i32) -> (i32, i32) {
    %c0_i32 = arith.constant 0 : i32
    %c0_i32_0 = arith.constant 0 : i32
    %c0_i32_1 = arith.constant 0 : i32
    return %c0_i32, %c0_i32_0 : i32, i32
  }
  func.func @transform_15(%arg0: i32, %arg1: i32) -> (i32, i32) {
    %c0_i32 = arith.constant 0 : i32
    %c0_i32_0 = arith.constant 0 : i32
    %c0_i32_1 = arith.constant 0 : i32
    return %c0_i32, %c0_i32_0 : i32, i32
  }
  func.func @transform_16(%arg0: i32, %arg1: i32) -> (i32, i32) {
    %c0_i32 = arith.constant 0 : i32
    %c0_i32_0 = arith.constant 0 : i32
    %c0_i32_1 = arith.constant 0 : i32
    return %c0_i32, %c0_i32_0 : i32, i32
  }
  func.func @transform_17(%arg0: i32, %arg1: i32) -> (i32, i32) {
    %c0_i32 = arith.constant 0 : i32
    %c0_i32_0 = arith.constant 0 : i32
    %c0_i32_1 = arith.constant 0 : i32
    return %c0_i32, %c0_i32_0 : i32, i32
  }
  func.func @transform_18(%arg0: i32, %arg1: i32) -> (i32, i32) {
    %c0_i32 = arith.constant 0 : i32
    %c0_i32_0 = arith.constant 0 : i32
    %c0_i32_1 = arith.constant 0 : i32
    return %c0_i32, %c0_i32_0 : i32, i32
  }
  func.func @transform_19(%arg0: i32, %arg1: i32) -> (i32, i32) {
    %c0_i32 = arith.constant 0 : i32
    %c0_i32_0 = arith.constant 0 : i32
    %c0_i32_1 = arith.constant 0 : i32
    return %c0_i32, %c0_i32_0 : i32, i32
  }
  func.func @transform_20(%arg0: i32, %arg1: i32) -> (i32, i32) {
    %c0_i32 = arith.constant 0 : i32
    %c0_i32_0 = arith.constant 0 : i32
    %c0_i32_1 = arith.constant 0 : i32
    return %c0_i32, %c0_i32_0 : i32, i32
  }
  func.func @transform_21(%arg0: i32, %arg1: i32) -> (i32, i32, i32) {
    %c0_i32 = arith.constant 0 : i32
    %c0_i32_0 = arith.constant 0 : i32
    return %arg0, %arg1, %c0_i32 : i32, i32, i32
  }
}

</mosaic_0001>

<llo_original>
// kernel: tpu_custom_call.1
$region0: #{tpu_custom_call.1}
  #allocation0 [shape = 'u32[]', space=smem, size = 0x4, offset = 0x4, fixed_abs, tag = 'smem constant byte address 0x4 - core index']
  #allocation1 [shape = 'u32[72,128]{1,0:T(1,128)}', space=vmem, size = 0x9000, scoped, tag = 'internal scratch']
  %s0 = inlined_call_operand.hbm [shape: f32[2,16,128], index: 0, kind: input, shape index: {}]
  %s1 = inlined_call_operand.hbm [shape: f32[2,16,128], index: 1, kind: input, shape index: {}]
  %s2 = inlined_call_operand.hbm [shape: f32[2,24,128], index: 2, kind: input, shape index: {}]
  %s3 = inlined_call_operand.hbm [shape: f32[128,128], index: 3, kind: input, shape index: {}]
  %s4 = inlined_call_operand.hbm [shape: f32[128,128], index: 4, kind: input, shape index: {}]
  %s5 = inlined_call_operand.hbm [shape: f32[128,128], index: 5, kind: input, shape index: {}]
  %s6 = inlined_call_operand.hbm [shape: f32[128,128], index: 6, kind: input, shape index: {}]
  %s7 = inlined_call_operand.hbm [shape: f32[128,128], index: 7, kind: input, shape index: {}]
  %s8 = inlined_call_operand.hbm [shape: f32[128,128], index: 8, kind: input, shape index: {}]
  %s9 = inlined_call_operand.hbm [shape: f32[128,128], index: 9, kind: input, shape index: {}]
  %s10 = inlined_call_operand.hbm [shape: f32[128,128], index: 10, kind: input, shape index: {}]
  %s11 = inlined_call_operand.vmem [shape: f32[1,128], index: 11, kind: input, shape index: {}]
  %s12 = inlined_call_operand.vmem [shape: f32[1,128], index: 12, kind: input, shape index: {}]
  %s13 = inlined_call_operand.vmem [shape: f32[1,128], index: 13, kind: input, shape index: {}]
  %s14 = inlined_call_operand.vmem [shape: f32[1,128], index: 14, kind: input, shape index: {}]
  %s15 = inlined_call_operand.vmem [shape: f32[1,128], index: 15, kind: input, shape index: {}]
  %s16 = inlined_call_operand.vmem [shape: f32[1,128], index: 16, kind: input, shape index: {}]
  %s17 = inlined_call_operand.hbm [shape: f32[128,128], index: 17, kind: input, shape index: {}]
  %s18 = inlined_call_operand.vmem [shape: f32[1,128], index: 18, kind: input, shape index: {}]
  %s19 = inlined_call_operand.hbm [shape: f32[128,128], index: 19, kind: input, shape index: {}]
  %s20 = inlined_call_operand.vmem [shape: f32[1,128], index: 20, kind: input, shape index: {}]
  %s21 = inlined_call_operand.hbm [shape: f32[2,16,128], index: 21, kind: output, shape index: {}]
  %s22 = sld [smem:[#allocation0]]
  $region169: #{tpu_custom_call.1} parent=0
    _
  %s24 = ssub.s32 1, %s22
  %s25 = scalar_select 0, %s24, %s22
  $region1: #{tpu_custom_call.1} parent=0
    #allocation2 [shape = 'u8[8192]{0}', space=vmem, size = 0x2000, scoped, tag = 'input window, operand 0']
    #allocation3 [shape = 's32[2]{0}', space=sflag, size = 0x8, scoped, tag = 'scoped memory for tpu_custom_call.1']
    #allocation4 [shape = 's32[2]{0}', space=sflag, size = 0x8, scoped, tag = 'scoped memory for tpu_custom_call.1']
    #allocation5 [shape = 'u8[16384]{0}', space=vmem, size = 0x4000, scoped, tag = 'input window, operand 1']
    #allocation6 [shape = 's32[2]{0}', space=sflag, size = 0x8, scoped, tag = 'scoped memory for tpu_custom_call.1']
    #allocation7 [shape = 'u8[24576]{0}', space=vmem, size = 0x6000, scoped, tag = 'input window, operand 2']
    #allocation8 [shape = 'u8[65536]{0}', space=vmem, size = 0x10000, scoped, tag = 'input window, operand 3, single buffered']
    #allocation9 [shape = 's32[1]{0}', space=sflag, size = 0x4, scoped, tag = 'scoped memory for tpu_custom_call.1']
    #allocation10 [shape = 'u8[65536]{0}', space=vmem, size = 0x10000, scoped, tag = 'input window, operand 4, single buffered']
    #allocation11 [shape = 'u8[65536]{0}', space=vmem, size = 0x10000, scoped, tag = 'input window, operand 5, single buffered']
    #allocation12 [shape = 's32[1]{0}', space=sflag, size = 0x4, scoped, tag = 'scoped memory for tpu_custom_call.1']
    #allocation13 [shape = 'u8[65536]{0}', space=vmem, size = 0x10000, scoped, tag = 'input window, operand 6, single buffered']
    #allocation14 [shape = 'u8[65536]{0}', space=vmem, size = 0x10000, scoped, tag = 'input window, operand 7, single buffered']
    #allocation15 [shape = 's32[1]{0}', space=sflag, size = 0x4, scoped, tag = 'scoped memory for tpu_custom_call.1']
    #allocation16 [shape = 'u8[65536]{0}', space=vmem, size = 0x10000, scoped, tag = 'input window, operand 8, single buffered']
    #allocation17 [shape = 'u8[65536]{0}', space=vmem, size = 0x10000, scoped, tag = 'input window, operand 9, single buffered']
    #allocation18 [shape = 's32[1]{0}', space=sflag, size = 0x4, scoped, tag = 'scoped memory for tpu_custom_call.1']
    #allocation19 [shape = 'u8[65536]{0}', space=vmem, size = 0x10000, scoped, tag = 'input window, operand 10, single buffered']
    #allocation20 [shape = 'u8[65536]{0}', space=vmem, size = 0x10000, scoped, tag = 'input window, operand 17, single buffered']
    #allocation21 [shape = 's32[1]{0}', space=sflag, size = 0x4, scoped, tag = 'scoped memory for tpu_custom_call.1']
    #allocation22 [shape = 'u8[65536]{0}', space=vmem, size = 0x10000, scoped, tag = 'input window, operand 19, single buffered']
    #allocation23 [shape = 'u8[8192]{0}', space=vmem, size = 0x2000, scoped, tag = 'output window, operand 0']
    %26 = vsyncpa [#allocation3], 0
    %s27 = scalar_lea.sflag [#allocation3], 1
    %28 = vsyncpa %s27, 0
    %29 = vsyncpa [#allocation6], 0
    %s30 = scalar_lea.sflag [#allocation6], 1
    %31 = vsyncpa %s30, 0
    %32 = vsyncpa [#allocation9], 0
    %33 = vsyncpa [#allocation12], 0
    %34 = vsyncpa [#allocation15], 0
    %35 = vsyncpa [#allocation18], 0
    %36 = vsyncpa [#allocation21], 0
    %37 = vsyncpa [#allocation4], 0
    %s38 = scalar_lea.sflag [#allocation4], 1
    %39 = vsyncpa %s38, 0
    loop: start=0, step=1, limit=6
    $region2: #{tpu_custom_call.1} parent=1 // loop_pre_header
      _
    $region3: #{tpu_custom_call.1} parent=1 // loop_header
      %s41 = sphi 0, %s45
      %p42 = scmp.ge.s32.totalorder %s41, 6
      %s48 = sphi 0, %s60
      %s49 = sphi 0, %s56
      %s50 = sphi 0, %s48
      %s51 = sphi 0, %s49
      %s52 = sphi 0, %s50
      %s53 = sphi 0, %s51
      %s65 = sphi 0, %s67
      %s68 = sphi 0, %s65
      %s69 = sphi 0, %s68
      %s85 = sphi 0, %s69
      %s91 = sphi 0, %s93
      %s94 = sphi 0, %s91
      %s95 = sphi 0, %s94
      %s111 = sphi 0, %s95
      %s117 = sphi 0, %s119
      %s120 = sphi 0, %s117
      %s121 = sphi 0, %s120
      %s137 = sphi 0, %s121
      %s141 = sphi 0, %s141
      %s143 = sphi 0, %s141
      %s144 = sphi 0, %s143
      %s158 = sphi 0, %s144
      %s162 = sphi 0, %s162
      %s164 = sphi 0, %s162
      %s165 = sphi 0, %s164
      %s179 = sphi 0, %s165
      %s183 = sphi 0, %s183
      %s185 = sphi 0, %s183
      %s186 = sphi 0, %s185
      %s200 = sphi 0, %s186
      %s204 = sphi 0, %s204
      %s206 = sphi 0, %s204
      %s207 = sphi 0, %s206
      %s221 = sphi 0, %s207
      %s225 = sphi 0, %s225
      %s227 = sphi 0, %s225
      %s228 = sphi 0, %s227
      %s242 = sphi 0, %s228
      %s246 = sphi 0, %s246
      %s248 = sphi 0, %s246
      %s249 = sphi 0, %s248
      %s263 = sphi 0, %s249
      %s267 = sphi 0, %s267
      %s269 = sphi 0, %s267
      %s270 = sphi 0, %s269
      %s284 = sphi 0, %s270
      %s288 = sphi 0, %s288
      %s290 = sphi 0, %s288
      %s291 = sphi 0, %s290
      %s305 = sphi 0, %s291
      %s309 = sphi 0, %s309
      %s311 = sphi 0, %s309
      %s312 = sphi 0, %s311
      %s326 = sphi 0, %s312
      %s330 = sphi 0, %s330
      %s332 = sphi 0, %s330
      %s333 = sphi 0, %s332
      %s347 = sphi 0, %s333
      %s351 = sphi 0, %s351
      %s353 = sphi 0, %s351
      %s354 = sphi 0, %s353
      %s368 = sphi 0, %s354
      %s372 = sphi 0, %s372
      %s374 = sphi 0, %s372
      %s375 = sphi 0, %s374
      %s389 = sphi 0, %s375
      %s393 = sphi 0, %s393
      %s395 = sphi 0, %s393
      %s396 = sphi 0, %s395
      %s410 = sphi 0, %s396
      %s414 = sphi 0, %s414
      %s416 = sphi 0, %s414
      %s417 = sphi 0, %s416
      %s431 = sphi 0, %s417
      %s435 = sphi 0, %s435
      %s437 = sphi 0, %s435
      %s438 = sphi 0, %s437
      %s452 = sphi 0, %s438
      %s456 = sphi 0, %s456
      %s458 = sphi 0, %s456
      %s459 = sphi 0, %s458
      %s473 = sphi 0, %s459
      %s477 = sphi 0, %s477
      %s479 = sphi 0, %s477
      %s480 = sphi 0, %s479
      %s494 = sphi 0, %s480
      %s498 = sphi 0, %s498
      %s500 = sphi 0, %s498
      %s501 = sphi 0, %s500
      %s515 = sphi 0, %s501
      %s523 = sphi 0, %s525
      %s526 = sphi 0, %s523
      %s527 = sphi 0, %s526
      %s543 = sphi 0, %s527
    $region4: #{tpu_custom_call.1} parent=1 // loop_header_branch
      %44 = sbr.rel (%p42) target = $region8
    $region5: #{tpu_custom_call.1} parent=1 // loop_body
      %s46 = ssub.s32 %s41, 1
      %s47 = ssub.s32 %s41, 2
      %s54 = sadd.s32 1, %s49
      %p55 = scmp.ge.s32.totalorder %s54, 2
      %s56 = scalar_select %p55, 0, %s54
      %s57 = sadd.s32 1, %s48
      %s58 = scalar_select %p55, %s57, %s48
      %p59 = scmp.ge.s32.totalorder %s58, 2
      %s60 = scalar_select %p59, 0, %s58
      %s61 = ssub.s32 %s48, %s60
      %s62 = ssub.s32 %s49, %s56
      %s63 = sor.u32 %s61, %s62
      %p64 = scmp.eq.s32.totalorder %s63, 0
      %s66 = sadd.s32 %s65, 1
      %s67 = scalar_select %p64, %s65, %s66
      %p70 = pneg %p64
      %p71 = scmp.eq.s32.totalorder %s41, 3
      %p72 = por %p70, %p71
      %p73 = scmp.ne.s32.totalorder %s65, %s68
      %p74 = scmp.eq.s32.totalorder %s41, 0
      %p75 = por %p73, %p74
      %p76 = scmp.ne.s32.totalorder %s65, %s68
      %p77 = scmp.eq.s32.totalorder %s46, 3
      %p78 = por %p76, %p77
      %p79 = scmp.ne.s32.totalorder %s68, %s69
      %p80 = scmp.eq.s32.totalorder %s46, 0
      %p81 = por %p79, %p80
      %p82 = scmp.ne.s32.totalorder %s68, %s69
      %p83 = scmp.eq.s32.totalorder %s47, 3
      %p84 = por %p82, %p83
      %p86 = scmp.ne.s32.totalorder %s69, %s85
      %p87 = scmp.eq.s32.totalorder %s47, 0
      %p88 = por %p86, %p87
      %s89 = ssub.s32 %s48, %s60
      %p90 = scmp.eq.s32.totalorder %s89, 0
      %s92 = sadd.s32 %s91, 1
      %s93 = scalar_select %p90, %s91, %s92
      %p96 = pneg %p90
      %p97 = scmp.eq.s32.totalorder %s41, 3
      %p98 = por %p96, %p97
      %p99 = scmp.ne.s32.totalorder %s91, %s94
      %p100 = scmp.eq.s32.totalorder %s41, 0
      %p101 = por %p99, %p100
      %p102 = scmp.ne.s32.totalorder %s91, %s94
      %p103 = scmp.eq.s32.totalorder %s46, 3
      %p104 = por %p102, %p103
      %p105 = scmp.ne.s32.totalorder %s94, %s95
      %p106 = scmp.eq.s32.totalorder %s46, 0
      %p107 = por %p105, %p106
      %p108 = scmp.ne.s32.totalorder %s94, %s95
      %p109 = scmp.eq.s32.totalorder %s47, 3
      %p110 = por %p108, %p109
      %p112 = scmp.ne.s32.totalorder %s95, %s111
      %p113 = scmp.eq.s32.totalorder %s47, 0
      %p114 = por %p112, %p113
      %s115 = ssub.s32 %s48, %s60
      %p116 = scmp.eq.s32.totalorder %s115, 0
      %s118 = sadd.s32 %s117, 1
      %s119 = scalar_select %p116, %s117, %s118
      %p122 = pneg %p116
      %p123 = scmp.eq.s32.totalorder %s41, 3
      %p124 = por %p122, %p123
      %p125 = scmp.ne.s32.totalorder %s117, %s120
      %p126 = scmp.eq.s32.totalorder %s41, 0
      %p127 = por %p125, %p126
      %p128 = scmp.ne.s32.totalorder %s117, %s120
      %p129 = scmp.eq.s32.totalorder %s46, 3
      %p130 = por %p128, %p129
      %p131 = scmp.ne.s32.totalorder %s120, %s121
      %p132 = scmp.eq.s32.totalorder %s46, 0
      %p133 = por %p131, %p132
      %p134 = scmp.ne.s32.totalorder %s120, %s121
      %p135 = scmp.eq.s32.totalorder %s47, 3
      %p136 = por %p134, %p135
      %p138 = scmp.ne.s32.totalorder %s121, %s137
      %p139 = scmp.eq.s32.totalorder %s47, 0
      %p140 = por %p138, %p139
      %s142 = sadd.s32 %s141, 1
      %p145 = scmp.eq.s32.totalorder %s41, 3
      %p146 = scmp.ne.s32.totalorder %s141, %s143
      %p147 = scmp.eq.s32.totalorder %s41, 0
      %p148 = por %p146, %p147
      %p149 = scmp.ne.s32.totalorder %s141, %s143
      %p150 = scmp.eq.s32.totalorder %s46, 3
      %p151 = por %p149, %p150
      %p152 = scmp.ne.s32.totalorder %s143, %s144
      %p153 = scmp.eq.s32.totalorder %s46, 0
      %p154 = por %p152, %p153
      %p155 = scmp.ne.s32.totalorder %s143, %s144
      %p156 = scmp.eq.s32.totalorder %s47, 3
      %p157 = por %p155, %p156
      %p159 = scmp.ne.s32.totalorder %s144, %s158
      %p160 = scmp.eq.s32.totalorder %s47, 0
      %p161 = por %p159, %p160
      %s163 = sadd.s32 %s162, 1
      %p166 = scmp.eq.s32.totalorder %s41, 3
      %p167 = scmp.ne.s32.totalorder %s162, %s164
      %p168 = scmp.eq.s32.totalorder %s41, 0
      %p169 = por %p167, %p168
      %p170 = scmp.ne.s32.totalorder %s162, %s164
      %p171 = scmp.eq.s32.totalorder %s46, 3
      %p172 = por %p170, %p171
      %p173 = scmp.ne.s32.totalorder %s164, %s165
      %p174 = scmp.eq.s32.totalorder %s46, 0
      %p175 = por %p173, %p174
      %p176 = scmp.ne.s32.totalorder %s164, %s165
      %p177 = scmp.eq.s32.totalorder %s47, 3
      %p178 = por %p176, %p177
      %p180 = scmp.ne.s32.totalorder %s165, %s179
      %p181 = scmp.eq.s32.totalorder %s47, 0
      %p182 = por %p180, %p181
      %s184 = sadd.s32 %s183, 1
      %p187 = scmp.eq.s32.totalorder %s41, 3
      %p188 = scmp.ne.s32.totalorder %s183, %s185
      %p189 = scmp.eq.s32.totalorder %s41, 0
      %p190 = por %p188, %p189
      %p191 = scmp.ne.s32.totalorder %s183, %s185
      %p192 = scmp.eq.s32.totalorder %s46, 3
      %p193 = por %p191, %p192
      %p194 = scmp.ne.s32.totalorder %s185, %s186
      %p195 = scmp.eq.s32.totalorder %s46, 0
      %p196 = por %p194, %p195
      %p197 = scmp.ne.s32.totalorder %s185, %s186
      %p198 = scmp.eq.s32.totalorder %s47, 3
      %p199 = por %p197, %p198
      %p201 = scmp.ne.s32.totalorder %s186, %s200
      %p202 = scmp.eq.s32.totalorder %s47, 0
      %p203 = por %p201, %p202
      %s205 = sadd.s32 %s204, 1
      %p208 = scmp.eq.s32.totalorder %s41, 3
      %p209 = scmp.ne.s32.totalorder %s204, %s206
      %p210 = scmp.eq.s32.totalorder %s41, 0
      %p211 = por %p209, %p210
      %p212 = scmp.ne.s32.totalorder %s204, %s206
      %p213 = scmp.eq.s32.totalorder %s46, 3
      %p214 = por %p212, %p213
      %p215 = scmp.ne.s32.totalorder %s206, %s207
      %p216 = scmp.eq.s32.totalorder %s46, 0
      %p217 = por %p215, %p216
      %p218 = scmp.ne.s32.totalorder %s206, %s207
      %p219 = scmp.eq.s32.totalorder %s47, 3
      %p220 = por %p218, %p219
      %p222 = scmp.ne.s32.totalorder %s207, %s221
      %p223 = scmp.eq.s32.totalorder %s47, 0
      %p224 = por %p222, %p223
      %s226 = sadd.s32 %s225, 1
      %p229 = scmp.eq.s32.totalorder %s41, 3
      %p230 = scmp.ne.s32.totalorder %s225, %s227
      %p231 = scmp.eq.s32.totalorder %s41, 0
      %p232 = por %p230, %p231
      %p233 = scmp.ne.s32.totalorder %s225, %s227
      %p234 = scmp.eq.s32.totalorder %s46, 3
      %p235 = por %p233, %p234
      %p236 = scmp.ne.s32.totalorder %s227, %s228
      %p237 = scmp.eq.s32.totalorder %s46, 0
      %p238 = por %p236, %p237
      %p239 = scmp.ne.s32.totalorder %s227, %s228
      %p240 = scmp.eq.s32.totalorder %s47, 3
      %p241 = por %p239, %p240
      %p243 = scmp.ne.s32.totalorder %s228, %s242
      %p244 = scmp.eq.s32.totalorder %s47, 0
      %p245 = por %p243, %p244
      %s247 = sadd.s32 %s246, 1
      %p250 = scmp.eq.s32.totalorder %s41, 3
      %p251 = scmp.ne.s32.totalorder %s246, %s248
      %p252 = scmp.eq.s32.totalorder %s41, 0
      %p253 = por %p251, %p252
      %p254 = scmp.ne.s32.totalorder %s246, %s248
      %p255 = scmp.eq.s32.totalorder %s46, 3
      %p256 = por %p254, %p255
      %p257 = scmp.ne.s32.totalorder %s248, %s249
      %p258 = scmp.eq.s32.totalorder %s46, 0
      %p259 = por %p257, %p258
      %p260 = scmp.ne.s32.totalorder %s248, %s249
      %p261 = scmp.eq.s32.totalorder %s47, 3
      %p262 = por %p260, %p261
      %p264 = scmp.ne.s32.totalorder %s249, %s263
      %p265 = scmp.eq.s32.totalorder %s47, 0
      %p266 = por %p264, %p265
      %s268 = sadd.s32 %s267, 1
      %p271 = scmp.eq.s32.totalorder %s41, 3
      %p272 = scmp.ne.s32.totalorder %s267, %s269
      %p273 = scmp.eq.s32.totalorder %s41, 0
      %p274 = por %p272, %p273
      %p275 = scmp.ne.s32.totalorder %s267, %s269
      %p276 = scmp.eq.s32.totalorder %s46, 3
      %p277 = por %p275, %p276
      %p278 = scmp.ne.s32.totalorder %s269, %s270
      %p279 = scmp.eq.s32.totalorder %s46, 0
      %p280 = por %p278, %p279
      %p281 = scmp.ne.s32.totalorder %s269, %s270
      %p282 = scmp.eq.s32.totalorder %s47, 3
      %p283 = por %p281, %p282
      %p285 = scmp.ne.s32.totalorder %s270, %s284
      %p286 = scmp.eq.s32.totalorder %s47, 0
      %p287 = por %p285, %p286
      %s289 = sadd.s32 %s288, 1
      %p292 = scmp.eq.s32.totalorder %s41, 3
      %p293 = scmp.ne.s32.totalorder %s288, %s290
      %p294 = scmp.eq.s32.totalorder %s41, 0
      %p295 = por %p293, %p294
      %p296 = scmp.ne.s32.totalorder %s288, %s290
      %p297 = scmp.eq.s32.totalorder %s46, 3
      %p298 = por %p296, %p297
      %p299 = scmp.ne.s32.totalorder %s290, %s291
      %p300 = scmp.eq.s32.totalorder %s46, 0
      %p301 = por %p299, %p300
      %p302 = scmp.ne.s32.totalorder %s290, %s291
      %p303 = scmp.eq.s32.totalorder %s47, 3
      %p304 = por %p302, %p303
      %p306 = scmp.ne.s32.totalorder %s291, %s305
      %p307 = scmp.eq.s32.totalorder %s47, 0
      %p308 = por %p306, %p307
      %s310 = sadd.s32 %s309, 1
      %p313 = scmp.eq.s32.totalorder %s41, 3
      %p314 = scmp.ne.s32.totalorder %s309, %s311
      %p315 = scmp.eq.s32.totalorder %s41, 0
      %p316 = por %p314, %p315
      %p317 = scmp.ne.s32.totalorder %s309, %s311
      %p318 = scmp.eq.s32.totalorder %s46, 3
      %p319 = por %p317, %p318
      %p320 = scmp.ne.s32.totalorder %s311, %s312
      %p321 = scmp.eq.s32.totalorder %s46, 0
      %p322 = por %p320, %p321
      %p323 = scmp.ne.s32.totalorder %s311, %s312
      %p324 = scmp.eq.s32.totalorder %s47, 3
      %p325 = por %p323, %p324
      %p327 = scmp.ne.s32.totalorder %s312, %s326
      %p328 = scmp.eq.s32.totalorder %s47, 0
      %p329 = por %p327, %p328
      %s331 = sadd.s32 %s330, 1
      %p334 = scmp.eq.s32.totalorder %s41, 3
      %p335 = scmp.ne.s32.totalorder %s330, %s332
      %p336 = scmp.eq.s32.totalorder %s41, 0
      %p337 = por %p335, %p336
      %p338 = scmp.ne.s32.totalorder %s330, %s332
      %p339 = scmp.eq.s32.totalorder %s46, 3
      %p340 = por %p338, %p339
      %p341 = scmp.ne.s32.totalorder %s332, %s333
      %p342 = scmp.eq.s32.totalorder %s46, 0
      %p343 = por %p341, %p342
      %p344 = scmp.ne.s32.totalorder %s332, %s333
      %p345 = scmp.eq.s32.totalorder %s47, 3
      %p346 = por %p344, %p345
      %p348 = scmp.ne.s32.totalorder %s333, %s347
      %p349 = scmp.eq.s32.totalorder %s47, 0
      %p350 = por %p348, %p349
      %s352 = sadd.s32 %s351, 1
      %p355 = scmp.eq.s32.totalorder %s41, 3
      %p356 = scmp.ne.s32.totalorder %s351, %s353
      %p357 = scmp.eq.s32.totalorder %s41, 0
      %p358 = por %p356, %p357
      %p359 = scmp.ne.s32.totalorder %s351, %s353
      %p360 = scmp.eq.s32.totalorder %s46, 3
      %p361 = por %p359, %p360
      %p362 = scmp.ne.s32.totalorder %s353, %s354
      %p363 = scmp.eq.s32.totalorder %s46, 0
      %p364 = por %p362, %p363
      %p365 = scmp.ne.s32.totalorder %s353, %s354
      %p366 = scmp.eq.s32.totalorder %s47, 3
      %p367 = por %p365, %p366
      %p369 = scmp.ne.s32.totalorder %s354, %s368
      %p370 = scmp.eq.s32.totalorder %s47, 0
      %p371 = por %p369, %p370
      %s373 = sadd.s32 %s372, 1
      %p376 = scmp.eq.s32.totalorder %s41, 3
      %p377 = scmp.ne.s32.totalorder %s372, %s374
      %p378 = scmp.eq.s32.totalorder %s41, 0
      %p379 = por %p377, %p378
      %p380 = scmp.ne.s32.totalorder %s372, %s374
      %p381 = scmp.eq.s32.totalorder %s46, 3
      %p382 = por %p380, %p381
      %p383 = scmp.ne.s32.totalorder %s374, %s375
      %p384 = scmp.eq.s32.totalorder %s46, 0
      %p385 = por %p383, %p384
      %p386 = scmp.ne.s32.totalorder %s374, %s375
      %p387 = scmp.eq.s32.totalorder %s47, 3
      %p388 = por %p386, %p387
      %p390 = scmp.ne.s32.totalorder %s375, %s389
      %p391 = scmp.eq.s32.totalorder %s47, 0
      %p392 = por %p390, %p391
      %s394 = sadd.s32 %s393, 1
      %p397 = scmp.eq.s32.totalorder %s41, 3
      %p398 = scmp.ne.s32.totalorder %s393, %s395
      %p399 = scmp.eq.s32.totalorder %s41, 0
      %p400 = por %p398, %p399
      %p401 = scmp.ne.s32.totalorder %s393, %s395
      %p402 = scmp.eq.s32.totalorder %s46, 3
      %p403 = por %p401, %p402
      %p404 = scmp.ne.s32.totalorder %s395, %s396
      %p405 = scmp.eq.s32.totalorder %s46, 0
      %p406 = por %p404, %p405
      %p407 = scmp.ne.s32.totalorder %s395, %s396
      %p408 = scmp.eq.s32.totalorder %s47, 3
      %p409 = por %p407, %p408
      %p411 = scmp.ne.s32.totalorder %s396, %s410
      %p412 = scmp.eq.s32.totalorder %s47, 0
      %p413 = por %p411, %p412
      %s415 = sadd.s32 %s414, 1
      %p418 = scmp.eq.s32.totalorder %s41, 3
      %p419 = scmp.ne.s32.totalorder %s414, %s416
      %p420 = scmp.eq.s32.totalorder %s41, 0
      %p421 = por %p419, %p420
      %p422 = scmp.ne.s32.totalorder %s414, %s416
      %p423 = scmp.eq.s32.totalorder %s46, 3
      %p424 = por %p422, %p423
      %p425 = scmp.ne.s32.totalorder %s416, %s417
      %p426 = scmp.eq.s32.totalorder %s46, 0
      %p427 = por %p425, %p426
      %p428 = scmp.ne.s32.totalorder %s416, %s417
      %p429 = scmp.eq.s32.totalorder %s47, 3
      %p430 = por %p428, %p429
      %p432 = scmp.ne.s32.totalorder %s417, %s431
      %p433 = scmp.eq.s32.totalorder %s47, 0
      %p434 = por %p432, %p433
      %s436 = sadd.s32 %s435, 1
      %p439 = scmp.eq.s32.totalorder %s41, 3
      %p440 = scmp.ne.s32.totalorder %s435, %s437
      %p441 = scmp.eq.s32.totalorder %s41, 0
      %p442 = por %p440, %p441
      %p443 = scmp.ne.s32.totalorder %s435, %s437
      %p444 = scmp.eq.s32.totalorder %s46, 3
      %p445 = por %p443, %p444
      %p446 = scmp.ne.s32.totalorder %s437, %s438
      %p447 = scmp.eq.s32.totalorder %s46, 0
      %p448 = por %p446, %p447
      %p449 = scmp.ne.s32.totalorder %s437, %s438
      %p450 = scmp.eq.s32.totalorder %s47, 3
      %p451 = por %p449, %p450
      %p453 = scmp.ne.s32.totalorder %s438, %s452
      %p454 = scmp.eq.s32.totalorder %s47, 0
      %p455 = por %p453, %p454
      %s457 = sadd.s32 %s456, 1
      %p460 = scmp.eq.s32.totalorder %s41, 3
      %p461 = scmp.ne.s32.totalorder %s456, %s458
      %p462 = scmp.eq.s32.totalorder %s41, 0
      %p463 = por %p461, %p462
      %p464 = scmp.ne.s32.totalorder %s456, %s458
      %p465 = scmp.eq.s32.totalorder %s46, 3
      %p466 = por %p464, %p465
      %p467 = scmp.ne.s32.totalorder %s458, %s459
      %p468 = scmp.eq.s32.totalorder %s46, 0
      %p469 = por %p467, %p468
      %p470 = scmp.ne.s32.totalorder %s458, %s459
      %p471 = scmp.eq.s32.totalorder %s47, 3
      %p472 = por %p470, %p471
      %p474 = scmp.ne.s32.totalorder %s459, %s473
      %p475 = scmp.eq.s32.totalorder %s47, 0
      %p476 = por %p474, %p475
      %s478 = sadd.s32 %s477, 1
      %p481 = scmp.eq.s32.totalorder %s41, 3
      %p482 = scmp.ne.s32.totalorder %s477, %s479
      %p483 = scmp.eq.s32.totalorder %s41, 0
      %p484 = por %p482, %p483
      %p485 = scmp.ne.s32.totalorder %s477, %s479
      %p486 = scmp.eq.s32.totalorder %s46, 3
      %p487 = por %p485, %p486
      %p488 = scmp.ne.s32.totalorder %s479, %s480
      %p489 = scmp.eq.s32.totalorder %s46, 0
      %p490 = por %p488, %p489
      %p491 = scmp.ne.s32.totalorder %s479, %s480
      %p492 = scmp.eq.s32.totalorder %s47, 3
      %p493 = por %p491, %p492
      %p495 = scmp.ne.s32.totalorder %s480, %s494
      %p496 = scmp.eq.s32.totalorder %s47, 0
      %p497 = por %p495, %p496
      %s499 = sadd.s32 %s498, 1
      %p502 = scmp.eq.s32.totalorder %s41, 3
      %p503 = scmp.ne.s32.totalorder %s498, %s500
      %p504 = scmp.eq.s32.totalorder %s41, 0
      %p505 = por %p503, %p504
      %p506 = scmp.ne.s32.totalorder %s498, %s500
      %p507 = scmp.eq.s32.totalorder %s46, 3
      %p508 = por %p506, %p507
      %p509 = scmp.ne.s32.totalorder %s500, %s501
      %p510 = scmp.eq.s32.totalorder %s46, 0
      %p511 = por %p509, %p510
      %p512 = scmp.ne.s32.totalorder %s500, %s501
      %p513 = scmp.eq.s32.totalorder %s47, 3
      %p514 = por %p512, %p513
      %p516 = scmp.ne.s32.totalorder %s501, %s515
      %p517 = scmp.eq.s32.totalorder %s47, 0
      %p518 = por %p516, %p517
      %s519 = ssub.s32 %s48, %s60
      %s520 = ssub.s32 %s49, %s56
      %s521 = sor.u32 %s519, %s520
      %p522 = scmp.eq.s32.totalorder %s521, 0
      %s524 = sadd.s32 %s523, 1
      %s525 = scalar_select %p522, %s523, %s524
      %p528 = pneg %p522
      %p529 = scmp.eq.s32.totalorder %s41, 3
      %p530 = por %p528, %p529
      %p531 = scmp.ne.s32.totalorder %s523, %s526
      %p532 = scmp.eq.s32.totalorder %s41, 0
      %p533 = por %p531, %p532
      %p534 = scmp.ne.s32.totalorder %s523, %s526
      %p535 = scmp.eq.s32.totalorder %s46, 3
      %p536 = por %p534, %p535
      %p537 = scmp.ne.s32.totalorder %s526, %s527
      %p538 = scmp.eq.s32.totalorder %s46, 0
      %p539 = por %p537, %p538
      %p540 = scmp.ne.s32.totalorder %s526, %s527
      %p541 = scmp.eq.s32.totalorder %s47, 3
      %p542 = por %p540, %p541
      %p544 = scmp.ne.s32.totalorder %s527, %s543
      %p545 = scmp.eq.s32.totalorder %s47, 0
      %p546 = por %p544, %p545
      %p547 = scmp.le.s32.totalorder 1, %s41
      %p548 = scmp.lt.s32.totalorder %s41, 5
      %p549 = pnand %p547, %p548
      %p550 = pneg %p549
      // Predicated region
      $region9: #{tpu_custom_call.1} parent=5 // pred_check
        _
      $region10: #{tpu_custom_call.1} parent=5 // pred_check_branch
        %552 = sbr.rel (%p549) target = $region12
      $region11: #{tpu_custom_call.1} parent=5 // pred_region
        %s553 = ssub.s32 %s41, 1
        // Predicated region
        $region13: #{tpu_custom_call.1} parent=11 // pred_check
          %p554 = pneg %p154
        $region14: #{tpu_custom_call.1} parent=11 // pred_check_branch
          %556 = sbr.rel (%p554) target = $region16
        $region15: #{tpu_custom_call.1} parent=11 // pred_region
          %558 = vsyncadd [#allocation9], 0
          %s559 = sshll.u32 %s3, 4
          %s560 = int_to_ptr.hbm [resolvable:$true] %s559
          %s561 = sshll.u32 [#allocation8], 4
          %s562 = int_to_ptr.vmem [resolvable:$true] %s561
          %567 = dma.hbm_to_vmem [thread:$0]  %s560, 2048, %s562, [#allocation9], 128, 128, 8
        $region16: #{tpu_custom_call.1} parent=11 // pred_fallthru
          _
        // Predicated region
        $region17: #{tpu_custom_call.1} parent=11 // pred_check
          %p568 = pneg %p175
        $region18: #{tpu_custom_call.1} parent=11 // pred_check_branch
          %570 = sbr.rel (%p568) target = $region20
        $region19: #{tpu_custom_call.1} parent=11 // pred_region
          %572 = vsyncadd [#allocation9], 0
          %s573 = sshll.u32 %s4, 4
          %s574 = int_to_ptr.hbm [resolvable:$true] %s573
          %s575 = sshll.u32 [#allocation10], 4
          %s576 = int_to_ptr.vmem [resolvable:$true] %s575
          %581 = dma.hbm_to_vmem [thread:$0]  %s574, 2048, %s576, [#allocation9], 128, 128, 8
        $region20: #{tpu_custom_call.1} parent=11 // pred_fallthru
          _
        // Predicated region
        $region21: #{tpu_custom_call.1} parent=11 // pred_check
          %p582 = pneg %p196
        $region22: #{tpu_custom_call.1} parent=11 // pred_check_branch
          %584 = sbr.rel (%p582) target = $region24
        $region23: #{tpu_custom_call.1} parent=11 // pred_region
          %586 = vsyncadd [#allocation12], 0
          %s587 = sshll.u32 %s5, 4
          %s588 = int_to_ptr.hbm [resolvable:$true] %s587
          %s589 = sshll.u32 [#allocation11], 4
          %s590 = int_to_ptr.vmem [resolvable:$true] %s589
          %595 = dma.hbm_to_vmem [thread:$0]  %s588, 2048, %s590, [#allocation12], 128, 128, 8
        $region24: #{tpu_custom_call.1} parent=11 // pred_fallthru
          _
        // Predicated region
        $region25: #{tpu_custom_call.1} parent=11 // pred_check
          %p596 = pneg %p217
        $region26: #{tpu_custom_call.1} parent=11 // pred_check_branch
          %598 = sbr.rel (%p596) target = $region28
        $region27: #{tpu_custom_call.1} parent=11 // pred_region
          %600 = vsyncadd [#allocation12], 0
          %s601 = sshll.u32 %s6, 4
          %s602 = int_to_ptr.hbm [resolvable:$true] %s601
          %s603 = sshll.u32 [#allocation13], 4
          %s604 = int_to_ptr.vmem [resolvable:$true] %s603
          %609 = dma.hbm_to_vmem [thread:$0]  %s602, 2048, %s604, [#allocation12], 128, 128, 8
        $region28: #{tpu_custom_call.1} parent=11 // pred_fallthru
          _
        // Predicated region
        $region29: #{tpu_custom_call.1} parent=11 // pred_check
          %p610 = pneg %p238
        $region30: #{tpu_custom_call.1} parent=11 // pred_check_branch
          %612 = sbr.rel (%p610) target = $region32
        $region31: #{tpu_custom_call.1} parent=11 // pred_region
          %614 = vsyncadd [#allocation15], 0
          %s615 = sshll.u32 %s7, 4
          %s616 = int_to_ptr.hbm [resolvable:$true] %s615
          %s617 = sshll.u32 [#allocation14], 4
          %s618 = int_to_ptr.vmem [resolvable:$true] %s617
          %623 = dma.hbm_to_vmem [thread:$0]  %s616, 2048, %s618, [#allocation15], 128, 128, 8
        $region32: #{tpu_custom_call.1} parent=11 // pred_fallthru
          _
        // Predicated region
        $region33: #{tpu_custom_call.1} parent=11 // pred_check
          %p624 = pneg %p259
        $region34: #{tpu_custom_call.1} parent=11 // pred_check_branch
          %626 = sbr.rel (%p624) target = $region36
        $region35: #{tpu_custom_call.1} parent=11 // pred_region
          %628 = vsyncadd [#allocation15], 0
          %s629 = sshll.u32 %s8, 4
          %s630 = int_to_ptr.hbm [resolvable:$true] %s629
          %s631 = sshll.u32 [#allocation16], 4
          %s632 = int_to_ptr.vmem [resolvable:$true] %s631
          %637 = dma.hbm_to_vmem [thread:$0]  %s630, 2048, %s632, [#allocation15], 128, 128, 8
        $region36: #{tpu_custom_call.1} parent=11 // pred_fallthru
          _
        // Predicated region
        $region37: #{tpu_custom_call.1} parent=11 // pred_check
          %p638 = pneg %p280
        $region38: #{tpu_custom_call.1} parent=11 // pred_check_branch
          %640 = sbr.rel (%p638) target = $region40
        $region39: #{tpu_custom_call.1} parent=11 // pred_region
          %642 = vsyncadd [#allocation18], 0
          %s643 = sshll.u32 %s9, 4
          %s644 = int_to_ptr.hbm [resolvable:$true] %s643
          %s645 = sshll.u32 [#allocation17], 4
          %s646 = int_to_ptr.vmem [resolvable:$true] %s645
          %651 = dma.hbm_to_vmem [thread:$0]  %s644, 2048, %s646, [#allocation18], 128, 128, 8
        $region40: #{tpu_custom_call.1} parent=11 // pred_fallthru
          _
        // Predicated region
        $region41: #{tpu_custom_call.1} parent=11 // pred_check
          %p652 = pneg %p301
        $region42: #{tpu_custom_call.1} parent=11 // pred_check_branch
          %654 = sbr.rel (%p652) target = $region44
        $region43: #{tpu_custom_call.1} parent=11 // pred_region
          %656 = vsyncadd [#allocation18], 0
          %s657 = sshll.u32 %s10, 4
          %s658 = int_to_ptr.hbm [resolvable:$true] %s657
          %s659 = sshll.u32 [#allocation19], 4
          %s660 = int_to_ptr.vmem [resolvable:$true] %s659
          %665 = dma.hbm_to_vmem [thread:$0]  %s658, 2048, %s660, [#allocation18], 128, 128, 8
        $region44: #{tpu_custom_call.1} parent=11 // pred_fallthru
          _
        // Predicated region
        $region45: #{tpu_custom_call.1} parent=11 // pred_check
          %p666 = pneg %p322
        $region46: #{tpu_custom_call.1} parent=11 // pred_check_branch
          %668 = sbr.rel (%p666) target = $region48
        $region47: #{tpu_custom_call.1} parent=11 // pred_region
          _
        $region48: #{tpu_custom_call.1} parent=11 // pred_fallthru
          _
        // Predicated region
        $region49: #{tpu_custom_call.1} parent=11 // pred_check
          %p669 = pneg %p343
        $region50: #{tpu_custom_call.1} parent=11 // pred_check_branch
          %671 = sbr.rel (%p669) target = $region52
        $region51: #{tpu_custom_call.1} parent=11 // pred_region
          _
        $region52: #{tpu_custom_call.1} parent=11 // pred_fallthru
          _
        // Predicated region
        $region53: #{tpu_custom_call.1} parent=11 // pred_check
          %p672 = pneg %p364
        $region54: #{tpu_custom_call.1} parent=11 // pred_check_branch
          %674 = sbr.rel (%p672) target = $region56
        $region55: #{tpu_custom_call.1} parent=11 // pred_region
          _
        $region56: #{tpu_custom_call.1} parent=11 // pred_fallthru
          _
        // Predicated region
        $region57: #{tpu_custom_call.1} parent=11 // pred_check
          %p675 = pneg %p385
        $region58: #{tpu_custom_call.1} parent=11 // pred_check_branch
          %677 = sbr.rel (%p675) target = $region60
        $region59: #{tpu_custom_call.1} parent=11 // pred_region
          _
        $region60: #{tpu_custom_call.1} parent=11 // pred_fallthru
          _
        // Predicated region
        $region61: #{tpu_custom_call.1} parent=11 // pred_check
          %p678 = pneg %p406
        $region62: #{tpu_custom_call.1} parent=11 // pred_check_branch
          %680 = sbr.rel (%p678) target = $region64
        $region63: #{tpu_custom_call.1} parent=11 // pred_region
          _
        $region64: #{tpu_custom_call.1} parent=11 // pred_fallthru
          _
        // Predicated region
        $region65: #{tpu_custom_call.1} parent=11 // pred_check
          %p681 = pneg %p427
        $region66: #{tpu_custom_call.1} parent=11 // pred_check_branch
          %683 = sbr.rel (%p681) target = $region68
        $region67: #{tpu_custom_call.1} parent=11 // pred_region
          _
        $region68: #{tpu_custom_call.1} parent=11 // pred_fallthru
          _
        // Predicated region
        $region69: #{tpu_custom_call.1} parent=11 // pred_check
          %p684 = pneg %p448
        $region70: #{tpu_custom_call.1} parent=11 // pred_check_branch
          %686 = sbr.rel (%p684) target = $region72
        $region71: #{tpu_custom_call.1} parent=11 // pred_region
          %688 = vsyncadd [#allocation21], 0
          %s689 = sshll.u32 %s17, 4
          %s690 = int_to_ptr.hbm [resolvable:$true] %s689
          %s691 = sshll.u32 [#allocation20], 4
          %s692 = int_to_ptr.vmem [resolvable:$true] %s691
          %697 = dma.hbm_to_vmem [thread:$0]  %s690, 2048, %s692, [#allocation21], 128, 128, 8
        $region72: #{tpu_custom_call.1} parent=11 // pred_fallthru
          _
        // Predicated region
        $region73: #{tpu_custom_call.1} parent=11 // pred_check
          %p698 = pneg %p469
        $region74: #{tpu_custom_call.1} parent=11 // pred_check_branch
          %700 = sbr.rel (%p698) target = $region76
        $region75: #{tpu_custom_call.1} parent=11 // pred_region
          _
        $region76: #{tpu_custom_call.1} parent=11 // pred_fallthru
          _
        // Predicated region
        $region77: #{tpu_custom_call.1} parent=11 // pred_check
          %p701 = pneg %p490
        $region78: #{tpu_custom_call.1} parent=11 // pred_check_branch
          %703 = sbr.rel (%p701) target = $region80
        $region79: #{tpu_custom_call.1} parent=11 // pred_region
          %705 = vsyncadd [#allocation21], 0
          %s706 = sshll.u32 %s19, 4
          %s707 = int_to_ptr.hbm [resolvable:$true] %s706
          %s708 = sshll.u32 [#allocation22], 4
          %s709 = int_to_ptr.vmem [resolvable:$true] %s708
          %714 = dma.hbm_to_vmem [thread:$0]  %s707, 2048, %s709, [#allocation21], 128, 128, 8
        $region80: #{tpu_custom_call.1} parent=11 // pred_fallthru
          _
        // Predicated region
        $region81: #{tpu_custom_call.1} parent=11 // pred_check
          %p715 = pneg %p511
        $region82: #{tpu_custom_call.1} parent=11 // pred_check_branch
          %717 = sbr.rel (%p715) target = $region84
        $region83: #{tpu_custom_call.1} parent=11 // pred_region
          _
        $region84: #{tpu_custom_call.1} parent=11 // pred_fallthru
          _
      $region12: #{tpu_custom_call.1} parent=5 // pred_fallthru
        _
      %p718 = scmp.lt.s32.totalorder %s41, 4
      // Predicated region
      $region85: #{tpu_custom_call.1} parent=5 // pred_check
        %p719 = pneg %p718
      $region86: #{tpu_custom_call.1} parent=5 // pred_check_branch
        %721 = sbr.rel (%p719) target = $region88
      $region87: #{tpu_custom_call.1} parent=5 // pred_region
        // Predicated region
        $region89: #{tpu_custom_call.1} parent=87 // pred_check
          %p722 = pneg %p75
        $region90: #{tpu_custom_call.1} parent=87 // pred_check_branch
          %724 = sbr.rel (%p722) target = $region92
        $region91: #{tpu_custom_call.1} parent=87 // pred_region
          %s725 = sand.u32 %s65, 1
          %s726 = scalar_lea.sflag [#allocation3], %s725
          %s727 = sand.u32 %s65, 1
          %s728 = smul.addr %s727, 8
          %s729 = scalar_lea.vmem [#allocation2], %s728
          %731 = vsyncadd %s726, 0
          %s732 = smul.addr %s48, 2
          %s733 = sadd.s32 %s49, %s732
          %s734 = smul.addr %s733, 8
          %s735 = scalar_lea.hbm %s0, %s734
          %s737 = sshll.u32 %s735, 4
          %s738 = int_to_ptr.hbm [resolvable:$true] %s737
          %s739 = sshll.u32 %s729, 4
          %s740 = int_to_ptr.vmem [resolvable:$true] %s739
          %742 = dma.hbm_to_vmem [thread:$0]  %s738, 128, %s740, %s726
        $region92: #{tpu_custom_call.1} parent=87 // pred_fallthru
          _
        // Predicated region
        $region93: #{tpu_custom_call.1} parent=87 // pred_check
          %p743 = pneg %p101
        $region94: #{tpu_custom_call.1} parent=87 // pred_check_branch
          %745 = sbr.rel (%p743) target = $region96
        $region95: #{tpu_custom_call.1} parent=87 // pred_region
          %s746 = sand.u32 %s41, 1
          %s747 = scalar_lea.sflag [#allocation6], %s746
          %s748 = sand.u32 %s91, 1
          %s749 = smul.addr %s748, 16
          %s750 = scalar_lea.vmem [#allocation5], %s749
          %752 = vsyncadd %s747, 0
          %s753 = smul.addr %s48, 2
          %s754 = smul.addr %s753, 8
          %s755 = scalar_lea.hbm %s1, %s754
          %s756 = sshll.u32 %s755, 4
          %s757 = int_to_ptr.hbm [resolvable:$true] %s756
          %s758 = sshll.u32 %s750, 4
          %s759 = int_to_ptr.vmem [resolvable:$true] %s758
          %764 = dma.hbm_to_vmem [thread:$0]  %s757, 256, %s759, %s747, 128, 128, 8
        $region96: #{tpu_custom_call.1} parent=87 // pred_fallthru
          _
        // Predicated region
        $region97: #{tpu_custom_call.1} parent=87 // pred_check
          %p765 = pneg %p127
        $region98: #{tpu_custom_call.1} parent=87 // pred_check_branch
          %767 = sbr.rel (%p765) target = $region100
        $region99: #{tpu_custom_call.1} parent=87 // pred_region
          %s768 = sand.u32 %s41, 1
          %s769 = scalar_lea.sflag [#allocation6], %s768
          %s770 = sand.u32 %s117, 1
          %s771 = smul.addr %s770, 24
          %s772 = scalar_lea.vmem [#allocation7], %s771
          %774 = vsyncadd %s769, 0
          %s775 = smul.addr %s48, 3
          %s776 = smul.addr %s775, 8
          %s777 = scalar_lea.hbm %s2, %s776
          %s778 = sshll.u32 %s777, 4
          %s779 = int_to_ptr.hbm [resolvable:$true] %s778
          %s780 = sshll.u32 %s772, 4
          %s781 = int_to_ptr.vmem [resolvable:$true] %s780
          %786 = dma.hbm_to_vmem [thread:$0]  %s779, 384, %s781, %s769, 128, 128, 8
        $region100: #{tpu_custom_call.1} parent=87 // pred_fallthru
          _
      $region88: #{tpu_custom_call.1} parent=5 // pred_fallthru
        _
      %p787 = scmp.le.s32.totalorder 1, %s41
      %p788 = scmp.lt.s32.totalorder %s41, 5
      %p789 = pnand %p787, %p788
      %p790 = pneg %p789
      // Predicated region
      $region101: #{tpu_custom_call.1} parent=5 // pred_check
        _
      $region102: #{tpu_custom_call.1} parent=5 // pred_check_branch
        %792 = sbr.rel (%p789) target = $region104
      $region103: #{tpu_custom_call.1} parent=5 // pred_region
        %s793 = ssub.s32 %s41, 1
        %s794 = sand.u32 %s68, 1
        %s795 = scalar_lea.sflag [#allocation3], %s794
        %s796 = sand.u32 %s68, 1
        %s797 = smul.addr %s796, 8
        %s798 = scalar_lea.vmem [#allocation2], %s797
        // Predicated region
        $region105: #{tpu_custom_call.1} parent=103 // pred_check
          %p799 = pneg %p81
        $region106: #{tpu_custom_call.1} parent=103 // pred_check_branch
          %801 = sbr.rel (%p799) target = $region108
        $region107: #{tpu_custom_call.1} parent=103 // pred_region
          %803 = dma.done %s795, 128
        $region108: #{tpu_custom_call.1} parent=103 // pred_fallthru
          _
        %s804 = sand.u32 %s46, 1
        %s805 = scalar_lea.sflag [#allocation6], %s804
        %s806 = sand.u32 %s94, 1
        %s807 = smul.addr %s806, 16
        %s808 = scalar_lea.vmem [#allocation5], %s807
        // Predicated region
        $region109: #{tpu_custom_call.1} parent=103 // pred_check
          %p809 = pneg %p107
        $region110: #{tpu_custom_call.1} parent=103 // pred_check_branch
          %811 = sbr.rel (%p809) target = $region112
        $region111: #{tpu_custom_call.1} parent=103 // pred_region
          %813 = dma.done %s805, 256
        $region112: #{tpu_custom_call.1} parent=103 // pred_fallthru
          _
        %s814 = sand.u32 %s46, 1
        %s815 = scalar_lea.sflag [#allocation6], %s814
        %s816 = sand.u32 %s120, 1
        %s817 = smul.addr %s816, 24
        %s818 = scalar_lea.vmem [#allocation7], %s817
        // Predicated region
        $region113: #{tpu_custom_call.1} parent=103 // pred_check
          %p819 = pneg %p133
        $region114: #{tpu_custom_call.1} parent=103 // pred_check_branch
          %821 = sbr.rel (%p819) target = $region116
        $region115: #{tpu_custom_call.1} parent=103 // pred_region
          %823 = dma.done %s815, 384
        $region116: #{tpu_custom_call.1} parent=103 // pred_fallthru
          _
        // Predicated region
        $region117: #{tpu_custom_call.1} parent=103 // pred_check
          %p824 = pneg %p154
        $region118: #{tpu_custom_call.1} parent=103 // pred_check_branch
          %826 = sbr.rel (%p824) target = $region120
        $region119: #{tpu_custom_call.1} parent=103 // pred_region
          %828 = dma.done [#allocation9], 2048
        $region120: #{tpu_custom_call.1} parent=103 // pred_fallthru
          _
        // Predicated region
        $region121: #{tpu_custom_call.1} parent=103 // pred_check
          %p829 = pneg %p175
        $region122: #{tpu_custom_call.1} parent=103 // pred_check_branch
          %831 = sbr.rel (%p829) target = $region124
        $region123: #{tpu_custom_call.1} parent=103 // pred_region
          %833 = dma.done [#allocation9], 2048
        $region124: #{tpu_custom_call.1} parent=103 // pred_fallthru
          _
        // Predicated region
        $region125: #{tpu_custom_call.1} parent=103 // pred_check
          %p834 = pneg %p196
        $region126: #{tpu_custom_call.1} parent=103 // pred_check_branch
          %836 = sbr.rel (%p834) target = $region128
        $region127: #{tpu_custom_call.1} parent=103 // pred_region
          %838 = dma.done [#allocation12], 2048
        $region128: #{tpu_custom_call.1} parent=103 // pred_fallthru
          _
        // Predicated region
        $region129: #{tpu_custom_call.1} parent=103 // pred_check
          %p839 = pneg %p217
        $region130: #{tpu_custom_call.1} parent=103 // pred_check_branch
          %841 = sbr.rel (%p839) target = $region132
        $region131: #{tpu_custom_call.1} parent=103 // pred_region
          %843 = dma.done [#allocation12], 2048
        $region132: #{tpu_custom_call.1} parent=103 // pred_fallthru
          _
        // Predicated region
        $region133: #{tpu_custom_call.1} parent=103 // pred_check
          %p844 = pneg %p238
        $region134: #{tpu_custom_call.1} parent=103 // pred_check_branch
          %846 = sbr.rel (%p844) target = $region136
        $region135: #{tpu_custom_call.1} parent=103 // pred_region
          %848 = dma.done [#allocation15], 2048
        $region136: #{tpu_custom_call.1} parent=103 // pred_fallthru
          _
        // Predicated region
        $region137: #{tpu_custom_call.1} parent=103 // pred_check
          %p849 = pneg %p259
        $region138: #{tpu_custom_call.1} parent=103 // pred_check_branch
          %851 = sbr.rel (%p849) target = $region140
        $region139: #{tpu_custom_call.1} parent=103 // pred_region
          %853 = dma.done [#allocation15], 2048
        $region140: #{tpu_custom_call.1} parent=103 // pred_fallthru
          _
        // Predicated region
        $region141: #{tpu_custom_call.1} parent=103 // pred_check
          %p854 = pneg %p280
        $region142: #{tpu_custom_call.1} parent=103 // pred_check_branch
          %856 = sbr.rel (%p854) target = $region144
        $region143: #{tpu_custom_call.1} parent=103 // pred_region
          %858 = dma.done [#allocation18], 2048
        $region144: #{tpu_custom_call.1} parent=103 // pred_fallthru
          _
        // Predicated region
        $region145: #{tpu_custom_call.1} parent=103 // pred_check
          %p859 = pneg %p301
        $region146: #{tpu_custom_call.1} parent=103 // pred_check_branch
          %861 = sbr.rel (%p859) target = $region148
        $region147: #{tpu_custom_call.1} parent=103 // pred_region
          %863 = dma.done [#allocation18], 2048
        $region148: #{tpu_custom_call.1} parent=103 // pred_fallthru
          _
        // Predicated region
        $region149: #{tpu_custom_call.1} parent=103 // pred_check
          %p864 = pneg %p448
        $region150: #{tpu_custom_call.1} parent=103 // pred_check_branch
          %866 = sbr.rel (%p864) target = $region152
        $region151: #{tpu_custom_call.1} parent=103 // pred_region
          %868 = dma.done [#allocation21], 2048
        $region152: #{tpu_custom_call.1} parent=103 // pred_fallthru
          _
        // Predicated region
        $region153: #{tpu_custom_call.1} parent=103 // pred_check
          %p869 = pneg %p490
        $region154: #{tpu_custom_call.1} parent=103 // pred_check_branch
          %871 = sbr.rel (%p869) target = $region156
        $region155: #{tpu_custom_call.1} parent=103 // pred_region
          %873 = dma.done [#allocation21], 2048
        $region156: #{tpu_custom_call.1} parent=103 // pred_fallthru
          _
        %s874 = sand.u32 %s68, 1
        %s875 = scalar_lea.sflag [#allocation3], %s874
        %s876 = sand.u32 %s68, 1
        %s877 = smul.addr %s876, 8
        %s878 = scalar_lea.vmem [#allocation2], %s877
        %p879 = pneg %p81
        %p880 = pneg %p78
        %s881 = sand.u32 %s46, 1
        %s882 = scalar_lea.sflag [#allocation6], %s881
        %s883 = sand.u32 %s94, 1
        %s884 = smul.addr %s883, 16
        %s885 = scalar_lea.vmem [#allocation5], %s884
        %p886 = pneg %p107
        %p887 = pneg %p104
        %s888 = sand.u32 %s46, 1
        %s889 = scalar_lea.sflag [#allocation6], %s888
        %s890 = sand.u32 %s120, 1
        %s891 = smul.addr %s890, 24
        %s892 = scalar_lea.vmem [#allocation7], %s891
        %p893 = pneg %p133
        %p894 = pneg %p130
        %p895 = pneg %p154
        %p896 = pneg %p151
        %p897 = pneg %p175
        %p898 = pneg %p172
        %p899 = pneg %p196
        %p900 = pneg %p193
        %p901 = pneg %p217
        %p902 = pneg %p214
        %p903 = pneg %p238
        %p904 = pneg %p235
        %p905 = pneg %p259
        %p906 = pneg %p256
        %p907 = pneg %p280
        %p908 = pneg %p277
        %p909 = pneg %p301
        %p910 = pneg %p298
        %p911 = pneg %p322
        %p912 = pneg %p319
        %p913 = pneg %p343
        %p914 = pneg %p340
        %p915 = pneg %p364
        %p916 = pneg %p361
        %p917 = pneg %p385
        %p918 = pneg %p382
        %p919 = pneg %p406
        %p920 = pneg %p403
        %p921 = pneg %p427
        %p922 = pneg %p424
        %p923 = pneg %p448
        %p924 = pneg %p445
        %p925 = pneg %p469
        %p926 = pneg %p466
        %p927 = pneg %p490
        %p928 = pneg %p487
        %p929 = pneg %p511
        %p930 = pneg %p508
        %p931 = pneg %p539
        %p932 = pneg %p536
        %s933 = sand.u32 %s526, 1
        %s934 = scalar_lea.sflag [#allocation4], %s933
        %s935 = sand.u32 %s526, 1
        %s936 = smul.addr %s935, 8
        %s937 = scalar_lea.vmem [#allocation23], %s936
        %v938 = vld [vmem:[%s798] sm:$0xff]
        %v939 = vld [vmem:[%s808] sm:$0xff]
        %v940 = vld [vmem:[%s808 + $0x8] sm:$0xff]
        %v941 = vld [vmem:[%s818] sm:$0xff]
        %v942 = vld [vmem:[%s818 + $0x8] sm:$0xff]
        %v943 = vld [vmem:[%s818 + $0x10] sm:$0xff]
        %v944 = vld [vmem:[#allocation8] sm:$0xff]
        %v945 = vld [vmem:[#allocation8 + $0x8] sm:$0xff]
        %v946 = vld [vmem:[#allocation8 + $0x10] sm:$0xff]
        %v947 = vld [vmem:[#allocation8 + $0x18] sm:$0xff]
        %v948 = vld [vmem:[#allocation8 + $0x20] sm:$0xff]
        %v949 = vld [vmem:[#allocation8 + $0x28] sm:$0xff]
        %v950 = vld [vmem:[#allocation8 + $0x30] sm:$0xff]
        %v951 = vld [vmem:[#allocation8 + $0x38] sm:$0xff]
        %v952 = vld [vmem:[#allocation8 + $0x40] sm:$0xff]
        %v953 = vld [vmem:[#allocation8 + $0x48] sm:$0xff]
        %v954 = vld [vmem:[#allocation8 + $0x50] sm:$0xff]
        %v955 = vld [vmem:[#allocation8 + $0x58] sm:$0xff]
        %v956 = vld [vmem:[#allocation8 + $0x60] sm:$0xff]
        %v957 = vld [vmem:[#allocation8 + $0x68] sm:$0xff]
        %v958 = vld [vmem:[#allocation8 + $0x70] sm:$0xff]
        %v959 = vld [vmem:[#allocation8 + $0x78] sm:$0xff]
        %v960 = vld [vmem:[#allocation10] sm:$0xff]
        %v961 = vld [vmem:[#allocation10 + $0x8] sm:$0xff]
        %v962 = vld [vmem:[#allocation10 + $0x10] sm:$0xff]
        %v963 = vld [vmem:[#allocation10 + $0x18] sm:$0xff]
        %v964 = vld [vmem:[#allocation10 + $0x20] sm:$0xff]
        %v965 = vld [vmem:[#allocation10 + $0x28] sm:$0xff]
        %v966 = vld [vmem:[#allocation10 + $0x30] sm:$0xff]
        %v967 = vld [vmem:[#allocation10 + $0x38] sm:$0xff]
        %v968 = vld [vmem:[#allocation10 + $0x40] sm:$0xff]
        %v969 = vld [vmem:[#allocation10 + $0x48] sm:$0xff]
        %v970 = vld [vmem:[#allocation10 + $0x50] sm:$0xff]
        %v971 = vld [vmem:[#allocation10 + $0x58] sm:$0xff]
        %v972 = vld [vmem:[#allocation10 + $0x60] sm:$0xff]
        %v973 = vld [vmem:[#allocation10 + $0x68] sm:$0xff]
        %v974 = vld [vmem:[#allocation10 + $0x70] sm:$0xff]
        %v975 = vld [vmem:[#allocation10 + $0x78] sm:$0xff]
        %v976 = vld [vmem:[#allocation11] sm:$0xff]
        %v977 = vld [vmem:[#allocation11 + $0x8] sm:$0xff]
        %v978 = vld [vmem:[#allocation11 + $0x10] sm:$0xff]
        %v979 = vld [vmem:[#allocation11 + $0x18] sm:$0xff]
        %v980 = vld [vmem:[#allocation11 + $0x20] sm:$0xff]
        %v981 = vld [vmem:[#allocation11 + $0x28] sm:$0xff]
        %v982 = vld [vmem:[#allocation11 + $0x30] sm:$0xff]
        %v983 = vld [vmem:[#allocation11 + $0x38] sm:$0xff]
        %v984 = vld [vmem:[#allocation11 + $0x40] sm:$0xff]
        %v985 = vld [vmem:[#allocation11 + $0x48] sm:$0xff]
        %v986 = vld [vmem:[#allocation11 + $0x50] sm:$0xff]
        %v987 = vld [vmem:[#allocation11 + $0x58] sm:$0xff]
        %v988 = vld [vmem:[#allocation11 + $0x60] sm:$0xff]
        %v989 = vld [vmem:[#allocation11 + $0x68] sm:$0xff]
        %v990 = vld [vmem:[#allocation11 + $0x70] sm:$0xff]
        %v991 = vld [vmem:[#allocation11 + $0x78] sm:$0xff]
        %v992 = vld [vmem:[#allocation13] sm:$0xff]
        %v993 = vld [vmem:[#allocation13 + $0x8] sm:$0xff]
        %v994 = vld [vmem:[#allocation13 + $0x10] sm:$0xff]
        %v995 = vld [vmem:[#allocation13 + $0x18] sm:$0xff]
        %v996 = vld [vmem:[#allocation13 + $0x20] sm:$0xff]
        %v997 = vld [vmem:[#allocation13 + $0x28] sm:$0xff]
        %v998 = vld [vmem:[#allocation13 + $0x30] sm:$0xff]
        %v999 = vld [vmem:[#allocation13 + $0x38] sm:$0xff]
        %v1000 = vld [vmem:[#allocation13 + $0x40] sm:$0xff]
        %v1001 = vld [vmem:[#allocation13 + $0x48] sm:$0xff]
        %v1002 = vld [vmem:[#allocation13 + $0x50] sm:$0xff]
        %v1003 = vld [vmem:[#allocation13 + $0x58] sm:$0xff]
        %v1004 = vld [vmem:[#allocation13 + $0x60] sm:$0xff]
        %v1005 = vld [vmem:[#allocation13 + $0x68] sm:$0xff]
        %v1006 = vld [vmem:[#allocation13 + $0x70] sm:$0xff]
        %v1007 = vld [vmem:[#allocation13 + $0x78] sm:$0xff]
        %1008 = vmatpush.msra.mxu0 %v959
        %1009 = vmatpush.msra.mxu0 %v958
        %1010 = vmatpush.msra.mxu0 %v957
        %1011 = vmatpush.msra.mxu0 %v956
        %1012 = vmatpush.msra.mxu0 %v955
        %1013 = vmatpush.msra.mxu0 %v954
        %1014 = vmatpush.msra.mxu0 %v953
        %1015 = vmatpush.msra.mxu0 %v952
        %1016 = vmatpush.msra.mxu0 %v951
        %1017 = vmatpush.msra.mxu0 %v950
        %1018 = vmatpush.msra.mxu0 %v949
        %1019 = vmatpush.msra.mxu0 %v948
        %1020 = vmatpush.msra.mxu0 %v947
        %1021 = vmatpush.msra.mxu0 %v946
        %1022 = vmatpush.msra.mxu0 %v945
        %1023 = vmatpush.msra.mxu0 %v944
        %1024 = vmatmul.f32.gmra.mxu0 %v938
        %v1025 = vpop.f32.mrf.mxu0
        %v1026 = vadd.f32 0.0, %v1025
        %1027 = vdwg.mxu0
        %1028 = vmatpush.msra.mxu0 %v975
        %1029 = vmatpush.msra.mxu0 %v974
        %1030 = vmatpush.msra.mxu0 %v973
        %1031 = vmatpush.msra.mxu0 %v972
        %1032 = vmatpush.msra.mxu0 %v971
        %1033 = vmatpush.msra.mxu0 %v970
        %1034 = vmatpush.msra.mxu0 %v969
        %1035 = vmatpush.msra.mxu0 %v968
        %1036 = vmatpush.msra.mxu0 %v967
        %1037 = vmatpush.msra.mxu0 %v966
        %1038 = vmatpush.msra.mxu0 %v965
        %1039 = vmatpush.msra.mxu0 %v964
        %1040 = vmatpush.msra.mxu0 %v963
        %1041 = vmatpush.msra.mxu0 %v962
        %1042 = vmatpush.msra.mxu0 %v961
        %1043 = vmatpush.msra.mxu0 %v960
        %1044 = vmatmul.f32.gmra.mxu0 %v939
        %v1045 = vpop.f32.mrf.mxu0
        %v1046 = vadd.f32 0.0, %v1045
        %1047 = vmatmul.f32.gmra.mxu0 %v940
        %v1048 = vpop.f32.mrf.mxu0
        %v1049 = vadd.f32 0.0, %v1048
        %1050 = vdwg.mxu0
        %1051 = vmatpush.msra.mxu0 %v991
        %1052 = vmatpush.msra.mxu0 %v990
        %1053 = vmatpush.msra.mxu0 %v989
        %1054 = vmatpush.msra.mxu0 %v988
        %1055 = vmatpush.msra.mxu0 %v987
        %1056 = vmatpush.msra.mxu0 %v986
        %1057 = vmatpush.msra.mxu0 %v985
        %1058 = vmatpush.msra.mxu0 %v984
        %1059 = vmatpush.msra.mxu0 %v983
        %1060 = vmatpush.msra.mxu0 %v982
        %1061 = vmatpush.msra.mxu0 %v981
        %1062 = vmatpush.msra.mxu0 %v980
        %1063 = vmatpush.msra.mxu0 %v979
        %1064 = vmatpush.msra.mxu0 %v978
        %1065 = vmatpush.msra.mxu0 %v977
        %1066 = vmatpush.msra.mxu0 %v976
        %1067 = vmatmul.f32.gmra.mxu0 %v939
        %v1068 = vpop.f32.mrf.mxu0
        %v1069 = vadd.f32 0.0, %v1068
        %1070 = vmatmul.f32.gmra.mxu0 %v940
        %v1071 = vpop.f32.mrf.mxu0
        %v1072 = vadd.f32 0.0, %v1071
        %1073 = vdwg.mxu0
        %1074 = vmatpush.xpose.msra.mxu0 0.0
        %1075 = vmatpush.xpose.msra.mxu0 0.0
        %1076 = vmatpush.xpose.msra.mxu0 0.0
        %1077 = vmatpush.xpose.msra.mxu0 0.0
        %1078 = vmatpush.xpose.msra.mxu0 0.0
        %1079 = vmatpush.xpose.msra.mxu0 0.0
        %1080 = vmatpush.xpose.msra.mxu0 0.0
        %1081 = vmatpush.xpose.msra.mxu0 0.0
        %1082 = vmatpush.xpose.msra.mxu0 0.0
        %1083 = vmatpush.xpose.msra.mxu0 0.0
        %1084 = vmatpush.xpose.msra.mxu0 0.0
        %1085 = vmatpush.xpose.msra.mxu0 0.0
        %1086 = vmatpush.xpose.msra.mxu0 0.0
        %1087 = vmatpush.xpose.msra.mxu0 0.0
        %1088 = vmatpush.xpose.msra.mxu0 %v1049
        %1089 = vmatpush.xpose.msra.mxu0 %v1046
        %1090 = vmatmul.f32.gmra.mxu0 %v1026
        %v1091 = vpop.f32.mrf.mxu0
        %v1092 = vadd.f32 0.0, %v1091
        %1093 = vdwg.mxu0
        %v1094 = vmul.f32 %v1092, 0.088388346
        %vm1095 = vcmask 130048
        %v1096 = vsel %vm1095, %v1094, -inf
        %1097 = vmax.xlane.f32.xlu0 %v1096
        %v1098 = vpop.xlane.xlu0 %1097
        %v1099 = vsub.f32 %v1094, %v1098
        %v1100 = vmul.f32 %v1099, 1.442695
        %v1101 = vpow.pop %v1100
        %v1102 = vsel %vm1095, %v1101, 0.0
        %1103 = vadd.xlane.f32.xlu0 %v1102
        %v1104 = vpop.xlane.xlu0 %1103
        %v1105 = vrcp.pop %v1104
        %v1106 = vmul.f32 %v1101, %v1105
        %v1108 = vsel %vm1095, %v1106, 0
        %1110 = vmatpush.msra.mxu0 0.0
        %1111 = vmatpush.msra.mxu0 0.0
        %1112 = vmatpush.msra.mxu0 0.0
        %1113 = vmatpush.msra.mxu0 0.0
        %1114 = vmatpush.msra.mxu0 0.0
        %1115 = vmatpush.msra.mxu0 0.0
        %1116 = vmatpush.msra.mxu0 0.0
        %1117 = vmatpush.msra.mxu0 0.0
        %1118 = vmatpush.msra.mxu0 0.0
        %1119 = vmatpush.msra.mxu0 0.0
        %1120 = vmatpush.msra.mxu0 0.0
        %1121 = vmatpush.msra.mxu0 0.0
        %1122 = vmatpush.msra.mxu0 0.0
        %1123 = vmatpush.msra.mxu0 0.0
        %1124 = vmatpush.msra.mxu0 %v1072
        %1125 = vmatpush.msra.mxu0 %v1069
        %1126 = vmatmul.f32.gmra.mxu0 %v1108
        %v1127 = vpop.f32.mrf.mxu0
        %v1128 = vadd.f32 0.0, %v1127
        %1129 = vdwg.mxu0
        %1130 = vmatpush.msra.mxu0 %v1007
        %1131 = vmatpush.msra.mxu0 %v1006
        %1132 = vmatpush.msra.mxu0 %v1005
        %1133 = vmatpush.msra.mxu0 %v1004
        %1134 = vmatpush.msra.mxu0 %v1003
        %1135 = vmatpush.msra.mxu0 %v1002
        %1136 = vmatpush.msra.mxu0 %v1001
        %1137 = vmatpush.msra.mxu0 %v1000
        %1138 = vmatpush.msra.mxu0 %v999
        %1139 = vmatpush.msra.mxu0 %v998
        %1140 = vmatpush.msra.mxu0 %v997
        %1141 = vmatpush.msra.mxu0 %v996
        %1142 = vmatpush.msra.mxu0 %v995
        %1143 = vmatpush.msra.mxu0 %v994
        %1144 = vmatpush.msra.mxu0 %v993
        %1145 = vmatpush.msra.mxu0 %v992
        %1146 = vmatmul.f32.gmra.mxu0 %v1128
        %v1147 = vpop.f32.mrf.mxu0
        %v1148 = vadd.f32 %v938, %v1147
        %1149 = vdwg.mxu0
        %v1150 = vld [vmem:[%s11] sm:$0x1]
        %v1151 = vld [vmem:[%s12] sm:$0x1]
        %1152 = vadd.xlane.f32.xlu0 %v1148
        %v1153 = vpop.xlane.xlu0 %1152
        %v1154 = vrcp.pop 128.0
        %v1155 = vmul.f32 128.0, %v1154
        %v1156 = vsub.f32 1.0, %v1155
        %v1157 = vmul.f32 %v1154, %v1156
        %v1158 = vadd.f32 %v1154, %v1157
        %vm1159 = vweird.f32 %v1154
        %v1160 = vsel %vm1159, %v1154, %v1158
        %v1161 = vmul.f32 %v1153, %v1160
        %v1162 = vsub.f32 %v1148, %v1161
        %v1163 = vmul.f32 %v1162, %v1162
        %1164 = vadd.xlane.f32.xlu0 %v1163
        %v1165 = vpop.xlane.xlu0 %1164
        %v1166 = vmul.f32 %v1165, %v1160
        %v1167 = vadd.f32 %v1166, 1e-05
        %v1168 = vrsqrt.pop %v1167
        %v1169 = vmul.f32 %v1168, %v1167
        %v1170 = vmul.f32 %v1169, %v1168
        %v1171 = vmul.f32 0.5, %v1170
        %v1172 = vsub.f32 1.5, %v1171
        %v1173 = vmul.f32 %v1168, %v1172
        %vm1174 = vweird.f32 %v1167
        %vm1175 = vweird.f32 %v1168
        %vm1176 = vmor %vm1174, %vm1175
        %v1177 = vsel %vm1176, %v1168, %v1173
        %v1178 = vmul.f32 %v1162, %v1177
        %v1180 = vperm.slane %v1150, 0
        %v1182 = vmul.f32 %v1178, %v1180
        %v1184 = vperm.slane %v1151, 0
        %v1186 = vadd.f32 %v1182, %v1184
        %v1187 = vld [vmem:[#allocation14] sm:$0xff]
        %v1188 = vld [vmem:[#allocation14 + $0x8] sm:$0xff]
        %v1189 = vld [vmem:[#allocation14 + $0x10] sm:$0xff]
        %v1190 = vld [vmem:[#allocation14 + $0x18] sm:$0xff]
        %v1191 = vld [vmem:[#allocation14 + $0x20] sm:$0xff]
        %v1192 = vld [vmem:[#allocation14 + $0x28] sm:$0xff]
        %v1193 = vld [vmem:[#allocation14 + $0x30] sm:$0xff]
        %v1194 = vld [vmem:[#allocation14 + $0x38] sm:$0xff]
        %v1195 = vld [vmem:[#allocation14 + $0x40] sm:$0xff]
        %v1196 = vld [vmem:[#allocation14 + $0x48] sm:$0xff]
        %v1197 = vld [vmem:[#allocation14 + $0x50] sm:$0xff]
        %v1198 = vld [vmem:[#allocation14 + $0x58] sm:$0xff]
        %v1199 = vld [vmem:[#allocation14 + $0x60] sm:$0xff]
        %v1200 = vld [vmem:[#allocation14 + $0x68] sm:$0xff]
        %v1201 = vld [vmem:[#allocation14 + $0x70] sm:$0xff]
        %v1202 = vld [vmem:[#allocation14 + $0x78] sm:$0xff]
        %v1203 = vld [vmem:[#allocation16] sm:$0xff]
        %v1204 = vld [vmem:[#allocation16 + $0x8] sm:$0xff]
        %v1205 = vld [vmem:[#allocation16 + $0x10] sm:$0xff]
        %v1206 = vld [vmem:[#allocation16 + $0x18] sm:$0xff]
        %v1207 = vld [vmem:[#allocation16 + $0x20] sm:$0xff]
        %v1208 = vld [vmem:[#allocation16 + $0x28] sm:$0xff]
        %v1209 = vld [vmem:[#allocation16 + $0x30] sm:$0xff]
        %v1210 = vld [vmem:[#allocation16 + $0x38] sm:$0xff]
        %v1211 = vld [vmem:[#allocation16 + $0x40] sm:$0xff]
        %v1212 = vld [vmem:[#allocation16 + $0x48] sm:$0xff]
        %v1213 = vld [vmem:[#allocation16 + $0x50] sm:$0xff]
        %v1214 = vld [vmem:[#allocation16 + $0x58] sm:$0xff]
        %v1215 = vld [vmem:[#allocation16 + $0x60] sm:$0xff]
        %v1216 = vld [vmem:[#allocation16 + $0x68] sm:$0xff]
        %v1217 = vld [vmem:[#allocation16 + $0x70] sm:$0xff]
        %v1218 = vld [vmem:[#allocation16 + $0x78] sm:$0xff]
        %v1219 = vld [vmem:[#allocation17] sm:$0xff]
        %v1220 = vld [vmem:[#allocation17 + $0x8] sm:$0xff]
        %v1221 = vld [vmem:[#allocation17 + $0x10] sm:$0xff]
        %v1222 = vld [vmem:[#allocation17 + $0x18] sm:$0xff]
        %v1223 = vld [vmem:[#allocation17 + $0x20] sm:$0xff]
        %v1224 = vld [vmem:[#allocation17 + $0x28] sm:$0xff]
        %v1225 = vld [vmem:[#allocation17 + $0x30] sm:$0xff]
        %v1226 = vld [vmem:[#allocation17 + $0x38] sm:$0xff]
        %v1227 = vld [vmem:[#allocation17 + $0x40] sm:$0xff]
        %v1228 = vld [vmem:[#allocation17 + $0x48] sm:$0xff]
        %v1229 = vld [vmem:[#allocation17 + $0x50] sm:$0xff]
        %v1230 = vld [vmem:[#allocation17 + $0x58] sm:$0xff]
        %v1231 = vld [vmem:[#allocation17 + $0x60] sm:$0xff]
        %v1232 = vld [vmem:[#allocation17 + $0x68] sm:$0xff]
        %v1233 = vld [vmem:[#allocation17 + $0x70] sm:$0xff]
        %v1234 = vld [vmem:[#allocation17 + $0x78] sm:$0xff]
        %v1235 = vld [vmem:[#allocation19] sm:$0xff]
        %v1236 = vld [vmem:[#allocation19 + $0x8] sm:$0xff]
        %v1237 = vld [vmem:[#allocation19 + $0x10] sm:$0xff]
        %v1238 = vld [vmem:[#allocation19 + $0x18] sm:$0xff]
        %v1239 = vld [vmem:[#allocation19 + $0x20] sm:$0xff]
        %v1240 = vld [vmem:[#allocation19 + $0x28] sm:$0xff]
        %v1241 = vld [vmem:[#allocation19 + $0x30] sm:$0xff]
        %v1242 = vld [vmem:[#allocation19 + $0x38] sm:$0xff]
        %v1243 = vld [vmem:[#allocation19 + $0x40] sm:$0xff]
        %v1244 = vld [vmem:[#allocation19 + $0x48] sm:$0xff]
        %v1245 = vld [vmem:[#allocation19 + $0x50] sm:$0xff]
        %v1246 = vld [vmem:[#allocation19 + $0x58] sm:$0xff]
        %v1247 = vld [vmem:[#allocation19 + $0x60] sm:$0xff]
        %v1248 = vld [vmem:[#allocation19 + $0x68] sm:$0xff]
        %v1249 = vld [vmem:[#allocation19 + $0x70] sm:$0xff]
        %v1250 = vld [vmem:[#allocation19 + $0x78] sm:$0xff]
        %1251 = vmatpush.msra.mxu0 %v1202
        %1252 = vmatpush.msra.mxu0 %v1201
        %1253 = vmatpush.msra.mxu0 %v1200
        %1254 = vmatpush.msra.mxu0 %v1199
        %1255 = vmatpush.msra.mxu0 %v1198
        %1256 = vmatpush.msra.mxu0 %v1197
        %1257 = vmatpush.msra.mxu0 %v1196
        %1258 = vmatpush.msra.mxu0 %v1195
        %1259 = vmatpush.msra.mxu0 %v1194
        %1260 = vmatpush.msra.mxu0 %v1193
        %1261 = vmatpush.msra.mxu0 %v1192
        %1262 = vmatpush.msra.mxu0 %v1191
        %1263 = vmatpush.msra.mxu0 %v1190
        %1264 = vmatpush.msra.mxu0 %v1189
        %1265 = vmatpush.msra.mxu0 %v1188
        %1266 = vmatpush.msra.mxu0 %v1187
        %1267 = vmatmul.f32.gmra.mxu0 %v1186
        %v1268 = vpop.f32.mrf.mxu0
        %v1269 = vadd.f32 0.0, %v1268
        %1270 = vdwg.mxu0
        %1271 = vmatpush.msra.mxu0 %v1218
        %1272 = vmatpush.msra.mxu0 %v1217
        %1273 = vmatpush.msra.mxu0 %v1216
        %1274 = vmatpush.msra.mxu0 %v1215
        %1275 = vmatpush.msra.mxu0 %v1214
        %1276 = vmatpush.msra.mxu0 %v1213
        %1277 = vmatpush.msra.mxu0 %v1212
        %1278 = vmatpush.msra.mxu0 %v1211
        %1279 = vmatpush.msra.mxu0 %v1210
        %1280 = vmatpush.msra.mxu0 %v1209
        %1281 = vmatpush.msra.mxu0 %v1208
        %1282 = vmatpush.msra.mxu0 %v1207
        %1283 = vmatpush.msra.mxu0 %v1206
        %1284 = vmatpush.msra.mxu0 %v1205
        %1285 = vmatpush.msra.mxu0 %v1204
        %1286 = vmatpush.msra.mxu0 %v1203
        %1287 = vmatmul.f32.gmra.mxu0 %v941
        %v1288 = vpop.f32.mrf.mxu0
        %v1289 = vadd.f32 0.0, %v1288
        %1290 = vmatmul.f32.gmra.mxu0 %v942
        %v1291 = vpop.f32.mrf.mxu0
        %v1292 = vadd.f32 0.0, %v1291
        %1293 = vmatmul.f32.gmra.mxu0 %v943
        %v1294 = vpop.f32.mrf.mxu0
        %v1295 = vadd.f32 0.0, %v1294
        %1296 = vdwg.mxu0
        %1297 = vmatpush.msra.mxu0 %v1234
        %1298 = vmatpush.msra.mxu0 %v1233
        %1299 = vmatpush.msra.mxu0 %v1232
        %1300 = vmatpush.msra.mxu0 %v1231
        %1301 = vmatpush.msra.mxu0 %v1230
        %1302 = vmatpush.msra.mxu0 %v1229
        %1303 = vmatpush.msra.mxu0 %v1228
        %1304 = vmatpush.msra.mxu0 %v1227
        %1305 = vmatpush.msra.mxu0 %v1226
        %1306 = vmatpush.msra.mxu0 %v1225
        %1307 = vmatpush.msra.mxu0 %v1224
        %1308 = vmatpush.msra.mxu0 %v1223
        %1309 = vmatpush.msra.mxu0 %v1222
        %1310 = vmatpush.msra.mxu0 %v1221
        %1311 = vmatpush.msra.mxu0 %v1220
        %1312 = vmatpush.msra.mxu0 %v1219
        %1313 = vmatmul.f32.gmra.mxu0 %v941
        %v1314 = vpop.f32.mrf.mxu0
        %v1315 = vadd.f32 0.0, %v1314
        %1316 = vmatmul.f32.gmra.mxu0 %v942
        %v1317 = vpop.f32.mrf.mxu0
        %v1318 = vadd.f32 0.0, %v1317
        %1319 = vmatmul.f32.gmra.mxu0 %v943
        %v1320 = vpop.f32.mrf.mxu0
        %v1321 = vadd.f32 0.0, %v1320
        %1322 = vdwg.mxu0
        %1323 = vmatpush.xpose.msra.mxu0 0.0
        %1324 = vmatpush.xpose.msra.mxu0 0.0
        %1325 = vmatpush.xpose.msra.mxu0 0.0
        %1326 = vmatpush.xpose.msra.mxu0 0.0
        %1327 = vmatpush.xpose.msra.mxu0 0.0
        %1328 = vmatpush.xpose.msra.mxu0 0.0
        %1329 = vmatpush.xpose.msra.mxu0 0.0
        %1330 = vmatpush.xpose.msra.mxu0 0.0
        %1331 = vmatpush.xpose.msra.mxu0 0.0
        %1332 = vmatpush.xpose.msra.mxu0 0.0
        %1333 = vmatpush.xpose.msra.mxu0 0.0
        %1334 = vmatpush.xpose.msra.mxu0 0.0
        %1335 = vmatpush.xpose.msra.mxu0 0.0
        %1336 = vmatpush.xpose.msra.mxu0 %v1295
        %1337 = vmatpush.xpose.msra.mxu0 %v1292
        %1338 = vmatpush.xpose.msra.mxu0 %v1289
        %1339 = vmatmul.f32.gmra.mxu0 %v1269
        %v1340 = vpop.f32.mrf.mxu0
        %v1341 = vadd.f32 0.0, %v1340
        %1342 = vdwg.mxu0
        %v1343 = vmul.f32 %v1341, 0.088388346
        %vm1344 = vcmask 195584
        %v1345 = vsel %vm1344, %v1343, -inf
        %1346 = vmax.xlane.f32.xlu0 %v1345
        %v1347 = vpop.xlane.xlu0 %1346
        %v1348 = vsub.f32 %v1343, %v1347
        %v1349 = vmul.f32 %v1348, 1.442695
        %v1350 = vpow.pop %v1349
        %v1351 = vsel %vm1344, %v1350, 0.0
        %1352 = vadd.xlane.f32.xlu0 %v1351
        %v1353 = vpop.xlane.xlu0 %1352
        %v1354 = vrcp.pop %v1353
        %v1355 = vmul.f32 %v1350, %v1354
        %v1357 = vsel %vm1344, %v1355, 0
        %1359 = vmatpush.msra.mxu0 0.0
        %1360 = vmatpush.msra.mxu0 0.0
        %1361 = vmatpush.msra.mxu0 0.0
        %1362 = vmatpush.msra.mxu0 0.0
        %1363 = vmatpush.msra.mxu0 0.0
        %1364 = vmatpush.msra.mxu0 0.0
        %1365 = vmatpush.msra.mxu0 0.0
        %1366 = vmatpush.msra.mxu0 0.0
        %1367 = vmatpush.msra.mxu0 0.0
        %1368 = vmatpush.msra.mxu0 0.0
        %1369 = vmatpush.msra.mxu0 0.0
        %1370 = vmatpush.msra.mxu0 0.0
        %1371 = vmatpush.msra.mxu0 0.0
        %1372 = vmatpush.msra.mxu0 %v1321
        %1373 = vmatpush.msra.mxu0 %v1318
        %1374 = vmatpush.msra.mxu0 %v1315
        %1375 = vmatmul.f32.gmra.mxu0 %v1357
        %v1376 = vpop.f32.mrf.mxu0
        %v1377 = vadd.f32 0.0, %v1376
        %1378 = vdwg.mxu0
        %1379 = vmatpush.msra.mxu0 %v1250
        %1380 = vmatpush.msra.mxu0 %v1249
        %1381 = vmatpush.msra.mxu0 %v1248
        %1382 = vmatpush.msra.mxu0 %v1247
        %1383 = vmatpush.msra.mxu0 %v1246
        %1384 = vmatpush.msra.mxu0 %v1245
        %1385 = vmatpush.msra.mxu0 %v1244
        %1386 = vmatpush.msra.mxu0 %v1243
        %1387 = vmatpush.msra.mxu0 %v1242
        %1388 = vmatpush.msra.mxu0 %v1241
        %1389 = vmatpush.msra.mxu0 %v1240
        %1390 = vmatpush.msra.mxu0 %v1239
        %1391 = vmatpush.msra.mxu0 %v1238
        %1392 = vmatpush.msra.mxu0 %v1237
        %1393 = vmatpush.msra.mxu0 %v1236
        %1394 = vmatpush.msra.mxu0 %v1235
        %1395 = vmatmul.f32.gmra.mxu0 %v1377
        %v1396 = vpop.f32.mrf.mxu0
        %v1397 = vadd.f32 %v1186, %v1396
        %1398 = vdwg.mxu0
        %v1399 = vld [vmem:[%s13] sm:$0x1]
        %v1400 = vld [vmem:[%s14] sm:$0x1]
        %1401 = vadd.xlane.f32.xlu0 %v1397
        %v1402 = vpop.xlane.xlu0 %1401
        %v1403 = vmul.f32 %v1402, %v1160
        %v1404 = vsub.f32 %v1397, %v1403
        %v1405 = vmul.f32 %v1404, %v1404
        %1406 = vadd.xlane.f32.xlu0 %v1405
        %v1407 = vpop.xlane.xlu0 %1406
        %v1408 = vmul.f32 %v1407, %v1160
        %v1409 = vadd.f32 %v1408, 1e-05
        %v1410 = vrsqrt.pop %v1409
        %v1411 = vmul.f32 %v1410, %v1409
        %v1412 = vmul.f32 %v1411, %v1410
        %v1413 = vmul.f32 0.5, %v1412
        %v1414 = vsub.f32 1.5, %v1413
        %v1415 = vmul.f32 %v1410, %v1414
        %vm1416 = vweird.f32 %v1409
        %vm1417 = vweird.f32 %v1410
        %vm1418 = vmor %vm1416, %vm1417
        %v1419 = vsel %vm1418, %v1410, %v1415
        %v1420 = vmul.f32 %v1404, %v1419
        %v1422 = vperm.slane %v1399, 0
        %v1424 = vmul.f32 %v1420, %v1422
        %v1426 = vperm.slane %v1400, 0
        %v1428 = vadd.f32 %v1424, %v1426
        %v1429 = vld [vmem:[#allocation20] sm:$0xff]
        %v1430 = vld [vmem:[#allocation20 + $0x8] sm:$0xff]
        %v1431 = vld [vmem:[#allocation20 + $0x10] sm:$0xff]
        %v1432 = vld [vmem:[#allocation20 + $0x18] sm:$0xff]
        %v1433 = vld [vmem:[#allocation20 + $0x20] sm:$0xff]
        %v1434 = vld [vmem:[#allocation20 + $0x28] sm:$0xff]
        %v1435 = vld [vmem:[#allocation20 + $0x30] sm:$0xff]
        %v1436 = vld [vmem:[#allocation20 + $0x38] sm:$0xff]
        %v1437 = vld [vmem:[#allocation20 + $0x40] sm:$0xff]
        %v1438 = vld [vmem:[#allocation20 + $0x48] sm:$0xff]
        %v1439 = vld [vmem:[#allocation20 + $0x50] sm:$0xff]
        %v1440 = vld [vmem:[#allocation20 + $0x58] sm:$0xff]
        %v1441 = vld [vmem:[#allocation20 + $0x60] sm:$0xff]
        %v1442 = vld [vmem:[#allocation20 + $0x68] sm:$0xff]
        %v1443 = vld [vmem:[#allocation20 + $0x70] sm:$0xff]
        %v1444 = vld [vmem:[#allocation20 + $0x78] sm:$0xff]
        %v1445 = vld [vmem:[%s18] sm:$0x1]
        %v1447 = vperm.slane %v1445, 0
        %1449 = vmatpush.msra.mxu0 %v1444
        %1450 = vmatpush.msra.mxu0 %v1443
        %1451 = vmatpush.msra.mxu0 %v1442
        %1452 = vmatpush.msra.mxu0 %v1441
        %1453 = vmatpush.msra.mxu0 %v1440
        %1454 = vmatpush.msra.mxu0 %v1439
        %1455 = vmatpush.msra.mxu0 %v1438
        %1456 = vmatpush.msra.mxu0 %v1437
        %1457 = vmatpush.msra.mxu0 %v1436
        %1458 = vmatpush.msra.mxu0 %v1435
        %1459 = vmatpush.msra.mxu0 %v1434
        %1460 = vmatpush.msra.mxu0 %v1433
        %1461 = vmatpush.msra.mxu0 %v1432
        %1462 = vmatpush.msra.mxu0 %v1431
        %1463 = vmatpush.msra.mxu0 %v1430
        %1464 = vmatpush.msra.mxu0 %v1429
        %1465 = vmatmul.f32.gmra.mxu0 %v1428
        %v1466 = vpop.f32.mrf.mxu0
        %v1467 = vadd.f32 %v1447, %v1466
        %1468 = vdwg.mxu0
        %v1469 = vmax.f32 %v1467, 0.0
        %v1470 = vld [vmem:[#allocation22] sm:$0xff]
        %v1471 = vld [vmem:[#allocation22 + $0x8] sm:$0xff]
        %v1472 = vld [vmem:[#allocation22 + $0x10] sm:$0xff]
        %v1473 = vld [vmem:[#allocation22 + $0x18] sm:$0xff]
        %v1474 = vld [vmem:[#allocation22 + $0x20] sm:$0xff]
        %v1475 = vld [vmem:[#allocation22 + $0x28] sm:$0xff]
        %v1476 = vld [vmem:[#allocation22 + $0x30] sm:$0xff]
        %v1477 = vld [vmem:[#allocation22 + $0x38] sm:$0xff]
        %v1478 = vld [vmem:[#allocation22 + $0x40] sm:$0xff]
        %v1479 = vld [vmem:[#allocation22 + $0x48] sm:$0xff]
        %v1480 = vld [vmem:[#allocation22 + $0x50] sm:$0xff]
        %v1481 = vld [vmem:[#allocation22 + $0x58] sm:$0xff]
        %v1482 = vld [vmem:[#allocation22 + $0x60] sm:$0xff]
        %v1483 = vld [vmem:[#allocation22 + $0x68] sm:$0xff]
        %v1484 = vld [vmem:[#allocation22 + $0x70] sm:$0xff]
        %v1485 = vld [vmem:[#allocation22 + $0x78] sm:$0xff]
        %v1486 = vld [vmem:[%s20] sm:$0x1]
        %v1488 = vperm.slane %v1486, 0
        %1490 = vmatpush.msra.mxu0 %v1485
        %1491 = vmatpush.msra.mxu0 %v1484
        %1492 = vmatpush.msra.mxu0 %v1483
        %1493 = vmatpush.msra.mxu0 %v1482
        %1494 = vmatpush.msra.mxu0 %v1481
        %1495 = vmatpush.msra.mxu0 %v1480
        %1496 = vmatpush.msra.mxu0 %v1479
        %1497 = vmatpush.msra.mxu0 %v1478
        %1498 = vmatpush.msra.mxu0 %v1477
        %1499 = vmatpush.msra.mxu0 %v1476
        %1500 = vmatpush.msra.mxu0 %v1475
        %1501 = vmatpush.msra.mxu0 %v1474
        %1502 = vmatpush.msra.mxu0 %v1473
        %1503 = vmatpush.msra.mxu0 %v1472
        %1504 = vmatpush.msra.mxu0 %v1471
        %1505 = vmatpush.msra.mxu0 %v1470
        %1506 = vmatmul.f32.gmra.mxu0 %v1469
        %v1507 = vpop.f32.mrf.mxu0
        %v1508 = vadd.f32 %v1488, %v1507
        %1509 = vdwg.mxu0
        %v1510 = vadd.f32 %v1508, %v1428
        %v1511 = vld [vmem:[%s15] sm:$0x1]
        %v1512 = vld [vmem:[%s16] sm:$0x1]
        %1513 = vadd.xlane.f32.xlu0 %v1510
        %v1514 = vpop.xlane.xlu0 %1513
        %v1515 = vmul.f32 %v1514, %v1160
        %v1516 = vsub.f32 %v1510, %v1515
        %v1517 = vmul.f32 %v1516, %v1516
        %1518 = vadd.xlane.f32.xlu0 %v1517
        %v1519 = vpop.xlane.xlu0 %1518
        %v1520 = vmul.f32 %v1519, %v1160
        %v1521 = vadd.f32 %v1520, 1e-05
        %v1522 = vrsqrt.pop %v1521
        %v1523 = vmul.f32 %v1522, %v1521
        %v1524 = vmul.f32 %v1523, %v1522
        %v1525 = vmul.f32 0.5, %v1524
        %v1526 = vsub.f32 1.5, %v1525
        %v1527 = vmul.f32 %v1522, %v1526
        %vm1528 = vweird.f32 %v1521
        %vm1529 = vweird.f32 %v1522
        %vm1530 = vmor %vm1528, %vm1529
        %v1531 = vsel %vm1530, %v1522, %v1527
        %v1532 = vmul.f32 %v1516, %v1531
        %v1534 = vperm.slane %v1511, 0
        %v1536 = vmul.f32 %v1532, %v1534
        %v1538 = vperm.slane %v1512, 0
        %v1540 = vadd.f32 %v1536, %v1538
        %1541 = vst [vmem:[%s937] sm:$0xff] %v1540
        %s1542 = sand.u32 %s526, 1
        %s1543 = scalar_lea.sflag [#allocation4], %s1542
        %s1544 = sand.u32 %s526, 1
        %s1545 = smul.addr %s1544, 8
        %s1546 = scalar_lea.vmem [#allocation23], %s1545
        // Predicated region
        $region157: #{tpu_custom_call.1} parent=103 // pred_check
          %p1547 = pneg %p536
        $region158: #{tpu_custom_call.1} parent=103 // pred_check_branch
          %1549 = sbr.rel (%p1547) target = $region160
        $region159: #{tpu_custom_call.1} parent=103 // pred_region
          %1551 = vsyncadd %s1543, 0
          %s1552 = smul.addr %s50, 2
          %s1553 = sadd.s32 %s51, %s1552
          %s1554 = smul.addr %s1553, 8
          %s1555 = scalar_lea.hbm %s21, %s1554
          %s1557 = sshll.u32 %s1546, 4
          %s1558 = int_to_ptr.vmem [resolvable:$true] %s1557
          %s1559 = sshll.u32 %s1555, 4
          %s1560 = int_to_ptr.hbm [resolvable:$true] %s1559
          %1562 = dma.vmem_to_hbm [thread:$0]  %s1558, 128, %s1560, %s1543
        $region160: #{tpu_custom_call.1} parent=103 // pred_fallthru
          _
      $region104: #{tpu_custom_call.1} parent=5 // pred_fallthru
        _
      %p1563 = scmp.le.s32.totalorder 2, %s41
      // Predicated region
      $region161: #{tpu_custom_call.1} parent=5 // pred_check
        %p1564 = pneg %p1563
      $region162: #{tpu_custom_call.1} parent=5 // pred_check_branch
        %1566 = sbr.rel (%p1564) target = $region164
      $region163: #{tpu_custom_call.1} parent=5 // pred_region
        %s1567 = ssub.s32 %s41, 2
        // Predicated region
        $region165: #{tpu_custom_call.1} parent=163 // pred_check
          %p1568 = pneg %p542
        $region166: #{tpu_custom_call.1} parent=163 // pred_check_branch
          %1570 = sbr.rel (%p1568) target = $region168
        $region167: #{tpu_custom_call.1} parent=163 // pred_region
          %s1571 = sand.u32 %s527, 1
          %s1572 = scalar_lea.sflag [#allocation4], %s1571
          %s1573 = sand.u32 %s527, 1
          %s1574 = smul.addr %s1573, 8
          %s1575 = scalar_lea.vmem [#allocation23], %s1574
          %1577 = dma.done %s1572, 128
        $region168: #{tpu_custom_call.1} parent=163 // pred_fallthru
          _
      $region164: #{tpu_custom_call.1} parent=5 // pred_fallthru
        _
    $region6: #{tpu_custom_call.1} parent=1 // loop_footer
      %s45 = sadd.s32 1, %s41
    $region7: #{tpu_custom_call.1} parent=1 // loop_footer_branch
      %40 = sbr.rel target = $region3
    $region8: #{tpu_custom_call.1} parent=1 // loop_exit
      _
    %1578 = vsyncpa [#allocation3], 1
    %s1579 = scalar_lea.sflag [#allocation3], 1
    %1580 = vsyncpa %s1579, 1
    %1581 = vsyncpa [#allocation6], 1
    %s1582 = scalar_lea.sflag [#allocation6], 1
    %1583 = vsyncpa %s1582, 1
    %1584 = vsyncpa [#allocation9], 1
    %1585 = vsyncpa [#allocation12], 1
    %1586 = vsyncpa [#allocation15], 1
    %1587 = vsyncpa [#allocation18], 1
    %1588 = vsyncpa [#allocation21], 1
    %1589 = vsyncpa [#allocation4], 1
    %s1590 = scalar_lea.sflag [#allocation4], 1
    %1591 = vsyncpa %s1590, 1

// kernel: tpu_custom_call.1
$region0: #{tpu_custom_call.1}
  #allocation0 [shape = 'u32[]', space=smem, size = 0x4, offset = 0x4, fixed_abs, tag = 'smem constant byte address 0x4 - core index']
  #allocation1 [shape = 'u32[72,128]{1,0:T(1,128)}', space=vmem, size = 0x9000, scoped, tag = 'internal scratch']
  %s0 = inlined_call_operand.hbm [shape: f32[2,16,128], index: 0, kind: input, shape index: {}]
  %s1 = inlined_call_operand.hbm [shape: f32[2,16,128], index: 1, kind: input, shape index: {}]
  %s2 = inlined_call_operand.hbm [shape: f32[2,24,128], index: 2, kind: input, shape index: {}]
  %s3 = inlined_call_operand.hbm [shape: f32[128,128], index: 3, kind: input, shape index: {}]
  %s4 = inlined_call_operand.hbm [shape: f32[128,128], index: 4, kind: input, shape index: {}]
  %s5 = inlined_call_operand.hbm [shape: f32[128,128], index: 5, kind: input, shape index: {}]
  %s6 = inlined_call_operand.hbm [shape: f32[128,128], index: 6, kind: input, shape index: {}]
  %s7 = inlined_call_operand.hbm [shape: f32[128,128], index: 7, kind: input, shape index: {}]
  %s8 = inlined_call_operand.hbm [shape: f32[128,128], index: 8, kind: input, shape index: {}]
  %s9 = inlined_call_operand.hbm [shape: f32[128,128], index: 9, kind: input, shape index: {}]
  %s10 = inlined_call_operand.hbm [shape: f32[128,128], index: 10, kind: input, shape index: {}]
  %s11 = inlined_call_operand.vmem [shape: f32[1,128], index: 11, kind: input, shape index: {}]
  %s12 = inlined_call_operand.vmem [shape: f32[1,128], index: 12, kind: input, shape index: {}]
  %s13 = inlined_call_operand.vmem [shape: f32[1,128], index: 13, kind: input, shape index: {}]
  %s14 = inlined_call_operand.vmem [shape: f32[1,128], index: 14, kind: input, shape index: {}]
  %s15 = inlined_call_operand.vmem [shape: f32[1,128], index: 15, kind: input, shape index: {}]
  %s16 = inlined_call_operand.vmem [shape: f32[1,128], index: 16, kind: input, shape index: {}]
  %s17 = inlined_call_operand.hbm [shape: f32[128,128], index: 17, kind: input, shape index: {}]
  %s18 = inlined_call_operand.vmem [shape: f32[1,128], index: 18, kind: input, shape index: {}]
  %s19 = inlined_call_operand.hbm [shape: f32[128,128], index: 19, kind: input, shape index: {}]
  %s20 = inlined_call_operand.vmem [shape: f32[1,128], index: 20, kind: input, shape index: {}]
  %s21 = inlined_call_operand.hbm [shape: f32[2,16,128], index: 21, kind: output, shape index: {}]
  %s22 = sld [smem:[#allocation0]]
  $region169: #{tpu_custom_call.1} parent=0
    _
  %s24 = ssub.s32 1, %s22
  %s25 = scalar_select 0, %s24, %s22
  $region1: #{tpu_custom_call.1} parent=0
    #allocation2 [shape = 'u8[8192]{0}', space=vmem, size = 0x2000, scoped, tag = 'input window, operand 0']
    #allocation3 [shape = 's32[2]{0}', space=sflag, size = 0x8, scoped, tag = 'scoped memory for tpu_custom_call.1']
    #allocation4 [shape = 's32[2]{0}', space=sflag, size = 0x8, scoped, tag = 'scoped memory for tpu_custom_call.1']
    #allocation5 [shape = 'u8[16384]{0}', space=vmem, size = 0x4000, scoped, tag = 'input window, operand 1']
    #allocation6 [shape = 's32[2]{0}', space=sflag, size = 0x8, scoped, tag = 'scoped memory for tpu_custom_call.1']
    #allocation7 [shape = 'u8[24576]{0}', space=vmem, size = 0x6000, scoped, tag = 'input window, operand 2']
    #allocation8 [shape = 'u8[65536]{0}', space=vmem, size = 0x10000, scoped, tag = 'input window, operand 3, single buffered']
    #allocation9 [shape = 's32[1]{0}', space=sflag, size = 0x4, scoped, tag = 'scoped memory for tpu_custom_call.1']
    #allocation10 [shape = 'u8[65536]{0}', space=vmem, size = 0x10000, scoped, tag = 'input window, operand 4, single buffered']
    #allocation11 [shape = 'u8[65536]{0}', space=vmem, size = 0x10000, scoped, tag = 'input window, operand 5, single buffered']
    #allocation12 [shape = 's32[1]{0}', space=sflag, size = 0x4, scoped, tag = 'scoped memory for tpu_custom_call.1']
    #allocation13 [shape = 'u8[65536]{0}', space=vmem, size = 0x10000, scoped, tag = 'input window, operand 6, single buffered']
    #allocation14 [shape = 'u8[65536]{0}', space=vmem, size = 0x10000, scoped, tag = 'input window, operand 7, single buffered']
    #allocation15 [shape = 's32[1]{0}', space=sflag, size = 0x4, scoped, tag = 'scoped memory for tpu_custom_call.1']
    #allocation16 [shape = 'u8[65536]{0}', space=vmem, size = 0x10000, scoped, tag = 'input window, operand 8, single buffered']
    #allocation17 [shape = 'u8[65536]{0}', space=vmem, size = 0x10000, scoped, tag = 'input window, operand 9, single buffered']
    #allocation18 [shape = 's32[1]{0}', space=sflag, size = 0x4, scoped, tag = 'scoped memory for tpu_custom_call.1']
    #allocation19 [shape = 'u8[65536]{0}', space=vmem, size = 0x10000, scoped, tag = 'input window, operand 10, single buffered']
    #allocation20 [shape = 'u8[65536]{0}', space=vmem, size = 0x10000, scoped, tag = 'input window, operand 17, single buffered']
    #allocation21 [shape = 's32[1]{0}', space=sflag, size = 0x4, scoped, tag = 'scoped memory for tpu_custom_call.1']
    #allocation22 [shape = 'u8[65536]{0}', space=vmem, size = 0x10000, scoped, tag = 'input window, operand 19, single buffered']
    #allocation23 [shape = 'u8[8192]{0}', space=vmem, size = 0x2000, scoped, tag = 'output window, operand 0']
    %26 = vsyncpa [#allocation3], 0
    %s27 = scalar_lea.sflag [#allocation3], 1
    %28 = vsyncpa %s27, 0
    %29 = vsyncpa [#allocation6], 0
    %s30 = scalar_lea.sflag [#allocation6], 1
    %31 = vsyncpa %s30, 0
    %32 = vsyncpa [#allocation9], 0
    %33 = vsyncpa [#allocation12], 0
    %34 = vsyncpa [#allocation15], 0
    %35 = vsyncpa [#allocation18], 0
    %36 = vsyncpa [#allocation21], 0
    %37 = vsyncpa [#allocation4], 0
    %s38 = scalar_lea.sflag [#allocation4], 1
    %39 = vsyncpa %s38, 0
    loop: start=0, step=1, limit=6
    $region2: #{tpu_custom_call.1} parent=1 // loop_pre_header
      _
    $region3: #{tpu_custom_call.1} parent=1 // loop_header
      %s41 = sphi 0, %s45
      %p42 = scmp.ge.s32.totalorder %s41, 6
      %s48 = sphi 0, %s60
      %s49 = sphi 0, %s56
      %s50 = sphi 0, %s48
      %s51 = sphi 0, %s49
      %s52 = sphi 0, %s50
      %s53 = sphi 0, %s51
      %s65 = sphi 0, %s67
      %s68 = sphi 0, %s65
      %s69 = sphi 0, %s68
      %s85 = sphi 0, %s69
      %s91 = sphi 0, %s93
      %s94 = sphi 0, %s91
      %s95 = sphi 0, %s94
      %s111 = sphi 0, %s95
      %s117 = sphi 0, %s119
      %s120 = sphi 0, %s117
      %s121 = sphi 0, %s120
      %s137 = sphi 0, %s121
      %s141 = sphi 0, %s141
      %s143 = sphi 0, %s141
      %s144 = sphi 0, %s143
      %s158 = sphi 0, %s144
      %s162 = sphi 0, %s162
      %s164 = sphi 0, %s162
      %s165 = sphi 0, %s164
      %s179 = sphi 0, %s165
      %s183 = sphi 0, %s183
      %s185 = sphi 0, %s183
      %s186 = sphi 0, %s185
      %s200 = sphi 0, %s186
      %s204 = sphi 0, %s204
      %s206 = sphi 0, %s204
      %s207 = sphi 0, %s206
      %s221 = sphi 0, %s207
      %s225 = sphi 0, %s225
      %s227 = sphi 0, %s225
      %s228 = sphi 0, %s227
      %s242 = sphi 0, %s228
      %s246 = sphi 0, %s246
      %s248 = sphi 0, %s246
      %s249 = sphi 0, %s248
      %s263 = sphi 0, %s249
      %s267 = sphi 0, %s267
      %s269 = sphi 0, %s267
      %s270 = sphi 0, %s269
      %s284 = sphi 0, %s270
      %s288 = sphi 0, %s288
      %s290 = sphi 0, %s288
      %s291 = sphi 0, %s290
      %s305 = sphi 0, %s291
      %s309 = sphi 0, %s309
      %s311 = sphi 0, %s309
      %s312 = sphi 0, %s311
      %s326 = sphi 0, %s312
      %s330 = sphi 0, %s330
      %s332 = sphi 0, %s330
      %s333 = sphi 0, %s332
      %s347 = sphi 0, %s333
      %s351 = sphi 0, %s351
      %s353 = sphi 0, %s351
      %s354 = sphi 0, %s353
      %s368 = sphi 0, %s354
      %s372 = sphi 0, %s372
      %s374 = sphi 0, %s372
      %s375 = sphi 0, %s374
      %s389 = sphi 0, %s375
      %s393 = sphi 0, %s393
      %s395 = sphi 0, %s393
      %s396 = sphi 0, %s395
      %s410 = sphi 0, %s396
      %s414 = sphi 0, %s414
      %s416 = sphi 0, %s414
      %s417 = sphi 0, %s416
      %s431 = sphi 0, %s417
      %s435 = sphi 0, %s435
      %s437 = sphi 0, %s435
      %s438 = sphi 0, %s437
      %s452 = sphi 0, %s438
      %s456 = sphi 0, %s456
      %s458 = sphi 0, %s456
      %s459 = sphi 0, %s458
      %s473 = sphi 0, %s459
      %s477 = sphi 0, %s477
      %s479 = sphi 0, %s477
      %s480 = sphi 0, %s479
      %s494 = sphi 0, %s480
      %s498 = sphi 0, %s498
      %s500 = sphi 0, %s498
      %s501 = sphi 0, %s500
      %s515 = sphi 0, %s501
      %s523 = sphi 0, %s525
      %s526 = sphi 0, %s523
      %s527 = sphi 0, %s526
      %s543 = sphi 0, %s527
    $region4: #{tpu_custom_call.1} parent=1 // loop_header_branch
      %44 = sbr.rel (%p42) target = $region8
    $region5: #{tpu_custom_call.1} parent=1 // loop_body
      %s46 = ssub.s32 %s41, 1
      %s47 = ssub.s32 %s41, 2
      %s54 = sadd.s32 1, %s49
      %p55 = scmp.ge.s32.totalorder %s54, 2
      %s56 = scalar_select %p55, 0, %s54
      %s57 = sadd.s32 1, %s48
      %s58 = scalar_select %p55, %s57, %s48
      %p59 = scmp.ge.s32.totalorder %s58, 2
      %s60 = scalar_select %p59, 0, %s58
      %s61 = ssub.s32 %s48, %s60
      %s62 = ssub.s32 %s49, %s56
      %s63 = sor.u32 %s61, %s62
      %p64 = scmp.eq.s32.totalorder %s63, 0
      %s66 = sadd.s32 %s65, 1
      %s67 = scalar_select %p64, %s65, %s66
      %p70 = pneg %p64
      %p71 = scmp.eq.s32.totalorder %s41, 3
      %p72 = por %p70, %p71
      %p73 = scmp.ne.s32.totalorder %s65, %s68
      %p74 = scmp.eq.s32.totalorder %s41, 0
      %p75 = por %p73, %p74
      %p76 = scmp.ne.s32.totalorder %s65, %s68
      %p77 = scmp.eq.s32.totalorder %s46, 3
      %p78 = por %p76, %p77
      %p79 = scmp.ne.s32.totalorder %s68, %s69
      %p80 = scmp.eq.s32.totalorder %s46, 0
      %p81 = por %p79, %p80
      %p82 = scmp.ne.s32.totalorder %s68, %s69
      %p83 = scmp.eq.s32.totalorder %s47, 3
      %p84 = por %p82, %p83
      %p86 = scmp.ne.s32.totalorder %s69, %s85
      %p87 = scmp.eq.s32.totalorder %s47, 0
      %p88 = por %p86, %p87
      %s89 = ssub.s32 %s48, %s60
      %p90 = scmp.eq.s32.totalorder %s89, 0
      %s92 = sadd.s32 %s91, 1
      %s93 = scalar_select %p90, %s91, %s92
      %p96 = pneg %p90
      %p97 = scmp.eq.s32.totalorder %s41, 3
      %p98 = por %p96, %p97
      %p99 = scmp.ne.s32.totalorder %s91, %s94
      %p100 = scmp.eq.s32.totalorder %s41, 0
      %p101 = por %p99, %p100
      %p102 = scmp.ne.s32.totalorder %s91, %s94
      %p103 = scmp.eq.s32.totalorder %s46, 3
      %p104 = por %p102, %p103
      %p105 = scmp.ne.s32.totalorder %s94, %s95
      %p106 = scmp.eq.s32.totalorder %s46, 0
      %p107 = por %p105, %p106
      %p108 = scmp.ne.s32.totalorder %s94, %s95
      %p109 = scmp.eq.s32.totalorder %s47, 3
      %p110 = por %p108, %p109
      %p112 = scmp.ne.s32.totalorder %s95, %s111
      %p113 = scmp.eq.s32.totalorder %s47, 0
      %p114 = por %p112, %p113
      %s115 = ssub.s32 %s48, %s60
      %p116 = scmp.eq.s32.totalorder %s115, 0
      %s118 = sadd.s32 %s117, 1
      %s119 = scalar_select %p116, %s117, %s118
      %p122 = pneg %p116
      %p123 = scmp.eq.s32.totalorder %s41, 3
      %p124 = por %p122, %p123
      %p125 = scmp.ne.s32.totalorder %s117, %s120
      %p126 = scmp.eq.s32.totalorder %s41, 0
      %p127 = por %p125, %p126
      %p128 = scmp.ne.s32.totalorder %s117, %s120
      %p129 = scmp.eq.s32.totalorder %s46, 3
      %p130 = por %p128, %p129
      %p131 = scmp.ne.s32.totalorder %s120, %s121
      %p132 = scmp.eq.s32.totalorder %s46, 0
      %p133 = por %p131, %p132
      %p134 = scmp.ne.s32.totalorder %s120, %s121
      %p135 = scmp.eq.s32.totalorder %s47, 3
      %p136 = por %p134, %p135
      %p138 = scmp.ne.s32.totalorder %s121, %s137
      %p139 = scmp.eq.s32.totalorder %s47, 0
      %p140 = por %p138, %p139
      %s142 = sadd.s32 %s141, 1
      %p145 = scmp.eq.s32.totalorder %s41, 3
      %p146 = scmp.ne.s32.totalorder %s141, %s143
      %p147 = scmp.eq.s32.totalorder %s41, 0
      %p148 = por %p146, %p147
      %p149 = scmp.ne.s32.totalorder %s141, %s143
      %p150 = scmp.eq.s32.totalorder %s46, 3
      %p151 = por %p149, %p150
      %p152 = scmp.ne.s32.totalorder %s143, %s144
      %p153 = scmp.eq.s32.totalorder %s46, 0
      %p154 = por %p152, %p153
      %p155 = scmp.ne.s32.totalorder %s143, %s144
      %p156 = scmp.eq.s32.totalorder %s47, 3
      %p157 = por %p155, %p156
      %p159 = scmp.ne.s32.totalorder %s144, %s158
      %p160 = scmp.eq.s32.totalorder %s47, 0
      %p161 = por %p159, %p160
      %s163 = sadd.s32 %s162, 1
      %p166 = scmp.eq.s32.totalorder %s41, 3
      %p167 = scmp.ne.s32.totalorder %s162, %s164
      %p168 = scmp.eq.s32.totalorder %s41, 0
      %p169 = por %p167, %p168
      %p170 = scmp.ne.s32.totalorder %s162, %s164
      %p171 = scmp.eq.s32.totalorder %s46, 3
      %p172 = por %p170, %p171
      %p173 = scmp.ne.s32.totalorder %s164, %s165
      %p174 = scmp.eq.s32.totalorder %s46, 0
      %p175 = por %p173, %p174
      %p176 = scmp.ne.s32.totalorder %s164, %s165
      %p177 = scmp.eq.s32.totalorder %s47, 3
      %p178 = por %p176, %p177
      %p180 = scmp.ne.s32.totalorder %s165, %s179
      %p181 = scmp.eq.s32.totalorder %s47, 0
      %p182 = por %p180, %p181
      %s184 = sadd.s32 %s183, 1
      %p187 = scmp.eq.s32.totalorder %s41, 3
      %p188 = scmp.ne.s32.totalorder %s183, %s185
      %p189 = scmp.eq.s32.totalorder %s41, 0
      %p190 = por %p188, %p189
      %p191 = scmp.ne.s32.totalorder %s183, %s185
      %p192 = scmp.eq.s32.totalorder %s46, 3
      %p193 = por %p191, %p192
      %p194 = scmp.ne.s32.totalorder %s185, %s186
      %p195 = scmp.eq.s32.totalorder %s46, 0
      %p196 = por %p194, %p195
      %p197 = scmp.ne.s32.totalorder %s185, %s186
      %p198 = scmp.eq.s32.totalorder %s47, 3
      %p199 = por %p197, %p198
      %p201 = scmp.ne.s32.totalorder %s186, %s200
      %p202 = scmp.eq.s32.totalorder %s47, 0
      %p203 = por %p201, %p202
      %s205 = sadd.s32 %s204, 1
      %p208 = scmp.eq.s32.totalorder %s41, 3
      %p209 = scmp.ne.s32.totalorder %s204, %s206
      %p210 = scmp.eq.s32.totalorder %s41, 0
      %p211 = por %p209, %p210
      %p212 = scmp.ne.s32.totalorder %s204, %s206
      %p213 = scmp.eq.s32.totalorder %s46, 3
      %p214 = por %p212, %p213
      %p215 = scmp.ne.s32.totalorder %s206, %s207
      %p216 = scmp.eq.s32.totalorder %s46, 0
      %p217 = por %p215, %p216
      %p218 = scmp.ne.s32.totalorder %s206, %s207
      %p219 = scmp.eq.s32.totalorder %s47, 3
      %p220 = por %p218, %p219
      %p222 = scmp.ne.s32.totalorder %s207, %s221
      %p223 = scmp.eq.s32.totalorder %s47, 0
      %p224 = por %p222, %p223
      %s226 = sadd.s32 %s225, 1
      %p229 = scmp.eq.s32.totalorder %s41, 3
      %p230 = scmp.ne.s32.totalorder %s225, %s227
      %p231 = scmp.eq.s32.totalorder %s41, 0
      %p232 = por %p230, %p231
      %p233 = scmp.ne.s32.totalorder %s225, %s227
      %p234 = scmp.eq.s32.totalorder %s46, 3
      %p235 = por %p233, %p234
      %p236 = scmp.ne.s32.totalorder %s227, %s228
      %p237 = scmp.eq.s32.totalorder %s46, 0
      %p238 = por %p236, %p237
      %p239 = scmp.ne.s32.totalorder %s227, %s228
      %p240 = scmp.eq.s32.totalorder %s47, 3
      %p241 = por %p239, %p240
      %p243 = scmp.ne.s32.totalorder %s228, %s242
      %p244 = scmp.eq.s32.totalorder %s47, 0
      %p245 = por %p243, %p244
      %s247 = sadd.s32 %s246, 1
      %p250 = scmp.eq.s32.totalorder %s41, 3
      %p251 = scmp.ne.s32.totalorder %s246, %s248
      %p252 = scmp.eq.s32.totalorder %s41, 0
      %p253 = por %p251, %p252
      %p254 = scmp.ne.s32.totalorder %s246, %s248
      %p255 = scmp.eq.s32.totalorder %s46, 3
      %p256 = por %p254, %p255
      %p257 = scmp.ne.s32.totalorder %s248, %s249
      %p258 = scmp.eq.s32.totalorder %s46, 0
      %p259 = por %p257, %p258
      %p260 = scmp.ne.s32.totalorder %s248, %s249
      %p261 = scmp.eq.s32.totalorder %s47, 3
      %p262 = por %p260, %p261
      %p264 = scmp.ne.s32.totalorder %s249, %s263
      %p265 = scmp.eq.s32.totalorder %s47, 0
      %p266 = por %p264, %p265
      %s268 = sadd.s32 %s267, 1
      %p271 = scmp.eq.s32.totalorder %s41, 3
      %p272 = scmp.ne.s32.totalorder %s267, %s269
      %p273 = scmp.eq.s32.totalorder %s41, 0
      %p274 = por %p272, %p273
      %p275 = scmp.ne.s32.totalorder %s267, %s269
      %p276 = scmp.eq.s32.totalorder %s46, 3
      %p277 = por %p275, %p276
      %p278 = scmp.ne.s32.totalorder %s269, %s270
      %p279 = scmp.eq.s32.totalorder %s46, 0
      %p280 = por %p278, %p279
      %p281 = scmp.ne.s32.totalorder %s269, %s270
      %p282 = scmp.eq.s32.totalorder %s47, 3
      %p283 = por %p281, %p282
      %p285 = scmp.ne.s32.totalorder %s270, %s284
      %p286 = scmp.eq.s32.totalorder %s47, 0
      %p287 = por %p285, %p286
      %s289 = sadd.s32 %s288, 1
      %p292 = scmp.eq.s32.totalorder %s41, 3
      %p293 = scmp.ne.s32.totalorder %s288, %s290
      %p294 = scmp.eq.s32.totalorder %s41, 0
      %p295 = por %p293, %p294
      %p296 = scmp.ne.s32.totalorder %s288, %s290
      %p297 = scmp.eq.s32.totalorder %s46, 3
      %p298 = por %p296, %p297
      %p299 = scmp.ne.s32.totalorder %s290, %s291
      %p300 = scmp.eq.s32.totalorder %s46, 0
      %p301 = por %p299, %p300
      %p302 = scmp.ne.s32.totalorder %s290, %s291
      %p303 = scmp.eq.s32.totalorder %s47, 3
      %p304 = por %p302, %p303
      %p306 = scmp.ne.s32.totalorder %s291, %s305
      %p307 = scmp.eq.s32.totalorder %s47, 0
      %p308 = por %p306, %p307
      %s310 = sadd.s32 %s309, 1
      %p313 = scmp.eq.s32.totalorder %s41, 3
      %p314 = scmp.ne.s32.totalorder %s309, %s311
      %p315 = scmp.eq.s32.totalorder %s41, 0
      %p316 = por %p314, %p315
      %p317 = scmp.ne.s32.totalorder %s309, %s311
      %p318 = scmp.eq.s32.totalorder %s46, 3
      %p319 = por %p317, %p318
      %p320 = scmp.ne.s32.totalorder %s311, %s312
      %p321 = scmp.eq.s32.totalorder %s46, 0
      %p322 = por %p320, %p321
      %p323 = scmp.ne.s32.totalorder %s311, %s312
      %p324 = scmp.eq.s32.totalorder %s47, 3
      %p325 = por %p323, %p324
      %p327 = scmp.ne.s32.totalorder %s312, %s326
      %p328 = scmp.eq.s32.totalorder %s47, 0
      %p329 = por %p327, %p328
      %s331 = sadd.s32 %s330, 1
      %p334 = scmp.eq.s32.totalorder %s41, 3
      %p335 = scmp.ne.s32.totalorder %s330, %s332
      %p336 = scmp.eq.s32.totalorder %s41, 0
      %p337 = por %p335, %p336
      %p338 = scmp.ne.s32.totalorder %s330, %s332
      %p339 = scmp.eq.s32.totalorder %s46, 3
      %p340 = por %p338, %p339
      %p341 = scmp.ne.s32.totalorder %s332, %s333
      %p342 = scmp.eq.s32.totalorder %s46, 0
      %p343 = por %p341, %p342
      %p344 = scmp.ne.s32.totalorder %s332, %s333
      %p345 = scmp.eq.s32.totalorder %s47, 3
      %p346 = por %p344, %p345
      %p348 = scmp.ne.s32.totalorder %s333, %s347
      %p349 = scmp.eq.s32.totalorder %s47, 0
      %p350 = por %p348, %p349
      %s352 = sadd.s32 %s351, 1
      %p355 = scmp.eq.s32.totalorder %s41, 3
      %p356 = scmp.ne.s32.totalorder %s351, %s353
      %p357 = scmp.eq.s32.totalorder %s41, 0
      %p358 = por %p356, %p357
      %p359 = scmp.ne.s32.totalorder %s351, %s353
      %p360 = scmp.eq.s32.totalorder %s46, 3
      %p361 = por %p359, %p360
      %p362 = scmp.ne.s32.totalorder %s353, %s354
      %p363 = scmp.eq.s32.totalorder %s46, 0
      %p364 = por %p362, %p363
      %p365 = scmp.ne.s32.totalorder %s353, %s354
      %p366 = scmp.eq.s32.totalorder %s47, 3
      %p367 = por %p365, %p366
      %p369 = scmp.ne.s32.totalorder %s354, %s368
      %p370 = scmp.eq.s32.totalorder %s47, 0
      %p371 = por %p369, %p370
      %s373 = sadd.s32 %s372, 1
      %p376 = scmp.eq.s32.totalorder %s41, 3
      %p377 = scmp.ne.s32.totalorder %s372, %s374
      %p378 = scmp.eq.s32.totalorder %s41, 0
      %p379 = por %p377, %p378
      %p380 = scmp.ne.s32.totalorder %s372, %s374
      %p381 = scmp.eq.s32.totalorder %s46, 3
      %p382 = por %p380, %p381
      %p383 = scmp.ne.s32.totalorder %s374, %s375
      %p384 = scmp.eq.s32.totalorder %s46, 0
      %p385 = por %p383, %p384
      %p386 = scmp.ne.s32.totalorder %s374, %s375
      %p387 = scmp.eq.s32.totalorder %s47, 3
      %p388 = por %p386, %p387
      %p390 = scmp.ne.s32.totalorder %s375, %s389
      %p391 = scmp.eq.s32.totalorder %s47, 0
      %p392 = por %p390, %p391
      %s394 = sadd.s32 %s393, 1
      %p397 = scmp.eq.s32.totalorder %s41, 3
      %p398 = scmp.ne.s32.totalorder %s393, %s395
      %p399 = scmp.eq.s32.totalorder %s41, 0
      %p400 = por %p398, %p399
      %p401 = scmp.ne.s32.totalorder %s393, %s395
      %p402 = scmp.eq.s32.totalorder %s46, 3
      %p403 = por %p401, %p402
      %p404 = scmp.ne.s32.totalorder %s395, %s396
      %p405 = scmp.eq.s32.totalorder %s46, 0
      %p406 = por %p404, %p405
      %p407 = scmp.ne.s32.totalorder %s395, %s396
      %p408 = scmp.eq.s32.totalorder %s47, 3
      %p409 = por %p407, %p408
      %p411 = scmp.ne.s32.totalorder %s396, %s410
      %p412 = scmp.eq.s32.totalorder %s47, 0
      %p413 = por %p411, %p412
      %s415 = sadd.s32 %s414, 1
      %p418 = scmp.eq.s32.totalorder %s41, 3
      %p419 = scmp.ne.s32.totalorder %s414, %s416
      %p420 = scmp.eq.s32.totalorder %s41, 0
      %p421 = por %p419, %p420
      %p422 = scmp.ne.s32.totalorder %s414, %s416
      %p423 = scmp.eq.s32.totalorder %s46, 3
      %p424 = por %p422, %p423
      %p425 = scmp.ne.s32.totalorder %s416, %s417
      %p426 = scmp.eq.s32.totalorder %s46, 0
      %p427 = por %p425, %p426
      %p428 = scmp.ne.s32.totalorder %s416, %s417
      %p429 = scmp.eq.s32.totalorder %s47, 3
      %p430 = por %p428, %p429
      %p432 = scmp.ne.s32.totalorder %s417, %s431
      %p433 = scmp.eq.s32.totalorder %s47, 0
      %p434 = por %p432, %p433
      %s436 = sadd.s32 %s435, 1
      %p439 = scmp.eq.s32.totalorder %s41, 3
      %p440 = scmp.ne.s32.totalorder %s435, %s437
      %p441 = scmp.eq.s32.totalorder %s41, 0
      %p442 = por %p440, %p441
      %p443 = scmp.ne.s32.totalorder %s435, %s437
      %p444 = scmp.eq.s32.totalorder %s46, 3
      %p445 = por %p443, %p444
      %p446 = scmp.ne.s32.totalorder %s437, %s438
      %p447 = scmp.eq.s32.totalorder %s46, 0
      %p448 = por %p446, %p447
      %p449 = scmp.ne.s32.totalorder %s437, %s438
      %p450 = scmp.eq.s32.totalorder %s47, 3
      %p451 = por %p449, %p450
      %p453 = scmp.ne.s32.totalorder %s438, %s452
      %p454 = scmp.eq.s32.totalorder %s47, 0
      %p455 = por %p453, %p454
      %s457 = sadd.s32 %s456, 1
      %p460 = scmp.eq.s32.totalorder %s41, 3
      %p461 = scmp.ne.s32.totalorder %s456, %s458
      %p462 = scmp.eq.s32.totalorder %s41, 0
      %p463 = por %p461, %p462
      %p464 = scmp.ne.s32.totalorder %s456, %s458
      %p465 = scmp.eq.s32.totalorder %s46, 3
      %p466 = por %p464, %p465
      %p467 = scmp.ne.s32.totalorder %s458, %s459
      %p468 = scmp.eq.s32.totalorder %s46, 0
      %p469 = por %p467, %p468
      %p470 = scmp.ne.s32.totalorder %s458, %s459
      %p471 = scmp.eq.s32.totalorder %s47, 3
      %p472 = por %p470, %p471
      %p474 = scmp.ne.s32.totalorder %s459, %s473
      %p475 = scmp.eq.s32.totalorder %s47, 0
      %p476 = por %p474, %p475
      %s478 = sadd.s32 %s477, 1
      %p481 = scmp.eq.s32.totalorder %s41, 3
      %p482 = scmp.ne.s32.totalorder %s477, %s479
      %p483 = scmp.eq.s32.totalorder %s41, 0
      %p484 = por %p482, %p483
      %p485 = scmp.ne.s32.totalorder %s477, %s479
      %p486 = scmp.eq.s32.totalorder %s46, 3
      %p487 = por %p485, %p486
      %p488 = scmp.ne.s32.totalorder %s479, %s480
      %p489 = scmp.eq.s32.totalorder %s46, 0
      %p490 = por %p488, %p489
      %p491 = scmp.ne.s32.totalorder %s479, %s480
      %p492 = scmp.eq.s32.totalorder %s47, 3
      %p493 = por %p491, %p492
      %p495 = scmp.ne.s32.totalorder %s480, %s494
      %p496 = scmp.eq.s32.totalorder %s47, 0
      %p497 = por %p495, %p496
      %s499 = sadd.s32 %s498, 1
      %p502 = scmp.eq.s32.totalorder %s41, 3
      %p503 = scmp.ne.s32.totalorder %s498, %s500
      %p504 = scmp.eq.s32.totalorder %s41, 0
      %p505 = por %p503, %p504
      %p506 = scmp.ne.s32.totalorder %s498, %s500
      %p507 = scmp.eq.s32.totalorder %s46, 3
      %p508 = por %p506, %p507
      %p509 = scmp.ne.s32.totalorder %s500, %s501
      %p510 = scmp.eq.s32.totalorder %s46, 0
      %p511 = por %p509, %p510
      %p512 = scmp.ne.s32.totalorder %s500, %s501
      %p513 = scmp.eq.s32.totalorder %s47, 3
      %p514 = por %p512, %p513
      %p516 = scmp.ne.s32.totalorder %s501, %s515
      %p517 = scmp.eq.s32.totalorder %s47, 0
      %p518 = por %p516, %p517
      %s519 = ssub.s32 %s48, %s60
      %s520 = ssub.s32 %s49, %s56
      %s521 = sor.u32 %s519, %s520
      %p522 = scmp.eq.s32.totalorder %s521, 0
      %s524 = sadd.s32 %s523, 1
      %s525 = scalar_select %p522, %s523, %s524
      %p528 = pneg %p522
      %p529 = scmp.eq.s32.totalorder %s41, 3
      %p530 = por %p528, %p529
      %p531 = scmp.ne.s32.totalorder %s523, %s526
      %p532 = scmp.eq.s32.totalorder %s41, 0
      %p533 = por %p531, %p532
      %p534 = scmp.ne.s32.totalorder %s523, %s526
      %p535 = scmp.eq.s32.totalorder %s46, 3
      %p536 = por %p534, %p535
      %p537 = scmp.ne.s32.totalorder %s526, %s527
      %p538 = scmp.eq.s32.totalorder %s46, 0
      %p539 = por %p537, %p538
      %p540 = scmp.ne.s32.totalorder %s526, %s527
      %p541 = scmp.eq.s32.totalorder %s47, 3
      %p542 = por %p540, %p541
      %p544 = scmp.ne.s32.totalorder %s527, %s543
      %p545 = scmp.eq.s32.totalorder %s47, 0
      %p546 = por %p544, %p545
      %p547 = scmp.le.s32.totalorder 1, %s41
      %p548 = scmp.lt.s32.totalorder %s41, 5
      %p549 = pnand %p547, %p548
      %p550 = pneg %p549
      // Predicated region
      $region9: #{tpu_custom_call.1} parent=5 // pred_check
        _
      $region10: #{tpu_custom_call.1} parent=5 // pred_check_branch
        %552 = sbr.rel (%p549) target = $region12
      $region11: #{tpu_custom_call.1} parent=5 // pred_region
        %s553 = ssub.s32 %s41, 1
        // Predicated region
        $region13: #{tpu_custom_call.1} parent=11 // pred_check
          %p554 = pneg %p154
        $region14: #{tpu_custom_call.1} parent=11 // pred_check_branch
          %556 = sbr.rel (%p554) target = $region16
        $region15: #{tpu_custom_call.1} parent=11 // pred_region
          %558 = vsyncadd [#allocation9], 0
          %s559 = sshll.u32 %s3, 4
          %s560 = int_to_ptr.hbm [resolvable:$true] %s559
          %s561 = sshll.u32 [#allocation8], 4
          %s562 = int_to_ptr.vmem [resolvable:$true] %s561
          %567 = dma.hbm_to_vmem [thread:$0]  %s560, 2048, %s562, [#allocation9], 128, 128, 8
        $region16: #{tpu_custom_call.1} parent=11 // pred_fallthru
          _
        // Predicated region
        $region17: #{tpu_custom_call.1} parent=11 // pred_check
          %p568 = pneg %p175
        $region18: #{tpu_custom_call.1} parent=11 // pred_check_branch
          %570 = sbr.rel (%p568) target = $region20
        $region19: #{tpu_custom_call.1} parent=11 // pred_region
          %572 = vsyncadd [#allocation9], 0
          %s573 = sshll.u32 %s4, 4
          %s574 = int_to_ptr.hbm [resolvable:$true] %s573
          %s575 = sshll.u32 [#allocation10], 4
          %s576 = int_to_ptr.vmem [resolvable:$true] %s575
          %581 = dma.hbm_to_vmem [thread:$0]  %s574, 2048, %s576, [#allocation9], 128, 128, 8
        $region20: #{tpu_custom_call.1} parent=11 // pred_fallthru
          _
        // Predicated region
        $region21: #{tpu_custom_call.1} parent=11 // pred_check
          %p582 = pneg %p196
        $region22: #{tpu_custom_call.1} parent=11 // pred_check_branch
          %584 = sbr.rel (%p582) target = $region24
        $region23: #{tpu_custom_call.1} parent=11 // pred_region
          %586 = vsyncadd [#allocation12], 0
          %s587 = sshll.u32 %s5, 4
          %s588 = int_to_ptr.hbm [resolvable:$true] %s587
          %s589 = sshll.u32 [#allocation11], 4
          %s590 = int_to_ptr.vmem [resolvable:$true] %s589
          %595 = dma.hbm_to_vmem [thread:$0]  %s588, 2048, %s590, [#allocation12], 128, 128, 8
        $region24: #{tpu_custom_call.1} parent=11 // pred_fallthru
          _
        // Predicated region
        $region25: #{tpu_custom_call.1} parent=11 // pred_check
          %p596 = pneg %p217
        $region26: #{tpu_custom_call.1} parent=11 // pred_check_branch
          %598 = sbr.rel (%p596) target = $region28
        $region27: #{tpu_custom_call.1} parent=11 // pred_region
          %600 = vsyncadd [#allocation12], 0
          %s601 = sshll.u32 %s6, 4
          %s602 = int_to_ptr.hbm [resolvable:$true] %s601
          %s603 = sshll.u32 [#allocation13], 4
          %s604 = int_to_ptr.vmem [resolvable:$true] %s603
          %609 = dma.hbm_to_vmem [thread:$0]  %s602, 2048, %s604, [#allocation12], 128, 128, 8
        $region28: #{tpu_custom_call.1} parent=11 // pred_fallthru
          _
        // Predicated region
        $region29: #{tpu_custom_call.1} parent=11 // pred_check
          %p610 = pneg %p238
        $region30: #{tpu_custom_call.1} parent=11 // pred_check_branch
          %612 = sbr.rel (%p610) target = $region32
        $region31: #{tpu_custom_call.1} parent=11 // pred_region
          %614 = vsyncadd [#allocation15], 0
          %s615 = sshll.u32 %s7, 4
          %s616 = int_to_ptr.hbm [resolvable:$true] %s615
          %s617 = sshll.u32 [#allocation14], 4
          %s618 = int_to_ptr.vmem [resolvable:$true] %s617
          %623 = dma.hbm_to_vmem [thread:$0]  %s616, 2048, %s618, [#allocation15], 128, 128, 8
        $region32: #{tpu_custom_call.1} parent=11 // pred_fallthru
          _
        // Predicated region
        $region33: #{tpu_custom_call.1} parent=11 // pred_check
          %p624 = pneg %p259
        $region34: #{tpu_custom_call.1} parent=11 // pred_check_branch
          %626 = sbr.rel (%p624) target = $region36
        $region35: #{tpu_custom_call.1} parent=11 // pred_region
          %628 = vsyncadd [#allocation15], 0
          %s629 = sshll.u32 %s8, 4
          %s630 = int_to_ptr.hbm [resolvable:$true] %s629
          %s631 = sshll.u32 [#allocation16], 4
          %s632 = int_to_ptr.vmem [resolvable:$true] %s631
          %637 = dma.hbm_to_vmem [thread:$0]  %s630, 2048, %s632, [#allocation15], 128, 128, 8
        $region36: #{tpu_custom_call.1} parent=11 // pred_fallthru
          _
        // Predicated region
        $region37: #{tpu_custom_call.1} parent=11 // pred_check
          %p638 = pneg %p280
        $region38: #{tpu_custom_call.1} parent=11 // pred_check_branch
          %640 = sbr.rel (%p638) target = $region40
        $region39: #{tpu_custom_call.1} parent=11 // pred_region
          %642 = vsyncadd [#allocation18], 0
          %s643 = sshll.u32 %s9, 4
          %s644 = int_to_ptr.hbm [resolvable:$true] %s643
          %s645 = sshll.u32 [#allocation17], 4
          %s646 = int_to_ptr.vmem [resolvable:$true] %s645
          %651 = dma.hbm_to_vmem [thread:$0]  %s644, 2048, %s646, [#allocation18], 128, 128, 8
        $region40: #{tpu_custom_call.1} parent=11 // pred_fallthru
          _
        // Predicated region
        $region41: #{tpu_custom_call.1} parent=11 // pred_check
          %p652 = pneg %p301
        $region42: #{tpu_custom_call.1} parent=11 // pred_check_branch
          %654 = sbr.rel (%p652) target = $region44
        $region43: #{tpu_custom_call.1} parent=11 // pred_region
          %656 = vsyncadd [#allocation18], 0
          %s657 = sshll.u32 %s10, 4
          %s658 = int_to_ptr.hbm [resolvable:$true] %s657
          %s659 = sshll.u32 [#allocation19], 4
          %s660 = int_to_ptr.vmem [resolvable:$true] %s659
          %665 = dma.hbm_to_vmem [thread:$0]  %s658, 2048, %s660, [#allocation18], 128, 128, 8
        $region44: #{tpu_custom_call.1} parent=11 // pred_fallthru
          _
        // Predicated region
        $region45: #{tpu_custom_call.1} parent=11 // pred_check
          %p666 = pneg %p322
        $region46: #{tpu_custom_call.1} parent=11 // pred_check_branch
          %668 = sbr.rel (%p666) target = $region48
        $region47: #{tpu_custom_call.1} parent=11 // pred_region
          _
        $region48: #{tpu_custom_call.1} parent=11 // pred_fallthru
          _
        // Predicated region
        $region49: #{tpu_custom_call.1} parent=11 // pred_check
          %p669 = pneg %p343
        $region50: #{tpu_custom_call.1} parent=11 // pred_check_branch
          %671 = sbr.rel (%p669) target = $region52
        $region51: #{tpu_custom_call.1} parent=11 // pred_region
          _
        $region52: #{tpu_custom_call.1} parent=11 // pred_fallthru
          _
        // Predicated region
        $region53: #{tpu_custom_call.1} parent=11 // pred_check
          %p672 = pneg %p364
        $region54: #{tpu_custom_call.1} parent=11 // pred_check_branch
          %674 = sbr.rel (%p672) target = $region56
        $region55: #{tpu_custom_call.1} parent=11 // pred_region
          _
        $region56: #{tpu_custom_call.1} parent=11 // pred_fallthru
          _
        // Predicated region
        $region57: #{tpu_custom_call.1} parent=11 // pred_check
          %p675 = pneg %p385
        $region58: #{tpu_custom_call.1} parent=11 // pred_check_branch
          %677 = sbr.rel (%p675) target = $region60
        $region59: #{tpu_custom_call.1} parent=11 // pred_region
          _
        $region60: #{tpu_custom_call.1} parent=11 // pred_fallthru
          _
        // Predicated region
        $region61: #{tpu_custom_call.1} parent=11 // pred_check
          %p678 = pneg %p406
        $region62: #{tpu_custom_call.1} parent=11 // pred_check_branch
          %680 = sbr.rel (%p678) target = $region64
        $region63: #{tpu_custom_call.1} parent=11 // pred_region
          _
        $region64: #{tpu_custom_call.1} parent=11 // pred_fallthru
          _
        // Predicated region
        $region65: #{tpu_custom_call.1} parent=11 // pred_check
          %p681 = pneg %p427
        $region66: #{tpu_custom_call.1} parent=11 // pred_check_branch
          %683 = sbr.rel (%p681) target = $region68
        $region67: #{tpu_custom_call.1} parent=11 // pred_region
          _
        $region68: #{tpu_custom_call.1} parent=11 // pred_fallthru
          _
        // Predicated region
        $region69: #{tpu_custom_call.1} parent=11 // pred_check
          %p684 = pneg %p448
        $region70: #{tpu_custom_call.1} parent=11 // pred_check_branch
          %686 = sbr.rel (%p684) target = $region72
        $region71: #{tpu_custom_call.1} parent=11 // pred_region
          %688 = vsyncadd [#allocation21], 0
          %s689 = sshll.u32 %s17, 4
          %s690 = int_to_ptr.hbm [resolvable:$true] %s689
          %s691 = sshll.u32 [#allocation20], 4
          %s692 = int_to_ptr.vmem [resolvable:$true] %s691
          %697 = dma.hbm_to_vmem [thread:$0]  %s690, 2048, %s692, [#allocation21], 128, 128, 8
        $region72: #{tpu_custom_call.1} parent=11 // pred_fallthru
          _
        // Predicated region
        $region73: #{tpu_custom_call.1} parent=11 // pred_check
          %p698 = pneg %p469
        $region74: #{tpu_custom_call.1} parent=11 // pred_check_branch
          %700 = sbr.rel (%p698) target = $region76
        $region75: #{tpu_custom_call.1} parent=11 // pred_region
          _
        $region76: #{tpu_custom_call.1} parent=11 // pred_fallthru
          _
        // Predicated region
        $region77: #{tpu_custom_call.1} parent=11 // pred_check
          %p701 = pneg %p490
        $region78: #{tpu_custom_call.1} parent=11 // pred_check_branch
          %703 = sbr.rel (%p701) target = $region80
        $region79: #{tpu_custom_call.1} parent=11 // pred_region
          %705 = vsyncadd [#allocation21], 0
          %s706 = sshll.u32 %s19, 4
          %s707 = int_to_ptr.hbm [resolvable:$true] %s706
          %s708 = sshll.u32 [#allocation22], 4
          %s709 = int_to_ptr.vmem [resolvable:$true] %s708
          %714 = dma.hbm_to_vmem [thread:$0]  %s707, 2048, %s709, [#allocation21], 128, 128, 8
        $region80: #{tpu_custom_call.1} parent=11 // pred_fallthru
          _
        // Predicated region
        $region81: #{tpu_custom_call.1} parent=11 // pred_check
          %p715 = pneg %p511
        $region82: #{tpu_custom_call.1} parent=11 // pred_check_branch
          %717 = sbr.rel (%p715) target = $region84
        $region83: #{tpu_custom_call.1} parent=11 // pred_region
          _
        $region84: #{tpu_custom_call.1} parent=11 // pred_fallthru
          _
      $region12: #{tpu_custom_call.1} parent=5 // pred_fallthru
        _
      %p718 = scmp.lt.s32.totalorder %s41, 4
      // Predicated region
      $region85: #{tpu_custom_call.1} parent=5 // pred_check
        %p719 = pneg %p718
      $region86: #{tpu_custom_call.1} parent=5 // pred_check_branch
        %721 = sbr.rel (%p719) target = $region88
      $region87: #{tpu_custom_call.1} parent=5 // pred_region
        // Predicated region
        $region89: #{tpu_custom_call.1} parent=87 // pred_check
          %p722 = pneg %p75
        $region90: #{tpu_custom_call.1} parent=87 // pred_check_branch
          %724 = sbr.rel (%p722) target = $region92
        $region91: #{tpu_custom_call.1} parent=87 // pred_region
          %s725 = sand.u32 %s65, 1
          %s726 = scalar_lea.sflag [#allocation3], %s725
          %s727 = sand.u32 %s65, 1
          %s728 = smul.addr %s727, 8
          %s729 = scalar_lea.vmem [#allocation2], %s728
          %731 = vsyncadd %s726, 0
          %s732 = smul.addr %s48, 2
          %s733 = sadd.s32 %s49, %s732
          %s734 = smul.addr %s733, 8
          %s735 = scalar_lea.hbm %s0, %s734
          %s737 = sshll.u32 %s735, 4
          %s738 = int_to_ptr.hbm [resolvable:$true] %s737
          %s739 = sshll.u32 %s729, 4
          %s740 = int_to_ptr.vmem [resolvable:$true] %s739
          %742 = dma.hbm_to_vmem [thread:$0]  %s738, 128, %s740, %s726
        $region92: #{tpu_custom_call.1} parent=87 // pred_fallthru
          _
        // Predicated region
        $region93: #{tpu_custom_call.1} parent=87 // pred_check
          %p743 = pneg %p101
        $region94: #{tpu_custom_call.1} parent=87 // pred_check_branch
          %745 = sbr.rel (%p743) target = $region96
        $region95: #{tpu_custom_call.1} parent=87 // pred_region
          %s746 = sand.u32 %s41, 1
          %s747 = scalar_lea.sflag [#allocation6], %s746
          %s748 = sand.u32 %s91, 1
          %s749 = smul.addr %s748, 16
          %s750 = scalar_lea.vmem [#allocation5], %s749
          %752 = vsyncadd %s747, 0
          %s753 = smul.addr %s48, 2
          %s754 = smul.addr %s753, 8
          %s755 = scalar_lea.hbm %s1, %s754
          %s756 = sshll.u32 %s755, 4
          %s757 = int_to_ptr.hbm [resolvable:$true] %s756
          %s758 = sshll.u32 %s750, 4
          %s759 = int_to_ptr.vmem [resolvable:$true] %s758
          %764 = dma.hbm_to_vmem [thread:$0]  %s757, 256, %s759, %s747, 128, 128, 8
        $region96: #{tpu_custom_call.1} parent=87 // pred_fallthru
          _
        // Predicated region
        $region97: #{tpu_custom_call.1} parent=87 // pred_check
          %p765 = pneg %p127
        $region98: #{tpu_custom_call.1} parent=87 // pred_check_branch
          %767 = sbr.rel (%p765) target = $region100
        $region99: #{tpu_custom_call.1} parent=87 // pred_region
          %s768 = sand.u32 %s41, 1
          %s769 = scalar_lea.sflag [#allocation6], %s768
          %s770 = sand.u32 %s117, 1
          %s771 = smul.addr %s770, 24
          %s772 = scalar_lea.vmem [#allocation7], %s771
          %774 = vsyncadd %s769, 0
          %s775 = smul.addr %s48, 3
          %s776 = smul.addr %s775, 8
          %s777 = scalar_lea.hbm %s2, %s776
          %s778 = sshll.u32 %s777, 4
          %s779 = int_to_ptr.hbm [resolvable:$true] %s778
          %s780 = sshll.u32 %s772, 4
          %s781 = int_to_ptr.vmem [resolvable:$true] %s780
          %786 = dma.hbm_to_vmem [thread:$0]  %s779, 384, %s781, %s769, 128, 128, 8
        $region100: #{tpu_custom_call.1} parent=87 // pred_fallthru
          _
      $region88: #{tpu_custom_call.1} parent=5 // pred_fallthru
        _
      %p787 = scmp.le.s32.totalorder 1, %s41
      %p788 = scmp.lt.s32.totalorder %s41, 5
      %p789 = pnand %p787, %p788
      %p790 = pneg %p789
      // Predicated region
      $region101: #{tpu_custom_call.1} parent=5 // pred_check
        _
      $region102: #{tpu_custom_call.1} parent=5 // pred_check_branch
        %792 = sbr.rel (%p789) target = $region104
      $region103: #{tpu_custom_call.1} parent=5 // pred_region
        %s793 = ssub.s32 %s41, 1
        %s794 = sand.u32 %s68, 1
        %s795 = scalar_lea.sflag [#allocation3], %s794
        %s796 = sand.u32 %s68, 1
        %s797 = smul.addr %s796, 8
        %s798 = scalar_lea.vmem [#allocation2], %s797
        // Predicated region
        $region105: #{tpu_custom_call.1} parent=103 // pred_check
          %p799 = pneg %p81
        $region106: #{tpu_custom_call.1} parent=103 // pred_check_branch
          %801 = sbr.rel (%p799) target = $region108
        $region107: #{tpu_custom_call.1} parent=103 // pred_region
          %803 = dma.done %s795, 128
        $region108: #{tpu_custom_call.1} parent=103 // pred_fallthru
          _
        %s804 = sand.u32 %s46, 1
        %s805 = scalar_lea.sflag [#allocation6], %s804
        %s806 = sand.u32 %s94, 1
        %s807 = smul.addr %s806, 16
        %s808 = scalar_lea.vmem [#allocation5], %s807
        // Predicated region
        $region109: #{tpu_custom_call.1} parent=103 // pred_check
          %p809 = pneg %p107
        $region110: #{tpu_custom_call.1} parent=103 // pred_check_branch
          %811 = sbr.rel (%p809) target = $region112
        $region111: #{tpu_custom_call.1} parent=103 // pred_region
          %813 = dma.done %s805, 256
        $region112: #{tpu_custom_call.1} parent=103 // pred_fallthru
          _
        %s814 = sand.u32 %s46, 1
        %s815 = scalar_lea.sflag [#allocation6], %s814
        %s816 = sand.u32 %s120, 1
        %s817 = smul.addr %s816, 24
        %s818 = scalar_lea.vmem [#allocation7], %s817
        // Predicated region
        $region113: #{tpu_custom_call.1} parent=103 // pred_check
          %p819 = pneg %p133
        $region114: #{tpu_custom_call.1} parent=103 // pred_check_branch
          %821 = sbr.rel (%p819) target = $region116
        $region115: #{tpu_custom_call.1} parent=103 // pred_region
          %823 = dma.done %s815, 384
        $region116: #{tpu_custom_call.1} parent=103 // pred_fallthru
          _
        // Predicated region
        $region117: #{tpu_custom_call.1} parent=103 // pred_check
          %p824 = pneg %p154
        $region118: #{tpu_custom_call.1} parent=103 // pred_check_branch
          %826 = sbr.rel (%p824) target = $region120
        $region119: #{tpu_custom_call.1} parent=103 // pred_region
          %828 = dma.done [#allocation9], 2048
        $region120: #{tpu_custom_call.1} parent=103 // pred_fallthru
          _
        // Predicated region
        $region121: #{tpu_custom_call.1} parent=103 // pred_check
          %p829 = pneg %p175
        $region122: #{tpu_custom_call.1} parent=103 // pred_check_branch
          %831 = sbr.rel (%p829) target = $region124
        $region123: #{tpu_custom_call.1} parent=103 // pred_region
          %833 = dma.done [#allocation9], 2048
        $region124: #{tpu_custom_call.1} parent=103 // pred_fallthru
          _
        // Predicated region
        $region125: #{tpu_custom_call.1} parent=103 // pred_check
          %p834 = pneg %p196
        $region126: #{tpu_custom_call.1} parent=103 // pred_check_branch
          %836 = sbr.rel (%p834) target = $region128
        $region127: #{tpu_custom_call.1} parent=103 // pred_region
          %838 = dma.done [#allocation12], 2048
        $region128: #{tpu_custom_call.1} parent=103 // pred_fallthru
          _
        // Predicated region
        $region129: #{tpu_custom_call.1} parent=103 // pred_check
          %p839 = pneg %p217
        $region130: #{tpu_custom_call.1} parent=103 // pred_check_branch
          %841 = sbr.rel (%p839) target = $region132
        $region131: #{tpu_custom_call.1} parent=103 // pred_region
          %843 = dma.done [#allocation12], 2048
        $region132: #{tpu_custom_call.1} parent=103 // pred_fallthru
          _
        // Predicated region
        $region133: #{tpu_custom_call.1} parent=103 // pred_check
          %p844 = pneg %p238
        $region134: #{tpu_custom_call.1} parent=103 // pred_check_branch
          %846 = sbr.rel (%p844) target = $region136
        $region135: #{tpu_custom_call.1} parent=103 // pred_region
          %848 = dma.done [#allocation15], 2048
        $region136: #{tpu_custom_call.1} parent=103 // pred_fallthru
          _
        // Predicated region
        $region137: #{tpu_custom_call.1} parent=103 // pred_check
          %p849 = pneg %p259
        $region138: #{tpu_custom_call.1} parent=103 // pred_check_branch
          %851 = sbr.rel (%p849) target = $region140
        $region139: #{tpu_custom_call.1} parent=103 // pred_region
          %853 = dma.done [#allocation15], 2048
        $region140: #{tpu_custom_call.1} parent=103 // pred_fallthru
          _
        // Predicated region
        $region141: #{tpu_custom_call.1} parent=103 // pred_check
          %p854 = pneg %p280
        $region142: #{tpu_custom_call.1} parent=103 // pred_check_branch
          %856 = sbr.rel (%p854) target = $region144
        $region143: #{tpu_custom_call.1} parent=103 // pred_region
          %858 = dma.done [#allocation18], 2048
        $region144: #{tpu_custom_call.1} parent=103 // pred_fallthru
          _
        // Predicated region
        $region145: #{tpu_custom_call.1} parent=103 // pred_check
          %p859 = pneg %p301
        $region146: #{tpu_custom_call.1} parent=103 // pred_check_branch
          %861 = sbr.rel (%p859) target = $region148
        $region147: #{tpu_custom_call.1} parent=103 // pred_region
          %863 = dma.done [#allocation18], 2048
        $region148: #{tpu_custom_call.1} parent=103 // pred_fallthru
          _
        // Predicated region
        $region149: #{tpu_custom_call.1} parent=103 // pred_check
          %p864 = pneg %p448
        $region150: #{tpu_custom_call.1} parent=103 // pred_check_branch
          %866 = sbr.rel (%p864) target = $region152
        $region151: #{tpu_custom_call.1} parent=103 // pred_region
          %868 = dma.done [#allocation21], 2048
        $region152: #{tpu_custom_call.1} parent=103 // pred_fallthru
          _
        // Predicated region
        $region153: #{tpu_custom_call.1} parent=103 // pred_check
          %p869 = pneg %p490
        $region154: #{tpu_custom_call.1} parent=103 // pred_check_branch
          %871 = sbr.rel (%p869) target = $region156
        $region155: #{tpu_custom_call.1} parent=103 // pred_region
          %873 = dma.done [#allocation21], 2048
        $region156: #{tpu_custom_call.1} parent=103 // pred_fallthru
          _
        %s874 = sand.u32 %s68, 1
        %s875 = scalar_lea.sflag [#allocation3], %s874
        %s876 = sand.u32 %s68, 1
        %s877 = smul.addr %s876, 8
        %s878 = scalar_lea.vmem [#allocation2], %s877
        %p879 = pneg %p81
        %p880 = pneg %p78
        %s881 = sand.u32 %s46, 1
        %s882 = scalar_lea.sflag [#allocation6], %s881
        %s883 = sand.u32 %s94, 1
        %s884 = smul.addr %s883, 16
        %s885 = scalar_lea.vmem [#allocation5], %s884
        %p886 = pneg %p107
        %p887 = pneg %p104
        %s888 = sand.u32 %s46, 1
        %s889 = scalar_lea.sflag [#allocation6], %s888
        %s890 = sand.u32 %s120, 1
        %s891 = smul.addr %s890, 24
        %s892 = scalar_lea.vmem [#allocation7], %s891
        %p893 = pneg %p133
        %p894 = pneg %p130
        %p895 = pneg %p154
        %p896 = pneg %p151
        %p897 = pneg %p175
        %p898 = pneg %p172
        %p899 = pneg %p196
        %p900 = pneg %p193
        %p901 = pneg %p217
        %p902 = pneg %p214
        %p903 = pneg %p238
        %p904 = pneg %p235
        %p905 = pneg %p259
        %p906 = pneg %p256
        %p907 = pneg %p280
        %p908 = pneg %p277
        %p909 = pneg %p301
        %p910 = pneg %p298
        %p911 = pneg %p322
        %p912 = pneg %p319
        %p913 = pneg %p343
        %p914 = pneg %p340
        %p915 = pneg %p364
        %p916 = pneg %p361
        %p917 = pneg %p385
        %p918 = pneg %p382
        %p919 = pneg %p406
        %p920 = pneg %p403
        %p921 = pneg %p427
        %p922 = pneg %p424
        %p923 = pneg %p448
        %p924 = pneg %p445
        %p925 = pneg %p469
        %p926 = pneg %p466
        %p927 = pneg %p490
        %p928 = pneg %p487
        %p929 = pneg %p511
        %p930 = pneg %p508
        %p931 = pneg %p539
        %p932 = pneg %p536
        %s933 = sand.u32 %s526, 1
        %s934 = scalar_lea.sflag [#allocation4], %s933
        %s935 = sand.u32 %s526, 1
        %s936 = smul.addr %s935, 8
        %s937 = scalar_lea.vmem [#allocation23], %s936
        %v938 = vld [vmem:[%s798] sm:$0xff]
        %v939 = vld [vmem:[%s808] sm:$0xff]
        %v940 = vld [vmem:[%s808 + $0x8] sm:$0xff]
        %v941 = vld [vmem:[%s818] sm:$0xff]
        %v942 = vld [vmem:[%s818 + $0x8] sm:$0xff]
        %v943 = vld [vmem:[%s818 + $0x10] sm:$0xff]
        %v944 = vld [vmem:[#allocation8] sm:$0xff]
        %v945 = vld [vmem:[#allocation8 + $0x8] sm:$0xff]
        %v946 = vld [vmem:[#allocation8 + $0x10] sm:$0xff]
        %v947 = vld [vmem:[#allocation8 + $0x18] sm:$0xff]
        %v948 = vld [vmem:[#allocation8 + $0x20] sm:$0xff]
        %v949 = vld [vmem:[#allocation8 + $0x28] sm:$0xff]
        %v950 = vld [vmem:[#allocation8 + $0x30] sm:$0xff]
        %v951 = vld [vmem:[#allocation8 + $0x38] sm:$0xff]
        %v952 = vld [vmem:[#allocation8 + $0x40] sm:$0xff]
        %v953 = vld [vmem:[#allocation8 + $0x48] sm:$0xff]
        %v954 = vld [vmem:[#allocation8 + $0x50] sm:$0xff]
        %v955 = vld [vmem:[#allocation8 + $0x58] sm:$0xff]
        %v956 = vld [vmem:[#allocation8 + $0x60] sm:$0xff]
        %v957 = vld [vmem:[#allocation8 + $0x68] sm:$0xff]
        %v958 = vld [vmem:[#allocation8 + $0x70] sm:$0xff]
        %v959 = vld [vmem:[#allocation8 + $0x78] sm:$0xff]
        %v960 = vld [vmem:[#allocation10] sm:$0xff]
        %v961 = vld [vmem:[#allocation10 + $0x8] sm:$0xff]
        %v962 = vld [vmem:[#allocation10 + $0x10] sm:$0xff]
        %v963 = vld [vmem:[#allocation10 + $0x18] sm:$0xff]
        %v964 = vld [vmem:[#allocation10 + $0x20] sm:$0xff]
        %v965 = vld [vmem:[#allocation10 + $0x28] sm:$0xff]
        %v966 = vld [vmem:[#allocation10 + $0x30] sm:$0xff]
        %v967 = vld [vmem:[#allocation10 + $0x38] sm:$0xff]
        %v968 = vld [vmem:[#allocation10 + $0x40] sm:$0xff]
        %v969 = vld [vmem:[#allocation10 + $0x48] sm:$0xff]
        %v970 = vld [vmem:[#allocation10 + $0x50] sm:$0xff]
        %v971 = vld [vmem:[#allocation10 + $0x58] sm:$0xff]
        %v972 = vld [vmem:[#allocation10 + $0x60] sm:$0xff]
        %v973 = vld [vmem:[#allocation10 + $0x68] sm:$0xff]
        %v974 = vld [vmem:[#allocation10 + $0x70] sm:$0xff]
        %v975 = vld [vmem:[#allocation10 + $0x78] sm:$0xff]
        %v976 = vld [vmem:[#allocation11] sm:$0xff]
        %v977 = vld [vmem:[#allocation11 + $0x8] sm:$0xff]
        %v978 = vld [vmem:[#allocation11 + $0x10] sm:$0xff]
        %v979 = vld [vmem:[#allocation11 + $0x18] sm:$0xff]
        %v980 = vld [vmem:[#allocation11 + $0x20] sm:$0xff]
        %v981 = vld [vmem:[#allocation11 + $0x28] sm:$0xff]
        %v982 = vld [vmem:[#allocation11 + $0x30] sm:$0xff]
        %v983 = vld [vmem:[#allocation11 + $0x38] sm:$0xff]
        %v984 = vld [vmem:[#allocation11 + $0x40] sm:$0xff]
        %v985 = vld [vmem:[#allocation11 + $0x48] sm:$0xff]
        %v986 = vld [vmem:[#allocation11 + $0x50] sm:$0xff]
        %v987 = vld [vmem:[#allocation11 + $0x58] sm:$0xff]
        %v988 = vld [vmem:[#allocation11 + $0x60] sm:$0xff]
        %v989 = vld [vmem:[#allocation11 + $0x68] sm:$0xff]
        %v990 = vld [vmem:[#allocation11 + $0x70] sm:$0xff]
        %v991 = vld [vmem:[#allocation11 + $0x78] sm:$0xff]
        %v992 = vld [vmem:[#allocation13] sm:$0xff]
        %v993 = vld [vmem:[#allocation13 + $0x8] sm:$0xff]
        %v994 = vld [vmem:[#allocation13 + $0x10] sm:$0xff]
        %v995 = vld [vmem:[#allocation13 + $0x18] sm:$0xff]
        %v996 = vld [vmem:[#allocation13 + $0x20] sm:$0xff]
        %v997 = vld [vmem:[#allocation13 + $0x28] sm:$0xff]
        %v998 = vld [vmem:[#allocation13 + $0x30] sm:$0xff]
        %v999 = vld [vmem:[#allocation13 + $0x38] sm:$0xff]
        %v1000 = vld [vmem:[#allocation13 + $0x40] sm:$0xff]
        %v1001 = vld [vmem:[#allocation13 + $0x48] sm:$0xff]
        %v1002 = vld [vmem:[#allocation13 + $0x50] sm:$0xff]
        %v1003 = vld [vmem:[#allocation13 + $0x58] sm:$0xff]
        %v1004 = vld [vmem:[#allocation13 + $0x60] sm:$0xff]
        %v1005 = vld [vmem:[#allocation13 + $0x68] sm:$0xff]
        %v1006 = vld [vmem:[#allocation13 + $0x70] sm:$0xff]
        %v1007 = vld [vmem:[#allocation13 + $0x78] sm:$0xff]
        %1008 = vmatpush.msra.mxu0 %v959
        %1009 = vmatpush.msra.mxu0 %v958
        %1010 = vmatpush.msra.mxu0 %v957
        %1011 = vmatpush.msra.mxu0 %v956
        %1012 = vmatpush.msra.mxu0 %v955
        %1013 = vmatpush.msra.mxu0 %v954
        %1014 = vmatpush.msra.mxu0 %v953
        %1015 = vmatpush.msra.mxu0 %v952
        %1016 = vmatpush.msra.mxu0 %v951
        %1017 = vmatpush.msra.mxu0 %v950
        %1018 = vmatpush.msra.mxu0 %v949
        %1019 = vmatpush.msra.mxu0 %v948
        %1020 = vmatpush.msra.mxu0 %v947
        %1021 = vmatpush.msra.mxu0 %v946
        %1022 = vmatpush.msra.mxu0 %v945
        %1023 = vmatpush.msra.mxu0 %v944
        %1024 = vmatmul.f32.gmra.mxu0 %v938
        %v1025 = vpop.f32.mrf.mxu0
        %v1026 = vadd.f32 0.0, %v1025
        %1027 = vdwg.mxu0
        %1028 = vmatpush.msra.mxu0 %v975
        %1029 = vmatpush.msra.mxu0 %v974
        %1030 = vmatpush.msra.mxu0 %v973
        %1031 = vmatpush.msra.mxu0 %v972
        %1032 = vmatpush.msra.mxu0 %v971
        %1033 = vmatpush.msra.mxu0 %v970
        %1034 = vmatpush.msra.mxu0 %v969
        %1035 = vmatpush.msra.mxu0 %v968
        %1036 = vmatpush.msra.mxu0 %v967
        %1037 = vmatpush.msra.mxu0 %v966
        %1038 = vmatpush.msra.mxu0 %v965
        %1039 = vmatpush.msra.mxu0 %v964
        %1040 = vmatpush.msra.mxu0 %v963
        %1041 = vmatpush.msra.mxu0 %v962
        %1042 = vmatpush.msra.mxu0 %v961
        %1043 = vmatpush.msra.mxu0 %v960
        %1044 = vmatmul.f32.gmra.mxu0 %v939
        %v1045 = vpop.f32.mrf.mxu0
        %v1046 = vadd.f32 0.0, %v1045
        %1047 = vmatmul.f32.gmra.mxu0 %v940
        %v1048 = vpop.f32.mrf.mxu0
        %v1049 = vadd.f32 0.0, %v1048
        %1050 = vdwg.mxu0
        %1051 = vmatpush.msra.mxu0 %v991
        %1052 = vmatpush.msra.mxu0 %v990
        %1053 = vmatpush.msra.mxu0 %v989
        %1054 = vmatpush.msra.mxu0 %v988
        %1055 = vmatpush.msra.mxu0 %v987
        %1056 = vmatpush.msra.mxu0 %v986
        %1057 = vmatpush.msra.mxu0 %v985
        %1058 = vmatpush.msra.mxu0 %v984
        %1059 = vmatpush.msra.mxu0 %v983
        %1060 = vmatpush.msra.mxu0 %v982
        %1061 = vmatpush.msra.mxu0 %v981
        %1062 = vmatpush.msra.mxu0 %v980
        %1063 = vmatpush.msra.mxu0 %v979
        %1064 = vmatpush.msra.mxu0 %v978
        %1065 = vmatpush.msra.mxu0 %v977
        %1066 = vmatpush.msra.mxu0 %v976
        %1067 = vmatmul.f32.gmra.mxu0 %v939
        %v1068 = vpop.f32.mrf.mxu0
        %v1069 = vadd.f32 0.0, %v1068
        %1070 = vmatmul.f32.gmra.mxu0 %v940
        %v1071 = vpop.f32.mrf.mxu0
        %v1072 = vadd.f32 0.0, %v1071
        %1073 = vdwg.mxu0
        %1074 = vmatpush.xpose.msra.mxu0 0.0
        %1075 = vmatpush.xpose.msra.mxu0 0.0
        %1076 = vmatpush.xpose.msra.mxu0 0.0
        %1077 = vmatpush.xpose.msra.mxu0 0.0
        %1078 = vmatpush.xpose.msra.mxu0 0.0
        %1079 = vmatpush.xpose.msra.mxu0 0.0
        %1080 = vmatpush.xpose.msra.mxu0 0.0
        %1081 = vmatpush.xpose.msra.mxu0 0.0
        %1082 = vmatpush.xpose.msra.mxu0 0.0
        %1083 = vmatpush.xpose.msra.mxu0 0.0
        %1084 = vmatpush.xpose.msra.mxu0 0.0
        %1085 = vmatpush.xpose.msra.mxu0 0.0
        %1086 = vmatpush.xpose.msra.mxu0 0.0
        %1087 = vmatpush.xpose.msra.mxu0 0.0
        %1088 = vmatpush.xpose.msra.mxu0 %v1049
        %1089 = vmatpush.xpose.msra.mxu0 %v1046
        %1090 = vmatmul.f32.gmra.mxu0 %v1026
        %v1091 = vpop.f32.mrf.mxu0
        %v1092 = vadd.f32 0.0, %v1091
        %1093 = vdwg.mxu0
        %v1094 = vmul.f32 %v1092, 0.088388346
        %vm1095 = vcmask 130048
        %v1096 = vsel %vm1095, %v1094, -inf
        %1097 = vmax.xlane.f32.xlu0 %v1096
        %v1098 = vpop.xlane.xlu0 %1097
        %v1099 = vsub.f32 %v1094, %v1098
        %v1100 = vmul.f32 %v1099, 1.442695
        %v1101 = vpow.pop %v1100
        %v1102 = vsel %vm1095, %v1101, 0.0
        %1103 = vadd.xlane.f32.xlu0 %v1102
        %v1104 = vpop.xlane.xlu0 %1103
        %v1105 = vrcp.pop %v1104
        %v1106 = vmul.f32 %v1101, %v1105
        %v1108 = vsel %vm1095, %v1106, 0
        %1110 = vmatpush.msra.mxu0 0.0
        %1111 = vmatpush.msra.mxu0 0.0
        %1112 = vmatpush.msra.mxu0 0.0
        %1113 = vmatpush.msra.mxu0 0.0
        %1114 = vmatpush.msra.mxu0 0.0
        %1115 = vmatpush.msra.mxu0 0.0
        %1116 = vmatpush.msra.mxu0 0.0
        %1117 = vmatpush.msra.mxu0 0.0
        %1118 = vmatpush.msra.mxu0 0.0
        %1119 = vmatpush.msra.mxu0 0.0
        %1120 = vmatpush.msra.mxu0 0.0
        %1121 = vmatpush.msra.mxu0 0.0
        %1122 = vmatpush.msra.mxu0 0.0
        %1123 = vmatpush.msra.mxu0 0.0
        %1124 = vmatpush.msra.mxu0 %v1072
        %1125 = vmatpush.msra.mxu0 %v1069
        %1126 = vmatmul.f32.gmra.mxu0 %v1108
        %v1127 = vpop.f32.mrf.mxu0
        %v1128 = vadd.f32 0.0, %v1127
        %1129 = vdwg.mxu0
        %1130 = vmatpush.msra.mxu0 %v1007
        %1131 = vmatpush.msra.mxu0 %v1006
        %1132 = vmatpush.msra.mxu0 %v1005
        %1133 = vmatpush.msra.mxu0 %v1004
        %1134 = vmatpush.msra.mxu0 %v1003
        %1135 = vmatpush.msra.mxu0 %v1002
        %1136 = vmatpush.msra.mxu0 %v1001
        %1137 = vmatpush.msra.mxu0 %v1000
        %1138 = vmatpush.msra.mxu0 %v999
        %1139 = vmatpush.msra.mxu0 %v998
        %1140 = vmatpush.msra.mxu0 %v997
        %1141 = vmatpush.msra.mxu0 %v996
        %1142 = vmatpush.msra.mxu0 %v995
        %1143 = vmatpush.msra.mxu0 %v994
        %1144 = vmatpush.msra.mxu0 %v993
        %1145 = vmatpush.msra.mxu0 %v992
        %1146 = vmatmul.f32.gmra.mxu0 %v1128
        %v1147 = vpop.f32.mrf.mxu0
        %v1148 = vadd.f32 %v938, %v1147
        %1149 = vdwg.mxu0
        %v1150 = vld [vmem:[%s11] sm:$0x1]
        %v1151 = vld [vmem:[%s12] sm:$0x1]
        %1152 = vadd.xlane.f32.xlu0 %v1148
        %v1153 = vpop.xlane.xlu0 %1152
        %v1154 = vrcp.pop 128.0
        %v1155 = vmul.f32 128.0, %v1154
        %v1156 = vsub.f32 1.0, %v1155
        %v1157 = vmul.f32 %v1154, %v1156
        %v1158 = vadd.f32 %v1154, %v1157
        %vm1159 = vweird.f32 %v1154
        %v1160 = vsel %vm1159, %v1154, %v1158
        %v1161 = vmul.f32 %v1153, %v1160
        %v1162 = vsub.f32 %v1148, %v1161
        %v1163 = vmul.f32 %v1162, %v1162
        %1164 = vadd.xlane.f32.xlu0 %v1163
        %v1165 = vpop.xlane.xlu0 %1164
        %v1166 = vmul.f32 %v1165, %v1160
        %v1167 = vadd.f32 %v1166, 1e-05
        %v1168 = vrsqrt.pop %v1167
        %v1169 = vmul.f32 %v1168, %v1167
        %v1170 = vmul.f32 %v1169, %v1168
        %v1171 = vmul.f32 0.5, %v1170
        %v1172 = vsub.f32 1.5, %v1171
        %v1173 = vmul.f32 %v1168, %v1172
        %vm1174 = vweird.f32 %v1167
        %vm1175 = vweird.f32 %v1168
        %vm1176 = vmor %vm1174, %vm1175
        %v1177 = vsel %vm1176, %v1168, %v1173
        %v1178 = vmul.f32 %v1162, %v1177
        %v1180 = vperm.slane %v1150, 0
        %v1182 = vmul.f32 %v1178, %v1180
        %v1184 = vperm.slane %v1151, 0
        %v1186 = vadd.f32 %v1182, %v1184
        %v1187 = vld [vmem:[#allocation14] sm:$0xff]
        %v1188 = vld [vmem:[#allocation14 + $0x8] sm:$0xff]
        %v1189 = vld [vmem:[#allocation14 + $0x10] sm:$0xff]
        %v1190 = vld [vmem:[#allocation14 + $0x18] sm:$0xff]
        %v1191 = vld [vmem:[#allocation14 + $0x20] sm:$0xff]
        %v1192 = vld [vmem:[#allocation14 + $0x28] sm:$0xff]
        %v1193 = vld [vmem:[#allocation14 + $0x30] sm:$0xff]
        %v1194 = vld [vmem:[#allocation14 + $0x38] sm:$0xff]
        %v1195 = vld [vmem:[#allocation14 + $0x40] sm:$0xff]
        %v1196 = vld [vmem:[#allocation14 + $0x48] sm:$0xff]
        %v1197 = vld [vmem:[#allocation14 + $0x50] sm:$0xff]
        %v1198 = vld [vmem:[#allocation14 + $0x58] sm:$0xff]
        %v1199 = vld [vmem:[#allocation14 + $0x60] sm:$0xff]
        %v1200 = vld [vmem:[#allocation14 + $0x68] sm:$0xff]
        %v1201 = vld [vmem:[#allocation14 + $0x70] sm:$0xff]
        %v1202 = vld [vmem:[#allocation14 + $0x78] sm:$0xff]
        %v1203 = vld [vmem:[#allocation16] sm:$0xff]
        %v1204 = vld [vmem:[#allocation16 + $0x8] sm:$0xff]
        %v1205 = vld [vmem:[#allocation16 + $0x10] sm:$0xff]
        %v1206 = vld [vmem:[#allocation16 + $0x18] sm:$0xff]
        %v1207 = vld [vmem:[#allocation16 + $0x20] sm:$0xff]
        %v1208 = vld [vmem:[#allocation16 + $0x28] sm:$0xff]
        %v1209 = vld [vmem:[#allocation16 + $0x30] sm:$0xff]
        %v1210 = vld [vmem:[#allocation16 + $0x38] sm:$0xff]
        %v1211 = vld [vmem:[#allocation16 + $0x40] sm:$0xff]
        %v1212 = vld [vmem:[#allocation16 + $0x48] sm:$0xff]
        %v1213 = vld [vmem:[#allocation16 + $0x50] sm:$0xff]
        %v1214 = vld [vmem:[#allocation16 + $0x58] sm:$0xff]
        %v1215 = vld [vmem:[#allocation16 + $0x60] sm:$0xff]
        %v1216 = vld [vmem:[#allocation16 + $0x68] sm:$0xff]
        %v1217 = vld [vmem:[#allocation16 + $0x70] sm:$0xff]
        %v1218 = vld [vmem:[#allocation16 + $0x78] sm:$0xff]
        %v1219 = vld [vmem:[#allocation17] sm:$0xff]
        %v1220 = vld [vmem:[#allocation17 + $0x8] sm:$0xff]
        %v1221 = vld [vmem:[#allocation17 + $0x10] sm:$0xff]
        %v1222 = vld [vmem:[#allocation17 + $0x18] sm:$0xff]
        %v1223 = vld [vmem:[#allocation17 + $0x20] sm:$0xff]
        %v1224 = vld [vmem:[#allocation17 + $0x28] sm:$0xff]
        %v1225 = vld [vmem:[#allocation17 + $0x30] sm:$0xff]
        %v1226 = vld [vmem:[#allocation17 + $0x38] sm:$0xff]
        %v1227 = vld [vmem:[#allocation17 + $0x40] sm:$0xff]
        %v1228 = vld [vmem:[#allocation17 + $0x48] sm:$0xff]
        %v1229 = vld [vmem:[#allocation17 + $0x50] sm:$0xff]
        %v1230 = vld [vmem:[#allocation17 + $0x58] sm:$0xff]
        %v1231 = vld [vmem:[#allocation17 + $0x60] sm:$0xff]
        %v1232 = vld [vmem:[#allocation17 + $0x68] sm:$0xff]
        %v1233 = vld [vmem:[#allocation17 + $0x70] sm:$0xff]
        %v1234 = vld [vmem:[#allocation17 + $0x78] sm:$0xff]
        %v1235 = vld [vmem:[#allocation19] sm:$0xff]
        %v1236 = vld [vmem:[#allocation19 + $0x8] sm:$0xff]
        %v1237 = vld [vmem:[#allocation19 + $0x10] sm:$0xff]
        %v1238 = vld [vmem:[#allocation19 + $0x18] sm:$0xff]
        %v1239 = vld [vmem:[#allocation19 + $0x20] sm:$0xff]
        %v1240 = vld [vmem:[#allocation19 + $0x28] sm:$0xff]
        %v1241 = vld [vmem:[#allocation19 + $0x30] sm:$0xff]
        %v1242 = vld [vmem:[#allocation19 + $0x38] sm:$0xff]
        %v1243 = vld [vmem:[#allocation19 + $0x40] sm:$0xff]
        %v1244 = vld [vmem:[#allocation19 + $0x48] sm:$0xff]
        %v1245 = vld [vmem:[#allocation19 + $0x50] sm:$0xff]
        %v1246 = vld [vmem:[#allocation19 + $0x58] sm:$0xff]
        %v1247 = vld [vmem:[#allocation19 + $0x60] sm:$0xff]
        %v1248 = vld [vmem:[#allocation19 + $0x68] sm:$0xff]
        %v1249 = vld [vmem:[#allocation19 + $0x70] sm:$0xff]
        %v1250 = vld [vmem:[#allocation19 + $0x78] sm:$0xff]
        %1251 = vmatpush.msra.mxu0 %v1202
        %1252 = vmatpush.msra.mxu0 %v1201
        %1253 = vmatpush.msra.mxu0 %v1200
        %1254 = vmatpush.msra.mxu0 %v1199
        %1255 = vmatpush.msra.mxu0 %v1198
        %1256 = vmatpush.msra.mxu0 %v1197
        %1257 = vmatpush.msra.mxu0 %v1196
        %1258 = vmatpush.msra.mxu0 %v1195
        %1259 = vmatpush.msra.mxu0 %v1194
        %1260 = vmatpush.msra.mxu0 %v1193
        %1261 = vmatpush.msra.mxu0 %v1192
        %1262 = vmatpush.msra.mxu0 %v1191
        %1263 = vmatpush.msra.mxu0 %v1190
        %1264 = vmatpush.msra.mxu0 %v1189
        %1265 = vmatpush.msra.mxu0 %v1188
        %1266 = vmatpush.msra.mxu0 %v1187
        %1267 = vmatmul.f32.gmra.mxu0 %v1186
        %v1268 = vpop.f32.mrf.mxu0
        %v1269 = vadd.f32 0.0, %v1268
        %1270 = vdwg.mxu0
        %1271 = vmatpush.msra.mxu0 %v1218
        %1272 = vmatpush.msra.mxu0 %v1217
        %1273 = vmatpush.msra.mxu0 %v1216
        %1274 = vmatpush.msra.mxu0 %v1215
        %1275 = vmatpush.msra.mxu0 %v1214
        %1276 = vmatpush.msra.mxu0 %v1213
        %1277 = vmatpush.msra.mxu0 %v1212
        %1278 = vmatpush.msra.mxu0 %v1211
        %1279 = vmatpush.msra.mxu0 %v1210
        %1280 = vmatpush.msra.mxu0 %v1209
        %1281 = vmatpush.msra.mxu0 %v1208
        %1282 = vmatpush.msra.mxu0 %v1207
        %1283 = vmatpush.msra.mxu0 %v1206
        %1284 = vmatpush.msra.mxu0 %v1205
        %1285 = vmatpush.msra.mxu0 %v1204
        %1286 = vmatpush.msra.mxu0 %v1203
        %1287 = vmatmul.f32.gmra.mxu0 %v941
        %v1288 = vpop.f32.mrf.mxu0
        %v1289 = vadd.f32 0.0, %v1288
        %1290 = vmatmul.f32.gmra.mxu0 %v942
        %v1291 = vpop.f32.mrf.mxu0
        %v1292 = vadd.f32 0.0, %v1291
        %1293 = vmatmul.f32.gmra.mxu0 %v943
        %v1294 = vpop.f32.mrf.mxu0
        %v1295 = vadd.f32 0.0, %v1294
        %1296 = vdwg.mxu0
        %1297 = vmatpush.msra.mxu0 %v1234
        %1298 = vmatpush.msra.mxu0 %v1233
        %1299 = vmatpush.msra.mxu0 %v1232
        %1300 = vmatpush.msra.mxu0 %v1231
        %1301 = vmatpush.msra.mxu0 %v1230
        %1302 = vmatpush.msra.mxu0 %v1229
        %1303 = vmatpush.msra.mxu0 %v1228
        %1304 = vmatpush.msra.mxu0 %v1227
        %1305 = vmatpush.msra.mxu0 %v1226
        %1306 = vmatpush.msra.mxu0 %v1225
        %1307 = vmatpush.msra.mxu0 %v1224
        %1308 = vmatpush.msra.mxu0 %v1223
        %1309 = vmatpush.msra.mxu0 %v1222
        %1310 = vmatpush.msra.mxu0 %v1221
        %1311 = vmatpush.msra.mxu0 %v1220
        %1312 = vmatpush.msra.mxu0 %v1219
        %1313 = vmatmul.f32.gmra.mxu0 %v941
        %v1314 = vpop.f32.mrf.mxu0
        %v1315 = vadd.f32 0.0, %v1314
        %1316 = vmatmul.f32.gmra.mxu0 %v942
        %v1317 = vpop.f32.mrf.mxu0
        %v1318 = vadd.f32 0.0, %v1317
        %1319 = vmatmul.f32.gmra.mxu0 %v943
        %v1320 = vpop.f32.mrf.mxu0
        %v1321 = vadd.f32 0.0, %v1320
        %1322 = vdwg.mxu0
        %1323 = vmatpush.xpose.msra.mxu0 0.0
        %1324 = vmatpush.xpose.msra.mxu0 0.0
        %1325 = vmatpush.xpose.msra.mxu0 0.0
        %1326 = vmatpush.xpose.msra.mxu0 0.0
        %1327 = vmatpush.xpose.msra.mxu0 0.0
        %1328 = vmatpush.xpose.msra.mxu0 0.0
        %1329 = vmatpush.xpose.msra.mxu0 0.0
        %1330 = vmatpush.xpose.msra.mxu0 0.0
        %1331 = vmatpush.xpose.msra.mxu0 0.0
        %1332 = vmatpush.xpose.msra.mxu0 0.0
        %1333 = vmatpush.xpose.msra.mxu0 0.0
        %1334 = vmatpush.xpose.msra.mxu0 0.0
        %1335 = vmatpush.xpose.msra.mxu0 0.0
        %1336 = vmatpush.xpose.msra.mxu0 %v1295
        %1337 = vmatpush.xpose.msra.mxu0 %v1292
        %1338 = vmatpush.xpose.msra.mxu0 %v1289
        %1339 = vmatmul.f32.gmra.mxu0 %v1269
        %v1340 = vpop.f32.mrf.mxu0
        %v1341 = vadd.f32 0.0, %v1340
        %1342 = vdwg.mxu0
        %v1343 = vmul.f32 %v1341, 0.088388346
        %vm1344 = vcmask 195584
        %v1345 = vsel %vm1344, %v1343, -inf
        %1346 = vmax.xlane.f32.xlu0 %v1345
        %v1347 = vpop.xlane.xlu0 %1346
        %v1348 = vsub.f32 %v1343, %v1347
        %v1349 = vmul.f32 %v1348, 1.442695
        %v1350 = vpow.pop %v1349
        %v1351 = vsel %vm1344, %v1350, 0.0
        %1352 = vadd.xlane.f32.xlu0 %v1351
        %v1353 = vpop.xlane.xlu0 %1352
        %v1354 = vrcp.pop %v1353
        %v1355 = vmul.f32 %v1350, %v1354
        %v1357 = vsel %vm1344, %v1355, 0
        %1359 = vmatpush.msra.mxu0 0.0
        %1360 = vmatpush.msra.mxu0 0.0
        %1361 = vmatpush.msra.mxu0 0.0
        %1362 = vmatpush.msra.mxu0 0.0
        %1363 = vmatpush.msra.mxu0 0.0
        %1364 = vmatpush.msra.mxu0 0.0
        %1365 = vmatpush.msra.mxu0 0.0
        %1366 = vmatpush.msra.mxu0 0.0
        %1367 = vmatpush.msra.mxu0 0.0
        %1368 = vmatpush.msra.mxu0 0.0
        %1369 = vmatpush.msra.mxu0 0.0
        %1370 = vmatpush.msra.mxu0 0.0
        %1371 = vmatpush.msra.mxu0 0.0
        %1372 = vmatpush.msra.mxu0 %v1321
        %1373 = vmatpush.msra.mxu0 %v1318
        %1374 = vmatpush.msra.mxu0 %v1315
        %1375 = vmatmul.f32.gmra.mxu0 %v1357
        %v1376 = vpop.f32.mrf.mxu0
        %v1377 = vadd.f32 0.0, %v1376
        %1378 = vdwg.mxu0
        %1379 = vmatpush.msra.mxu0 %v1250
        %1380 = vmatpush.msra.mxu0 %v1249
        %1381 = vmatpush.msra.mxu0 %v1248
        %1382 = vmatpush.msra.mxu0 %v1247
        %1383 = vmatpush.msra.mxu0 %v1246
        %1384 = vmatpush.msra.mxu0 %v1245
        %1385 = vmatpush.msra.mxu0 %v1244
        %1386 = vmatpush.msra.mxu0 %v1243
        %1387 = vmatpush.msra.mxu0 %v1242
        %1388 = vmatpush.msra.mxu0 %v1241
        %1389 = vmatpush.msra.mxu0 %v1240
        %1390 = vmatpush.msra.mxu0 %v1239
        %1391 = vmatpush.msra.mxu0 %v1238
        %1392 = vmatpush.msra.mxu0 %v1237
        %1393 = vmatpush.msra.mxu0 %v1236
        %1394 = vmatpush.msra.mxu0 %v1235
        %1395 = vmatmul.f32.gmra.mxu0 %v1377
        %v1396 = vpop.f32.mrf.mxu0
        %v1397 = vadd.f32 %v1186, %v1396
        %1398 = vdwg.mxu0
        %v1399 = vld [vmem:[%s13] sm:$0x1]
        %v1400 = vld [vmem:[%s14] sm:$0x1]
        %1401 = vadd.xlane.f32.xlu0 %v1397
        %v1402 = vpop.xlane.xlu0 %1401
        %v1403 = vmul.f32 %v1402, %v1160
        %v1404 = vsub.f32 %v1397, %v1403
        %v1405 = vmul.f32 %v1404, %v1404
        %1406 = vadd.xlane.f32.xlu0 %v1405
        %v1407 = vpop.xlane.xlu0 %1406
        %v1408 = vmul.f32 %v1407, %v1160
        %v1409 = vadd.f32 %v1408, 1e-05
        %v1410 = vrsqrt.pop %v1409
        %v1411 = vmul.f32 %v1410, %v1409
        %v1412 = vmul.f32 %v1411, %v1410
        %v1413 = vmul.f32 0.5, %v1412
        %v1414 = vsub.f32 1.5, %v1413
        %v1415 = vmul.f32 %v1410, %v1414
        %vm1416 = vweird.f32 %v1409
        %vm1417 = vweird.f32 %v1410
        %vm1418 = vmor %vm1416, %vm1417
        %v1419 = vsel %vm1418, %v1410, %v1415
        %v1420 = vmul.f32 %v1404, %v1419
        %v1422 = vperm.slane %v1399, 0
        %v1424 = vmul.f32 %v1420, %v1422
        %v1426 = vperm.slane %v1400, 0
        %v1428 = vadd.f32 %v1424, %v1426
        %v1429 = vld [vmem:[#allocation20] sm:$0xff]
        %v1430 = vld [vmem:[#allocation20 + $0x8] sm:$0xff]
        %v1431 = vld [vmem:[#allocation20 + $0x10] sm:$0xff]
        %v1432 = vld [vmem:[#allocation20 + $0x18] sm:$0xff]
        %v1433 = vld [vmem:[#allocation20 + $0x20] sm:$0xff]
        %v1434 = vld [vmem:[#allocation20 + $0x28] sm:$0xff]
        %v1435 = vld [vmem:[#allocation20 + $0x30] sm:$0xff]
        %v1436 = vld [vmem:[#allocation20 + $0x38] sm:$0xff]
        %v1437 = vld [vmem:[#allocation20 + $0x40] sm:$0xff]
        %v1438 = vld [vmem:[#allocation20 + $0x48] sm:$0xff]
        %v1439 = vld [vmem:[#allocation20 + $0x50] sm:$0xff]
        %v1440 = vld [vmem:[#allocation20 + $0x58] sm:$0xff]
        %v1441 = vld [vmem:[#allocation20 + $0x60] sm:$0xff]
        %v1442 = vld [vmem:[#allocation20 + $0x68] sm:$0xff]
        %v1443 = vld [vmem:[#allocation20 + $0x70] sm:$0xff]
        %v1444 = vld [vmem:[#allocation20 + $0x78] sm:$0xff]
        %v1445 = vld [vmem:[%s18] sm:$0x1]
        %v1447 = vperm.slane %v1445, 0
        %1449 = vmatpush.msra.mxu0 %v1444
        %1450 = vmatpush.msra.mxu0 %v1443
        %1451 = vmatpush.msra.mxu0 %v1442
        %1452 = vmatpush.msra.mxu0 %v1441
        %1453 = vmatpush.msra.mxu0 %v1440
        %1454 = vmatpush.msra.mxu0 %v1439
        %1455 = vmatpush.msra.mxu0 %v1438
        %1456 = vmatpush.msra.mxu0 %v1437
        %1457 = vmatpush.msra.mxu0 %v1436
        %1458 = vmatpush.msra.mxu0 %v1435
        %1459 = vmatpush.msra.mxu0 %v1434
        %1460 = vmatpush.msra.mxu0 %v1433
        %1461 = vmatpush.msra.mxu0 %v1432
        %1462 = vmatpush.msra.mxu0 %v1431
        %1463 = vmatpush.msra.mxu0 %v1430
        %1464 = vmatpush.msra.mxu0 %v1429
        %1465 = vmatmul.f32.gmra.mxu0 %v1428
        %v1466 = vpop.f32.mrf.mxu0
        %v1467 = vadd.f32 %v1447, %v1466
        %1468 = vdwg.mxu0
        %v1469 = vmax.f32 %v1467, 0.0
        %v1470 = vld [vmem:[#allocation22] sm:$0xff]
        %v1471 = vld [vmem:[#allocation22 + $0x8] sm:$0xff]
        %v1472 = vld [vmem:[#allocation22 + $0x10] sm:$0xff]
        %v1473 = vld [vmem:[#allocation22 + $0x18] sm:$0xff]
        %v1474 = vld [vmem:[#allocation22 + $0x20] sm:$0xff]
        %v1475 = vld [vmem:[#allocation22 + $0x28] sm:$0xff]
        %v1476 = vld [vmem:[#allocation22 + $0x30] sm:$0xff]
        %v1477 = vld [vmem:[#allocation22 + $0x38] sm:$0xff]
        %v1478 = vld [vmem:[#allocation22 + $0x40] sm:$0xff]
        %v1479 = vld [vmem:[#allocation22 + $0x48] sm:$0xff]
        %v1480 = vld [vmem:[#allocation22 + $0x50] sm:$0xff]
        %v1481 = vld [vmem:[#allocation22 + $0x58] sm:$0xff]
        %v1482 = vld [vmem:[#allocation22 + $0x60] sm:$0xff]
        %v1483 = vld [vmem:[#allocation22 + $0x68] sm:$0xff]
        %v1484 = vld [vmem:[#allocation22 + $0x70] sm:$0xff]
        %v1485 = vld [vmem:[#allocation22 + $0x78] sm:$0xff]
        %v1486 = vld [vmem:[%s20] sm:$0x1]
        %v1488 = vperm.slane %v1486, 0
        %1490 = vmatpush.msra.mxu0 %v1485
        %1491 = vmatpush.msra.mxu0 %v1484
        %1492 = vmatpush.msra.mxu0 %v1483
        %1493 = vmatpush.msra.mxu0 %v1482
        %1494 = vmatpush.msra.mxu0 %v1481
        %1495 = vmatpush.msra.mxu0 %v1480
        %1496 = vmatpush.msra.mxu0 %v1479
        %1497 = vmatpush.msra.mxu0 %v1478
        %1498 = vmatpush.msra.mxu0 %v1477
        %1499 = vmatpush.msra.mxu0 %v1476
        %1500 = vmatpush.msra.mxu0 %v1475
        %1501 = vmatpush.msra.mxu0 %v1474
        %1502 = vmatpush.msra.mxu0 %v1473
        %1503 = vmatpush.msra.mxu0 %v1472
        %1504 = vmatpush.msra.mxu0 %v1471
        %1505 = vmatpush.msra.mxu0 %v1470
        %1506 = vmatmul.f32.gmra.mxu0 %v1469
        %v1507 = vpop.f32.mrf.mxu0
        %v1508 = vadd.f32 %v1488, %v1507
        %1509 = vdwg.mxu0
        %v1510 = vadd.f32 %v1508, %v1428
        %v1511 = vld [vmem:[%s15] sm:$0x1]
        %v1512 = vld [vmem:[%s16] sm:$0x1]
        %1513 = vadd.xlane.f32.xlu0 %v1510
        %v1514 = vpop.xlane.xlu0 %1513
        %v1515 = vmul.f32 %v1514, %v1160
        %v1516 = vsub.f32 %v1510, %v1515
        %v1517 = vmul.f32 %v1516, %v1516
        %1518 = vadd.xlane.f32.xlu0 %v1517
        %v1519 = vpop.xlane.xlu0 %1518
        %v1520 = vmul.f32 %v1519, %v1160
        %v1521 = vadd.f32 %v1520, 1e-05
        %v1522 = vrsqrt.pop %v1521
        %v1523 = vmul.f32 %v1522, %v1521
        %v1524 = vmul.f32 %v1523, %v1522
        %v1525 = vmul.f32 0.5, %v1524
        %v1526 = vsub.f32 1.5, %v1525
        %v1527 = vmul.f32 %v1522, %v1526
        %vm1528 = vweird.f32 %v1521
        %vm1529 = vweird.f32 %v1522
        %vm1530 = vmor %vm1528, %vm1529
        %v1531 = vsel %vm1530, %v1522, %v1527
        %v1532 = vmul.f32 %v1516, %v1531
        %v1534 = vperm.slane %v1511, 0
        %v1536 = vmul.f32 %v1532, %v1534
        %v1538 = vperm.slane %v1512, 0
        %v1540 = vadd.f32 %v1536, %v1538
        %1541 = vst [vmem:[%s937] sm:$0xff] %v1540
        %s1542 = sand.u32 %s526, 1
        %s1543 = scalar_lea.sflag [#allocation4], %s1542
        %s1544 = sand.u32 %s526, 1
        %s1545 = smul.addr %s1544, 8
        %s1546 = scalar_lea.vmem [#allocation23], %s1545
        // Predicated region
        $region157: #{tpu_custom_call.1} parent=103 // pred_check
          %p1547 = pneg %p536
        $region158: #{tpu_custom_call.1} parent=103 // pred_check_branch
          %1549 = sbr.rel (%p1547) target = $region160
        $region159: #{tpu_custom_call.1} parent=103 // pred_region
          %1551 = vsyncadd %s1543, 0
          %s1552 = smul.addr %s50, 2
          %s1553 = sadd.s32 %s51, %s1552
          %s1554 = smul.addr %s1553, 8
          %s1555 = scalar_lea.hbm %s21, %s1554
          %s1557 = sshll.u32 %s1546, 4
          %s1558 = int_to_ptr.vmem [resolvable:$true] %s1557
          %s1559 = sshll.u32 %s1555, 4
          %s1560 = int_to_ptr.hbm [resolvable:$true] %s1559
          %1562 = dma.vmem_to_hbm [thread:$0]  %s1558, 128, %s1560, %s1543
        $region160: #{tpu_custom_call.1} parent=103 // pred_fallthru
          _
      $region104: #{tpu_custom_call.1} parent=5 // pred_fallthru
        _
      %p1563 = scmp.le.s32.totalorder 2, %s41
      // Predicated region
      $region161: #{tpu_custom_call.1} parent=5 // pred_check
        %p1564 = pneg %p1563
      $region162: #{tpu_custom_call.1} parent=5 // pred_check_branch
        %1566 = sbr.rel (%p1564) target = $region164
      $region163: #{tpu_custom_call.1} parent=5 // pred_region
        %s1567 = ssub.s32 %s41, 2
        // Predicated region
        $region165: #{tpu_custom_call.1} parent=163 // pred_check
          %p1568 = pneg %p542
        $region166: #{tpu_custom_call.1} parent=163 // pred_check_branch
          %1570 = sbr.rel (%p1568) target = $region168
        $region167: #{tpu_custom_call.1} parent=163 // pred_region
          %s1571 = sand.u32 %s527, 1
          %s1572 = scalar_lea.sflag [#allocation4], %s1571
          %s1573 = sand.u32 %s527, 1
          %s1574 = smul.addr %s1573, 8
          %s1575 = scalar_lea.vmem [#allocation23], %s1574
          %1577 = dma.done %s1572, 128
        $region168: #{tpu_custom_call.1} parent=163 // pred_fallthru
          _
      $region164: #{tpu_custom_call.1} parent=5 // pred_fallthru
        _
    $region6: #{tpu_custom_call.1} parent=1 // loop_footer
      %s45 = sadd.s32 1, %s41
    $region7: #{tpu_custom_call.1} parent=1 // loop_footer_branch
      %40 = sbr.rel target = $region3
    $region8: #{tpu_custom_call.1} parent=1 // loop_exit
      _
    %1578 = vsyncpa [#allocation3], 1
    %s1579 = scalar_lea.sflag [#allocation3], 1
    %1580 = vsyncpa %s1579, 1
    %1581 = vsyncpa [#allocation6], 1
    %s1582 = scalar_lea.sflag [#allocation6], 1
    %1583 = vsyncpa %s1582, 1
    %1584 = vsyncpa [#allocation9], 1
    %1585 = vsyncpa [#allocation12], 1
    %1586 = vsyncpa [#allocation15], 1
    %1587 = vsyncpa [#allocation18], 1
    %1588 = vsyncpa [#allocation21], 1
    %1589 = vsyncpa [#allocation4], 1
    %s1590 = scalar_lea.sflag [#allocation4], 1
    %1591 = vsyncpa %s1590, 1

</llo_original>
